<compile_context>
chip_gen: v6e
topology: v6e:2x2x1
jax: 0.10.0
libtpu: 0.0.40
codegen_flags: <defaults>
</compile_context>

<pallas_src>
import jax
import jax.numpy as jnp
from jax.experimental import pallas as pl
from jax.experimental.pallas import tpu as pltpu


# ----------------------------------------------------------------------------
# In-kernel helper: 3x3 conv + bias + ReLU in channels-first (C, H*W) layout.
# ----------------------------------------------------------------------------
def _conv3x3_cf(x_cf, wt_ref, b_ref, tap_masks, W, HW):
    """x_cf: (Cin, HW) value.  wt_ref: (9, Cout, Cin) ref with wt[3*dy+dx] =
    w[dy, dx].T.  b_ref: (Cout, 1).  tap_masks[dy][dx]: (1, HW) f32 mask or
    None.  Returns ReLU(conv + bias) as (Cout, HW) — lane-dense."""
    Cout = wt_ref.shape[1]
    acc = jnp.zeros((Cout, HW), jnp.float32)
    for dy in range(3):
        for dx in range(3):
            s = (dy - 1) * W + (dx - 1)          # flat-index source offset
            # shifted[p] = x[p + s]  (wrap positions are always masked below)
            tap = x_cf if s == 0 else pltpu.roll(x_cf, shift=(-s) % HW, axis=1)
            m = tap_masks[dy][dx]
            if m is not None:
                tap = tap * m                    # zero the halo contributions
            # shallow matmul, accumulated in f32 (no 9-way concat)
            acc = acc + jnp.dot(wt_ref[3 * dy + dx], tap,
                                preferred_element_type=jnp.float32)
    return jnp.maximum(acc + b_ref[...], 0.0)


# ----------------------------------------------------------------------------
# Fused kernel: conv1 -> conv2 -> 1x1 head + sigmoid, all in VMEM/vregs.
# ----------------------------------------------------------------------------
def _make_fused_kernel(B, H, W):
    HW = H * W

    def kernel(x_ref, w1t_ref, b1_ref, w2t_ref, b2_ref, wht_ref, bh_ref, o_ref):
        # x_ref : (B, Cin, HW)   lane-dense input block (no NHWC transpose)
        # w1t   : (9, Cmid, Cin) b1: (Cmid, 1)
        # w2t   : (9, Cmid, Cmid) b2: (Cmid, 1)
        # wht   : (K, Cmid)       bh: (K, 1)
        # o_ref : (B, K, HW)     lane-dense, already NCHW-ordered when reshaped

        # ---- boundary masks (computed once, shared by both convs & images) --
        p_idx = jax.lax.broadcasted_iota(jnp.int32, (1, HW), 1)
        if (W & (W - 1)) == 0:
            w_idx = jnp.bitwise_and(p_idx, W - 1)      # w = p mod W (pow2 path)
        else:
            w_idx = p_idx % W                          # TODO(synk): generic W
        row_m = (jnp.where(p_idx >= W, 1.0, 0.0),              # dy=0  (oy=-1)
                 None,                                          # dy=1
                 jnp.where(p_idx < (H - 1) * W, 1.0, 0.0))      # dy=2  (oy=+1)
        col_m = (jnp.where(w_idx >= 1, 1.0, 0.0),               # dx=0  (ox=-1)
                 None,                                          # dx=1
                 jnp.where(w_idx <= W - 2, 1.0, 0.0))           # dx=2  (ox=+1)
        tap_masks = [[None] * 3 for _ in range(3)]
        for dy in range(3):
            for dx in range(3):
                rm, cm = row_m[dy], col_m[dx]
                if rm is None:
                    tap_masks[dy][dx] = cm
                elif cm is None:
                    tap_masks[dy][dx] = rm
                else:
                    tap_masks[dy][dx] = rm * cm

        # ---- per image in this block (B is tiny / static) -------------------
        for b in range(B):
            x_cf = x_ref[b].astype(jnp.float32)                      # (Cin, HW)
            f1 = _conv3x3_cf(x_cf, w1t_ref, b1_ref, tap_masks, W, HW)
            f2 = _conv3x3_cf(f1, w2t_ref, b2_ref, tap_masks, W, HW)  # (Cmid,HW)
            # 1x1 head + sigmoid on the lane-dense (K, HW) slab
            logits = jnp.dot(wht_ref[...], f2,
                             preferred_element_type=jnp.float32) + bh_ref[...]
            heat = pl.reciprocal(1.0 + jnp.exp(-logits), approx=True)
            o_ref[b] = heat.astype(o_ref.dtype)

    return kernel


# ----------------------------------------------------------------------------
# Full forward pass (inference path of KeypointDetector.forward)
# ----------------------------------------------------------------------------
def keypoint_detector_forward(images_nchw, params, images_per_block=None):
    """images_nchw: (N, Cin, H, W) -> (result, eval_utils, visualize_preds)."""
    N, Cin, H, W = images_nchw.shape
    HW = H * W
    Cmid = params["w1"].shape[-1]
    K = params["wh"].shape[-1]

    # free reshape — no NCHW->NHWC transpose round trip
    x_cf = images_nchw.reshape(N, Cin, HW).astype(jnp.float32)

    # pack weights as (9, Cout, Cin) so each tap is a shallow (Cout,Cin) matmul
    w1t = jnp.transpose(params["w1"].astype(jnp.float32).reshape(9, Cin, Cmid),
                        (0, 2, 1))
    w2t = jnp.transpose(params["w2"].astype(jnp.float32).reshape(9, Cmid, Cmid),
                        (0, 2, 1))
    b1c = params["b1"].reshape(Cmid, 1).astype(jnp.float32)
    b2c = params["b2"].reshape(Cmid, 1).astype(jnp.float32)
    wht = params["wh"].T.astype(jnp.float32)          # (K, Cmid)
    bhc = params["bh"].reshape(K, 1).astype(jnp.float32)

    if images_per_block is None:
        # two balanced blocks -> both v7x TensorCores get work; on single-TC
        # v5e/v6e pass images_per_block=N for one fat step.
        images_per_block = (N // 2) if (N >= 2 and N % 2 == 0) else N
    B = images_per_block
    assert N % B == 0, "images_per_block must divide the batch"
    grid = (N // B,)

    kernel = _make_fused_kernel(B, H, W)

    heat_cf = pl.pallas_call(
        kernel,
        out_shape=jax.ShapeDtypeStruct((N, K, HW), jnp.float32),
        grid_spec=pltpu.PrefetchScalarGridSpec(
            num_scalar_prefetch=0,
            grid=grid,
            in_specs=[
                pl.BlockSpec((B, Cin, HW), lambda n: (n, 0, 0)),
                pl.BlockSpec((9, Cmid, Cin), lambda n: (0, 0, 0)),
                pl.BlockSpec((Cmid, 1), lambda n: (0, 0)),
                pl.BlockSpec((9, Cmid, Cmid), lambda n: (0, 0, 0)),
                pl.BlockSpec((Cmid, 1), lambda n: (0, 0)),
                pl.BlockSpec((K, Cmid), lambda n: (0, 0)),
                pl.BlockSpec((K, 1), lambda n: (0, 0)),
            ],
            out_specs=pl.BlockSpec((B, K, HW), lambda n: (n, 0, 0)),
        ),
        compiler_params=pltpu.CompilerParams(
            dimension_semantics=("parallel",)),
    )(x_cf, w1t, b1c, w2t, b2c, wht, bhc)

    # free reshape — output is already in NCHW order, no transpose needed
    heat = heat_cf.reshape(N, K, H, W)

    result = heat
    eval_utils = {"heatmap": heat, "heatmap_flat": heat_cf}   # lane-dense copy
    visualize_preds = {"heatmap": heat}
    return result, eval_utils, visualize_preds


def init_params(key, cin=4, cmid=32, n_kpts=8):
    k1, k2, k3 = jax.random.split(key, 3)
    scale = 0.1
    return {
        "w1": scale * jax.random.normal(k1, (3, 3, cin, cmid), jnp.float32),
        "b1": jnp.zeros((cmid,), jnp.float32),
        "w2": scale * jax.random.normal(k2, (3, 3, cmid, cmid), jnp.float32),
        "b2": jnp.zeros((cmid,), jnp.float32),
        "wh": scale * jax.random.normal(k3, (cmid, n_kpts), jnp.float32),
        "bh": jnp.zeros((n_kpts,), jnp.float32),
    }


# ----------------------------------------------------------------------------
# Pure-JAX reference (correctness check only)
# ----------------------------------------------------------------------------
def _reference_forward(images_nchw, params):
    x = jnp.transpose(images_nchw, (0, 2, 3, 1)).astype(jnp.float32)

    def conv3x3_relu(x, w, b):
        N, H, W, _ = x.shape
        xp = jnp.pad(x, ((0, 0), (1, 1), (1, 1), (0, 0)))
        out = jnp.zeros((N, H, W, w.shape[-1]), jnp.float32) + b
        for dy in range(3):
            for dx in range(3):
                out = out + jnp.einsum(
                    "nhwc,ck->nhwk", xp[:, dy:dy + H, dx:dx + W, :], w[dy, dx])
        return jnp.maximum(out, 0.0)

    f = conv3x3_relu(x, params["w1"], params["b1"])
    f = conv3x3_relu(f, params["w2"], params["b2"])
    logits = jnp.einsum("nhwc,ck->nhwk", f, params["wh"]) + params["bh"]
    return jnp.transpose(jax.nn.sigmoid(logits), (0, 3, 1, 2))


if __name__ == "__main__":
    key = jax.random.PRNGKey(0)
    k_img, k_par = jax.random.split(key)

    N, Cin, H, W = 2, 4, 16, 16
    Cmid, K = 32, 8
    images = jax.random.normal(k_img, (N, Cin, H, W), jnp.float32)   # NCHW
    params = init_params(k_par, cin=Cin, cmid=Cmid, n_kpts=K)

    result, eval_utils, visualize_preds = keypoint_detector_forward(images, params)
    jax.block_until_ready(result)

    ref = _reference_forward(images, params)

    assert result.shape == (N, K, H, W)
    assert bool(jnp.all(jnp.isfinite(result)))
    # approx reciprocal may deviate by O(1e-4); allow a small tolerance
    assert bool(jnp.all((result >= -1e-3) & (result <= 1.0 + 1e-3)))
    assert bool(jnp.allclose(result, ref, atol=5e-3, rtol=5e-3))
    print("KERNEL_OK")
</pallas_src>

<mosaic_0001>
module attributes {stable_mosaic.version = 11 : i64} {
  func.func @kernel(%arg0: i32, %arg1: memref<1x4x256xf32, #tpu.memory_space<vmem>>, %arg2: memref<9x32x4xf32, #tpu.memory_space<vmem>>, %arg3: memref<32x1xf32, #tpu.memory_space<vmem>>, %arg4: memref<9x32x32xf32, #tpu.memory_space<vmem>>, %arg5: memref<32x1xf32, #tpu.memory_space<vmem>>, %arg6: memref<8x32xf32, #tpu.memory_space<vmem>>, %arg7: memref<8x1xf32, #tpu.memory_space<vmem>>, %arg8: memref<1x8x256xf32, #tpu.memory_space<vmem>>) attributes {dimension_semantics = [#tpu.dimension_semantics<parallel>], iteration_bounds = array<i64: 2>, scalar_prefetch = 0 : i64, scratch_operands = 0 : i64, tpu.core_type = #tpu.core_type<tc>, window_params = [{transform_indices = @transform_0, window_bounds = array<i64: 1, 4, 256>}, {pipeline_mode = #tpu.pipeline_mode<synchronous>, transform_indices = @transform_1, window_bounds = array<i64: 9, 32, 4>}, {pipeline_mode = #tpu.pipeline_mode<synchronous>, transform_indices = @transform_2, window_bounds = array<i64: 32, 1>}, {pipeline_mode = #tpu.pipeline_mode<synchronous>, transform_indices = @transform_3, window_bounds = array<i64: 9, 32, 32>}, {pipeline_mode = #tpu.pipeline_mode<synchronous>, transform_indices = @transform_4, window_bounds = array<i64: 32, 1>}, {pipeline_mode = #tpu.pipeline_mode<synchronous>, transform_indices = @transform_5, window_bounds = array<i64: 8, 32>}, {pipeline_mode = #tpu.pipeline_mode<synchronous>, transform_indices = @transform_6, window_bounds = array<i64: 8, 1>}, {transform_indices = @transform_7, window_bounds = array<i64: 1, 8, 256>}]} {
    %0 = tpu.iota {dimensions = array<i32: 1>} : vector<1x256xi32>
    %c15_i32 = arith.constant 15 : i32
    %1 = vector.broadcast %c15_i32 : i32 to vector<1x256xi32>
    %2 = arith.andi %0, %1 : vector<1x256xi32>
    %c16_i32 = arith.constant 16 : i32
    %3 = vector.broadcast %c16_i32 : i32 to vector<1x256xi32>
    %4 = arith.cmpi sge, %0, %3 : vector<1x256xi32>
    %cst = arith.constant 1.000000e+00 : f32
    %cst_0 = arith.constant 0.000000e+00 : f32
    %5 = vector.broadcast %cst : f32 to vector<1x256xf32>
    %6 = vector.broadcast %cst_0 : f32 to vector<1x256xf32>
    %7 = arith.select %4, %5, %6 : vector<1x256xi1>, vector<1x256xf32>
    %c240_i32 = arith.constant 240 : i32
    %8 = vector.broadcast %c240_i32 : i32 to vector<1x256xi32>
    %9 = arith.cmpi slt, %0, %8 : vector<1x256xi32>
    %cst_1 = arith.constant 1.000000e+00 : f32
    %cst_2 = arith.constant 0.000000e+00 : f32
    %10 = vector.broadcast %cst_1 : f32 to vector<1x256xf32>
    %11 = vector.broadcast %cst_2 : f32 to vector<1x256xf32>
    %12 = arith.select %9, %10, %11 : vector<1x256xi1>, vector<1x256xf32>
    %c1_i32 = arith.constant 1 : i32
    %13 = vector.broadcast %c1_i32 : i32 to vector<1x256xi32>
    %14 = arith.cmpi sge, %2, %13 : vector<1x256xi32>
    %cst_3 = arith.constant 1.000000e+00 : f32
    %cst_4 = arith.constant 0.000000e+00 : f32
    %15 = vector.broadcast %cst_3 : f32 to vector<1x256xf32>
    %16 = vector.broadcast %cst_4 : f32 to vector<1x256xf32>
    %17 = arith.select %14, %15, %16 : vector<1x256xi1>, vector<1x256xf32>
    %c14_i32 = arith.constant 14 : i32
    %18 = vector.broadcast %c14_i32 : i32 to vector<1x256xi32>
    %19 = arith.cmpi sle, %2, %18 : vector<1x256xi32>
    %cst_5 = arith.constant 1.000000e+00 : f32
    %cst_6 = arith.constant 0.000000e+00 : f32
    %20 = vector.broadcast %cst_5 : f32 to vector<1x256xf32>
    %21 = vector.broadcast %cst_6 : f32 to vector<1x256xf32>
    %22 = arith.select %19, %20, %21 : vector<1x256xi1>, vector<1x256xf32>
    %23 = arith.mulf %7, %17 : vector<1x256xf32>
    %24 = arith.mulf %7, %22 : vector<1x256xf32>
    %25 = arith.mulf %12, %17 : vector<1x256xf32>
    %26 = arith.mulf %12, %22 : vector<1x256xf32>
    %c0 = arith.constant 0 : index
    %c0_7 = arith.constant 0 : index
    %c0_8 = arith.constant 0 : index
    %27 = vector.load %arg1[%c0, %c0_7, %c0_8] : memref<1x4x256xf32, #tpu.memory_space<vmem>>, vector<1x4x256xf32>
    %28 = vector.shape_cast %27 : vector<1x4x256xf32> to vector<4x256xf32>
    %cst_9 = arith.constant 0.000000e+00 : f32
    %29 = vector.broadcast %cst_9 : f32 to vector<32x256xf32>
    %c17_i32 = arith.constant 17 : i32
    %30 = tpu.dynamic_rotate %28 by %c17_i32 dim 1 : vector<4x256xf32>, i32 -> vector<4x256xf32>
    %31 = vector.broadcast %23 : vector<1x256xf32> to vector<4x256xf32>
    %32 = arith.mulf %30, %31 : vector<4x256xf32>
    %c0_10 = arith.constant 0 : index
    %c0_11 = arith.constant 0 : index
    %c0_12 = arith.constant 0 : index
    %33 = vector.load %arg2[%c0_10, %c0_11, %c0_12] : memref<9x32x4xf32, #tpu.memory_space<vmem>>, vector<1x32x4xf32>
    %34 = vector.shape_cast %33 : vector<1x32x4xf32> to vector<32x4xf32>
    %cst_13 = arith.constant dense<0.000000e+00> : vector<32x256xf32>
    %35 = tpu.matmul %34, %32, %cst_13 {dimension_numbers = #tpu.dot_dimension_numbers<[1], [0], [0], [1], [0, 0, 1, 1], [], []>} : vector<32x4xf32>, vector<4x256xf32>, vector<32x256xf32> -> vector<32x256xf32>
    %36 = arith.addf %29, %35 : vector<32x256xf32>
    %c16_i32_14 = arith.constant 16 : i32
    %37 = tpu.dynamic_rotate %28 by %c16_i32_14 dim 1 : vector<4x256xf32>, i32 -> vector<4x256xf32>
    %38 = vector.broadcast %7 : vector<1x256xf32> to vector<4x256xf32>
    %39 = arith.mulf %37, %38 : vector<4x256xf32>
    %c1 = arith.constant 1 : index
    %c0_15 = arith.constant 0 : index
    %c0_16 = arith.constant 0 : index
    %40 = vector.load %arg2[%c1, %c0_15, %c0_16] : memref<9x32x4xf32, #tpu.memory_space<vmem>>, vector<1x32x4xf32>
    %41 = vector.shape_cast %40 : vector<1x32x4xf32> to vector<32x4xf32>
    %cst_17 = arith.constant dense<0.000000e+00> : vector<32x256xf32>
    %42 = tpu.matmul %41, %39, %cst_17 {dimension_numbers = #tpu.dot_dimension_numbers<[1], [0], [0], [1], [0, 0, 1, 1], [], []>} : vector<32x4xf32>, vector<4x256xf32>, vector<32x256xf32> -> vector<32x256xf32>
    %43 = arith.addf %36, %42 : vector<32x256xf32>
    %c15_i32_18 = arith.constant 15 : i32
    %44 = tpu.dynamic_rotate %28 by %c15_i32_18 dim 1 : vector<4x256xf32>, i32 -> vector<4x256xf32>
    %45 = vector.broadcast %24 : vector<1x256xf32> to vector<4x256xf32>
    %46 = arith.mulf %44, %45 : vector<4x256xf32>
    %c2 = arith.constant 2 : index
    %c0_19 = arith.constant 0 : index
    %c0_20 = arith.constant 0 : index
    %47 = vector.load %arg2[%c2, %c0_19, %c0_20] : memref<9x32x4xf32, #tpu.memory_space<vmem>>, vector<1x32x4xf32>
    %48 = vector.shape_cast %47 : vector<1x32x4xf32> to vector<32x4xf32>
    %cst_21 = arith.constant dense<0.000000e+00> : vector<32x256xf32>
    %49 = tpu.matmul %48, %46, %cst_21 {dimension_numbers = #tpu.dot_dimension_numbers<[1], [0], [0], [1], [0, 0, 1, 1], [], []>} : vector<32x4xf32>, vector<4x256xf32>, vector<32x256xf32> -> vector<32x256xf32>
    %50 = arith.addf %43, %49 : vector<32x256xf32>
    %c1_i32_22 = arith.constant 1 : i32
    %51 = tpu.dynamic_rotate %28 by %c1_i32_22 dim 1 : vector<4x256xf32>, i32 -> vector<4x256xf32>
    %52 = vector.broadcast %17 : vector<1x256xf32> to vector<4x256xf32>
    %53 = arith.mulf %51, %52 : vector<4x256xf32>
    %c3 = arith.constant 3 : index
    %c0_23 = arith.constant 0 : index
    %c0_24 = arith.constant 0 : index
    %54 = vector.load %arg2[%c3, %c0_23, %c0_24] : memref<9x32x4xf32, #tpu.memory_space<vmem>>, vector<1x32x4xf32>
    %55 = vector.shape_cast %54 : vector<1x32x4xf32> to vector<32x4xf32>
    %cst_25 = arith.constant dense<0.000000e+00> : vector<32x256xf32>
    %56 = tpu.matmul %55, %53, %cst_25 {dimension_numbers = #tpu.dot_dimension_numbers<[1], [0], [0], [1], [0, 0, 1, 1], [], []>} : vector<32x4xf32>, vector<4x256xf32>, vector<32x256xf32> -> vector<32x256xf32>
    %57 = arith.addf %50, %56 : vector<32x256xf32>
    %c4 = arith.constant 4 : index
    %c0_26 = arith.constant 0 : index
    %c0_27 = arith.constant 0 : index
    %58 = vector.load %arg2[%c4, %c0_26, %c0_27] : memref<9x32x4xf32, #tpu.memory_space<vmem>>, vector<1x32x4xf32>
    %59 = vector.shape_cast %58 : vector<1x32x4xf32> to vector<32x4xf32>
    %cst_28 = arith.constant dense<0.000000e+00> : vector<32x256xf32>
    %60 = tpu.matmul %59, %28, %cst_28 {dimension_numbers = #tpu.dot_dimension_numbers<[1], [0], [0], [1], [0, 0, 1, 1], [], []>} : vector<32x4xf32>, vector<4x256xf32>, vector<32x256xf32> -> vector<32x256xf32>
    %61 = arith.addf %57, %60 : vector<32x256xf32>
    %c255_i32 = arith.constant 255 : i32
    %62 = tpu.dynamic_rotate %28 by %c255_i32 dim 1 : vector<4x256xf32>, i32 -> vector<4x256xf32>
    %63 = vector.broadcast %22 : vector<1x256xf32> to vector<4x256xf32>
    %64 = arith.mulf %62, %63 : vector<4x256xf32>
    %c5 = arith.constant 5 : index
    %c0_29 = arith.constant 0 : index
    %c0_30 = arith.constant 0 : index
    %65 = vector.load %arg2[%c5, %c0_29, %c0_30] : memref<9x32x4xf32, #tpu.memory_space<vmem>>, vector<1x32x4xf32>
    %66 = vector.shape_cast %65 : vector<1x32x4xf32> to vector<32x4xf32>
    %cst_31 = arith.constant dense<0.000000e+00> : vector<32x256xf32>
    %67 = tpu.matmul %66, %64, %cst_31 {dimension_numbers = #tpu.dot_dimension_numbers<[1], [0], [0], [1], [0, 0, 1, 1], [], []>} : vector<32x4xf32>, vector<4x256xf32>, vector<32x256xf32> -> vector<32x256xf32>
    %68 = arith.addf %61, %67 : vector<32x256xf32>
    %c241_i32 = arith.constant 241 : i32
    %69 = tpu.dynamic_rotate %28 by %c241_i32 dim 1 : vector<4x256xf32>, i32 -> vector<4x256xf32>
    %70 = vector.broadcast %25 : vector<1x256xf32> to vector<4x256xf32>
    %71 = arith.mulf %69, %70 : vector<4x256xf32>
    %c6 = arith.constant 6 : index
    %c0_32 = arith.constant 0 : index
    %c0_33 = arith.constant 0 : index
    %72 = vector.load %arg2[%c6, %c0_32, %c0_33] : memref<9x32x4xf32, #tpu.memory_space<vmem>>, vector<1x32x4xf32>
    %73 = vector.shape_cast %72 : vector<1x32x4xf32> to vector<32x4xf32>
    %cst_34 = arith.constant dense<0.000000e+00> : vector<32x256xf32>
    %74 = tpu.matmul %73, %71, %cst_34 {dimension_numbers = #tpu.dot_dimension_numbers<[1], [0], [0], [1], [0, 0, 1, 1], [], []>} : vector<32x4xf32>, vector<4x256xf32>, vector<32x256xf32> -> vector<32x256xf32>
    %75 = arith.addf %68, %74 : vector<32x256xf32>
    %c240_i32_35 = arith.constant 240 : i32
    %76 = tpu.dynamic_rotate %28 by %c240_i32_35 dim 1 : vector<4x256xf32>, i32 -> vector<4x256xf32>
    %77 = vector.broadcast %12 : vector<1x256xf32> to vector<4x256xf32>
    %78 = arith.mulf %76, %77 : vector<4x256xf32>
    %c7 = arith.constant 7 : index
    %c0_36 = arith.constant 0 : index
    %c0_37 = arith.constant 0 : index
    %79 = vector.load %arg2[%c7, %c0_36, %c0_37] : memref<9x32x4xf32, #tpu.memory_space<vmem>>, vector<1x32x4xf32>
    %80 = vector.shape_cast %79 : vector<1x32x4xf32> to vector<32x4xf32>
    %cst_38 = arith.constant dense<0.000000e+00> : vector<32x256xf32>
    %81 = tpu.matmul %80, %78, %cst_38 {dimension_numbers = #tpu.dot_dimension_numbers<[1], [0], [0], [1], [0, 0, 1, 1], [], []>} : vector<32x4xf32>, vector<4x256xf32>, vector<32x256xf32> -> vector<32x256xf32>
    %82 = arith.addf %75, %81 : vector<32x256xf32>
    %c239_i32 = arith.constant 239 : i32
    %83 = tpu.dynamic_rotate %28 by %c239_i32 dim 1 : vector<4x256xf32>, i32 -> vector<4x256xf32>
    %84 = vector.broadcast %26 : vector<1x256xf32> to vector<4x256xf32>
    %85 = arith.mulf %83, %84 : vector<4x256xf32>
    %c8 = arith.constant 8 : index
    %c0_39 = arith.constant 0 : index
    %c0_40 = arith.constant 0 : index
    %86 = vector.load %arg2[%c8, %c0_39, %c0_40] : memref<9x32x4xf32, #tpu.memory_space<vmem>>, vector<1x32x4xf32>
    %87 = vector.shape_cast %86 : vector<1x32x4xf32> to vector<32x4xf32>
    %cst_41 = arith.constant dense<0.000000e+00> : vector<32x256xf32>
    %88 = tpu.matmul %87, %85, %cst_41 {dimension_numbers = #tpu.dot_dimension_numbers<[1], [0], [0], [1], [0, 0, 1, 1], [], []>} : vector<32x4xf32>, vector<4x256xf32>, vector<32x256xf32> -> vector<32x256xf32>
    %89 = arith.addf %82, %88 : vector<32x256xf32>
    %c0_42 = arith.constant 0 : index
    %c0_43 = arith.constant 0 : index
    %90 = vector.load %arg3[%c0_42, %c0_43] : memref<32x1xf32, #tpu.memory_space<vmem>>, vector<32x1xf32>
    %91 = vector.broadcast %90 : vector<32x1xf32> to vector<32x256xf32>
    %92 = arith.addf %89, %91 : vector<32x256xf32>
    %cst_44 = arith.constant 0.000000e+00 : f32
    %93 = vector.broadcast %cst_44 : f32 to vector<32x256xf32>
    %94 = arith.maximumf %92, %93 : vector<32x256xf32>
    %cst_45 = arith.constant 0.000000e+00 : f32
    %95 = vector.broadcast %cst_45 : f32 to vector<32x256xf32>
    %c17_i32_46 = arith.constant 17 : i32
    %96 = tpu.dynamic_rotate %94 by %c17_i32_46 dim 1 : vector<32x256xf32>, i32 -> vector<32x256xf32>
    %97 = vector.broadcast %23 : vector<1x256xf32> to vector<32x256xf32>
    %98 = arith.mulf %96, %97 : vector<32x256xf32>
    %c0_47 = arith.constant 0 : index
    %c0_48 = arith.constant 0 : index
    %c0_49 = arith.constant 0 : index
    %99 = vector.load %arg4[%c0_47, %c0_48, %c0_49] : memref<9x32x32xf32, #tpu.memory_space<vmem>>, vector<1x32x32xf32>
    %100 = vector.shape_cast %99 : vector<1x32x32xf32> to vector<32x32xf32>
    %cst_50 = arith.constant dense<0.000000e+00> : vector<32x256xf32>
    %101 = tpu.matmul %100, %98, %cst_50 {dimension_numbers = #tpu.dot_dimension_numbers<[1], [0], [0], [1], [0, 0, 1, 1], [], []>} : vector<32x32xf32>, vector<32x256xf32>, vector<32x256xf32> -> vector<32x256xf32>
    %102 = arith.addf %95, %101 : vector<32x256xf32>
    %c16_i32_51 = arith.constant 16 : i32
    %103 = tpu.dynamic_rotate %94 by %c16_i32_51 dim 1 : vector<32x256xf32>, i32 -> vector<32x256xf32>
    %104 = vector.broadcast %7 : vector<1x256xf32> to vector<32x256xf32>
    %105 = arith.mulf %103, %104 : vector<32x256xf32>
    %c1_52 = arith.constant 1 : index
    %c0_53 = arith.constant 0 : index
    %c0_54 = arith.constant 0 : index
    %106 = vector.load %arg4[%c1_52, %c0_53, %c0_54] : memref<9x32x32xf32, #tpu.memory_space<vmem>>, vector<1x32x32xf32>
    %107 = vector.shape_cast %106 : vector<1x32x32xf32> to vector<32x32xf32>
    %cst_55 = arith.constant dense<0.000000e+00> : vector<32x256xf32>
    %108 = tpu.matmul %107, %105, %cst_55 {dimension_numbers = #tpu.dot_dimension_numbers<[1], [0], [0], [1], [0, 0, 1, 1], [], []>} : vector<32x32xf32>, vector<32x256xf32>, vector<32x256xf32> -> vector<32x256xf32>
    %109 = arith.addf %102, %108 : vector<32x256xf32>
    %c15_i32_56 = arith.constant 15 : i32
    %110 = tpu.dynamic_rotate %94 by %c15_i32_56 dim 1 : vector<32x256xf32>, i32 -> vector<32x256xf32>
    %111 = vector.broadcast %24 : vector<1x256xf32> to vector<32x256xf32>
    %112 = arith.mulf %110, %111 : vector<32x256xf32>
    %c2_57 = arith.constant 2 : index
    %c0_58 = arith.constant 0 : index
    %c0_59 = arith.constant 0 : index
    %113 = vector.load %arg4[%c2_57, %c0_58, %c0_59] : memref<9x32x32xf32, #tpu.memory_space<vmem>>, vector<1x32x32xf32>
    %114 = vector.shape_cast %113 : vector<1x32x32xf32> to vector<32x32xf32>
    %cst_60 = arith.constant dense<0.000000e+00> : vector<32x256xf32>
    %115 = tpu.matmul %114, %112, %cst_60 {dimension_numbers = #tpu.dot_dimension_numbers<[1], [0], [0], [1], [0, 0, 1, 1], [], []>} : vector<32x32xf32>, vector<32x256xf32>, vector<32x256xf32> -> vector<32x256xf32>
    %116 = arith.addf %109, %115 : vector<32x256xf32>
    %c1_i32_61 = arith.constant 1 : i32
    %117 = tpu.dynamic_rotate %94 by %c1_i32_61 dim 1 : vector<32x256xf32>, i32 -> vector<32x256xf32>
    %118 = vector.broadcast %17 : vector<1x256xf32> to vector<32x256xf32>
    %119 = arith.mulf %117, %118 : vector<32x256xf32>
    %c3_62 = arith.constant 3 : index
    %c0_63 = arith.constant 0 : index
    %c0_64 = arith.constant 0 : index
    %120 = vector.load %arg4[%c3_62, %c0_63, %c0_64] : memref<9x32x32xf32, #tpu.memory_space<vmem>>, vector<1x32x32xf32>
    %121 = vector.shape_cast %120 : vector<1x32x32xf32> to vector<32x32xf32>
    %cst_65 = arith.constant dense<0.000000e+00> : vector<32x256xf32>
    %122 = tpu.matmul %121, %119, %cst_65 {dimension_numbers = #tpu.dot_dimension_numbers<[1], [0], [0], [1], [0, 0, 1, 1], [], []>} : vector<32x32xf32>, vector<32x256xf32>, vector<32x256xf32> -> vector<32x256xf32>
    %123 = arith.addf %116, %122 : vector<32x256xf32>
    %c4_66 = arith.constant 4 : index
    %c0_67 = arith.constant 0 : index
    %c0_68 = arith.constant 0 : index
    %124 = vector.load %arg4[%c4_66, %c0_67, %c0_68] : memref<9x32x32xf32, #tpu.memory_space<vmem>>, vector<1x32x32xf32>
    %125 = vector.shape_cast %124 : vector<1x32x32xf32> to vector<32x32xf32>
    %cst_69 = arith.constant dense<0.000000e+00> : vector<32x256xf32>
    %126 = tpu.matmul %125, %94, %cst_69 {dimension_numbers = #tpu.dot_dimension_numbers<[1], [0], [0], [1], [0, 0, 1, 1], [], []>} : vector<32x32xf32>, vector<32x256xf32>, vector<32x256xf32> -> vector<32x256xf32>
    %127 = arith.addf %123, %126 : vector<32x256xf32>
    %c255_i32_70 = arith.constant 255 : i32
    %128 = tpu.dynamic_rotate %94 by %c255_i32_70 dim 1 : vector<32x256xf32>, i32 -> vector<32x256xf32>
    %129 = vector.broadcast %22 : vector<1x256xf32> to vector<32x256xf32>
    %130 = arith.mulf %128, %129 : vector<32x256xf32>
    %c5_71 = arith.constant 5 : index
    %c0_72 = arith.constant 0 : index
    %c0_73 = arith.constant 0 : index
    %131 = vector.load %arg4[%c5_71, %c0_72, %c0_73] : memref<9x32x32xf32, #tpu.memory_space<vmem>>, vector<1x32x32xf32>
    %132 = vector.shape_cast %131 : vector<1x32x32xf32> to vector<32x32xf32>
    %cst_74 = arith.constant dense<0.000000e+00> : vector<32x256xf32>
    %133 = tpu.matmul %132, %130, %cst_74 {dimension_numbers = #tpu.dot_dimension_numbers<[1], [0], [0], [1], [0, 0, 1, 1], [], []>} : vector<32x32xf32>, vector<32x256xf32>, vector<32x256xf32> -> vector<32x256xf32>
    %134 = arith.addf %127, %133 : vector<32x256xf32>
    %c241_i32_75 = arith.constant 241 : i32
    %135 = tpu.dynamic_rotate %94 by %c241_i32_75 dim 1 : vector<32x256xf32>, i32 -> vector<32x256xf32>
    %136 = vector.broadcast %25 : vector<1x256xf32> to vector<32x256xf32>
    %137 = arith.mulf %135, %136 : vector<32x256xf32>
    %c6_76 = arith.constant 6 : index
    %c0_77 = arith.constant 0 : index
    %c0_78 = arith.constant 0 : index
    %138 = vector.load %arg4[%c6_76, %c0_77, %c0_78] : memref<9x32x32xf32, #tpu.memory_space<vmem>>, vector<1x32x32xf32>
    %139 = vector.shape_cast %138 : vector<1x32x32xf32> to vector<32x32xf32>
    %cst_79 = arith.constant dense<0.000000e+00> : vector<32x256xf32>
    %140 = tpu.matmul %139, %137, %cst_79 {dimension_numbers = #tpu.dot_dimension_numbers<[1], [0], [0], [1], [0, 0, 1, 1], [], []>} : vector<32x32xf32>, vector<32x256xf32>, vector<32x256xf32> -> vector<32x256xf32>
    %141 = arith.addf %134, %140 : vector<32x256xf32>
    %c240_i32_80 = arith.constant 240 : i32
    %142 = tpu.dynamic_rotate %94 by %c240_i32_80 dim 1 : vector<32x256xf32>, i32 -> vector<32x256xf32>
    %143 = vector.broadcast %12 : vector<1x256xf32> to vector<32x256xf32>
    %144 = arith.mulf %142, %143 : vector<32x256xf32>
    %c7_81 = arith.constant 7 : index
    %c0_82 = arith.constant 0 : index
    %c0_83 = arith.constant 0 : index
    %145 = vector.load %arg4[%c7_81, %c0_82, %c0_83] : memref<9x32x32xf32, #tpu.memory_space<vmem>>, vector<1x32x32xf32>
    %146 = vector.shape_cast %145 : vector<1x32x32xf32> to vector<32x32xf32>
    %cst_84 = arith.constant dense<0.000000e+00> : vector<32x256xf32>
    %147 = tpu.matmul %146, %144, %cst_84 {dimension_numbers = #tpu.dot_dimension_numbers<[1], [0], [0], [1], [0, 0, 1, 1], [], []>} : vector<32x32xf32>, vector<32x256xf32>, vector<32x256xf32> -> vector<32x256xf32>
    %148 = arith.addf %141, %147 : vector<32x256xf32>
    %c239_i32_85 = arith.constant 239 : i32
    %149 = tpu.dynamic_rotate %94 by %c239_i32_85 dim 1 : vector<32x256xf32>, i32 -> vector<32x256xf32>
    %150 = vector.broadcast %26 : vector<1x256xf32> to vector<32x256xf32>
    %151 = arith.mulf %149, %150 : vector<32x256xf32>
    %c8_86 = arith.constant 8 : index
    %c0_87 = arith.constant 0 : index
    %c0_88 = arith.constant 0 : index
    %152 = vector.load %arg4[%c8_86, %c0_87, %c0_88] : memref<9x32x32xf32, #tpu.memory_space<vmem>>, vector<1x32x32xf32>
    %153 = vector.shape_cast %152 : vector<1x32x32xf32> to vector<32x32xf32>
    %cst_89 = arith.constant dense<0.000000e+00> : vector<32x256xf32>
    %154 = tpu.matmul %153, %151, %cst_89 {dimension_numbers = #tpu.dot_dimension_numbers<[1], [0], [0], [1], [0, 0, 1, 1], [], []>} : vector<32x32xf32>, vector<32x256xf32>, vector<32x256xf32> -> vector<32x256xf32>
    %155 = arith.addf %148, %154 : vector<32x256xf32>
    %c0_90 = arith.constant 0 : index
    %c0_91 = arith.constant 0 : index
    %156 = vector.load %arg5[%c0_90, %c0_91] : memref<32x1xf32, #tpu.memory_space<vmem>>, vector<32x1xf32>
    %157 = vector.broadcast %156 : vector<32x1xf32> to vector<32x256xf32>
    %158 = arith.addf %155, %157 : vector<32x256xf32>
    %cst_92 = arith.constant 0.000000e+00 : f32
    %159 = vector.broadcast %cst_92 : f32 to vector<32x256xf32>
    %160 = arith.maximumf %158, %159 : vector<32x256xf32>
    %c0_93 = arith.constant 0 : index
    %c0_94 = arith.constant 0 : index
    %161 = vector.load %arg6[%c0_93, %c0_94] : memref<8x32xf32, #tpu.memory_space<vmem>>, vector<8x32xf32>
    %cst_95 = arith.constant dense<0.000000e+00> : vector<8x256xf32>
    %162 = tpu.matmul %161, %160, %cst_95 {dimension_numbers = #tpu.dot_dimension_numbers<[1], [0], [0], [1], [0, 0, 1, 1], [], []>} : vector<8x32xf32>, vector<32x256xf32>, vector<8x256xf32> -> vector<8x256xf32>
    %c0_96 = arith.constant 0 : index
    %c0_97 = arith.constant 0 : index
    %163 = vector.load %arg7[%c0_96, %c0_97] : memref<8x1xf32, #tpu.memory_space<vmem>>, vector<8x1xf32>
    %164 = vector.broadcast %163 : vector<8x1xf32> to vector<8x256xf32>
    %165 = arith.addf %162, %164 : vector<8x256xf32>
    %cst_98 = arith.constant 0.000000e+00 : f32
    %166 = vector.broadcast %cst_98 : f32 to vector<8x256xf32>
    %167 = arith.subf %166, %165 : vector<8x256xf32>
    %168 = math.exp %167 : vector<8x256xf32>
    %cst_99 = arith.constant 1.000000e+00 : f32
    %169 = vector.broadcast %cst_99 : f32 to vector<8x256xf32>
    %170 = arith.addf %169, %168 : vector<8x256xf32>
    %171 = tpu.reciprocal %170 {approx = true} : vector<8x256xf32> -> vector<8x256xf32>
    %c0_100 = arith.constant 0 : index
    %c0_101 = arith.constant 0 : index
    %c0_102 = arith.constant 0 : index
    %172 = vector.load %arg8[%c0_100, %c0_101, %c0_102] : memref<1x8x256xf32, #tpu.memory_space<vmem>>, vector<1x8x256xf32>
    %173 = vector.shape_cast %172 : vector<1x8x256xf32> to vector<8x256xf32>
    %174 = vector.shape_cast %171 : vector<8x256xf32> to vector<1x8x256xf32>
    tpu.vector_store %arg8[%c0_100, %c0_101, %c0_102], %174 {strides = array<i32>} : memref<1x8x256xf32, #tpu.memory_space<vmem>>, vector<1x8x256xf32>,
    return
  }
  func.func @transform_0(%arg0: i32) -> (i32, i32, i32) {
    %c0_i32 = arith.constant 0 : i32
    %c0_i32_0 = arith.constant 0 : i32
    %c0_i32_1 = arith.constant 0 : i32
    return %arg0, %c0_i32, %c0_i32_0 : i32, i32, i32
  }
  func.func @transform_1(%arg0: i32) -> (i32, i32, i32) {
    %c0_i32 = arith.constant 0 : i32
    %c0_i32_0 = arith.constant 0 : i32
    %c0_i32_1 = arith.constant 0 : i32
    %c0_i32_2 = arith.constant 0 : i32
    return %c0_i32, %c0_i32_0, %c0_i32_1 : i32, i32, i32
  }
  func.func @transform_2(%arg0: i32) -> (i32, i32) {
    %c0_i32 = arith.constant 0 : i32
    %c0_i32_0 = arith.constant 0 : i32
    %c0_i32_1 = arith.constant 0 : i32
    return %c0_i32, %c0_i32_0 : i32, i32
  }
  func.func @transform_3(%arg0: i32) -> (i32, i32, i32) {
    %c0_i32 = arith.constant 0 : i32
    %c0_i32_0 = arith.constant 0 : i32
    %c0_i32_1 = arith.constant 0 : i32
    %c0_i32_2 = arith.constant 0 : i32
    return %c0_i32, %c0_i32_0, %c0_i32_1 : i32, i32, i32
  }
  func.func @transform_4(%arg0: i32) -> (i32, i32) {
    %c0_i32 = arith.constant 0 : i32
    %c0_i32_0 = arith.constant 0 : i32
    %c0_i32_1 = arith.constant 0 : i32
    return %c0_i32, %c0_i32_0 : i32, i32
  }
  func.func @transform_5(%arg0: i32) -> (i32, i32) {
    %c0_i32 = arith.constant 0 : i32
    %c0_i32_0 = arith.constant 0 : i32
    %c0_i32_1 = arith.constant 0 : i32
    return %c0_i32, %c0_i32_0 : i32, i32
  }
  func.func @transform_6(%arg0: i32) -> (i32, i32) {
    %c0_i32 = arith.constant 0 : i32
    %c0_i32_0 = arith.constant 0 : i32
    %c0_i32_1 = arith.constant 0 : i32
    return %c0_i32, %c0_i32_0 : i32, i32
  }
  func.func @transform_7(%arg0: i32) -> (i32, i32, i32) {
    %c0_i32 = arith.constant 0 : i32
    %c0_i32_0 = arith.constant 0 : i32
    %c0_i32_1 = arith.constant 0 : i32
    return %arg0, %c0_i32, %c0_i32_0 : i32, i32, i32
  }
}

</mosaic_0001>

<llo_original>
// kernel: tpu_custom_call.1
$region0: #{tpu_custom_call.1}
  #allocation0 [shape = 'u32[]', space=smem, size = 0x4, offset = 0x4, fixed_abs, tag = 'smem constant byte address 0x4 - core index']
  #allocation1 [shape = 'u32[144,128]{1,0:T(1,128)}', space=vmem, size = 0x12000, scoped, tag = 'internal scratch']
  %s0 = inlined_call_operand.vmem [shape: f32[2,4,256], index: 0, kind: input, shape index: {}]
  %s1 = inlined_call_operand.vmem [shape: f32[9,32,4], index: 1, kind: input, shape index: {}]
  %s2 = inlined_call_operand.vmem [shape: f32[32,1], index: 2, kind: input, shape index: {}]
  %s3 = inlined_call_operand.vmem [shape: f32[9,32,32], index: 3, kind: input, shape index: {}]
  %s4 = inlined_call_operand.vmem [shape: f32[32,1], index: 4, kind: input, shape index: {}]
  %s5 = inlined_call_operand.vmem [shape: f32[8,32], index: 5, kind: input, shape index: {}]
  %s6 = inlined_call_operand.vmem [shape: f32[8,1], index: 6, kind: input, shape index: {}]
  %s7 = inlined_call_operand.hbm [shape: f32[2,8,256], index: 7, kind: output, shape index: {}]
  %s8 = sld [smem:[#allocation0]]
  $region61: #{tpu_custom_call.1} parent=0
    _
  %s10 = ssub.s32 1, %s8
  %s11 = scalar_select 0, %s10, %s8
  $region1: #{tpu_custom_call.1} parent=0
    #allocation2 [shape = 'u8[16384]{0}', space=vmem, size = 0x4000, scoped, tag = 'output window, operand 0']
    #allocation3 [shape = 's32[2]{0}', space=sflag, size = 0x8, scoped, tag = 'scoped memory for tpu_custom_call.1']
    %12 = vsyncpa [#allocation3], 0
    %s13 = scalar_lea.sflag [#allocation3], 1
    %14 = vsyncpa %s13, 0
    loop: start=0, step=1, limit=4
    $region2: #{tpu_custom_call.1} parent=1 // loop_pre_header
      _
    $region3: #{tpu_custom_call.1} parent=1 // loop_header
      %s16 = sphi 0, %s20
      %p17 = scmp.ge.s32.totalorder %s16, 4
      %s26 = sphi 0, %s28
      %s29 = sphi 0, %s26
      %s30 = sphi 0, %s29
      %s46 = sphi 0, %s30
      %s50 = sphi 0, %s50
      %s52 = sphi 0, %s50
      %s53 = sphi 0, %s52
      %s67 = sphi 0, %s53
      %s71 = sphi 0, %s71
      %s73 = sphi 0, %s71
      %s74 = sphi 0, %s73
      %s88 = sphi 0, %s74
      %s92 = sphi 0, %s92
      %s94 = sphi 0, %s92
      %s95 = sphi 0, %s94
      %s109 = sphi 0, %s95
      %s113 = sphi 0, %s113
      %s115 = sphi 0, %s113
      %s116 = sphi 0, %s115
      %s130 = sphi 0, %s116
      %s134 = sphi 0, %s134
      %s136 = sphi 0, %s134
      %s137 = sphi 0, %s136
      %s151 = sphi 0, %s137
      %s155 = sphi 0, %s155
      %s157 = sphi 0, %s155
      %s158 = sphi 0, %s157
      %s172 = sphi 0, %s158
      %s178 = sphi 0, %s180
      %s181 = sphi 0, %s178
      %s182 = sphi 0, %s181
      %s198 = sphi 0, %s182
    $region4: #{tpu_custom_call.1} parent=1 // loop_header_branch
      %19 = sbr.rel (%p17) target = $region8
    $region5: #{tpu_custom_call.1} parent=1 // loop_body
      %s21 = ssub.s32 %s16, 1
      %s22 = ssub.s32 %s16, 2
      %s23 = sadd.s32 %s16, 1
      %s24 = ssub.s32 %s16, %s23
      %p25 = scmp.eq.s32.totalorder %s24, 0
      %s27 = sadd.s32 %s26, 1
      %s28 = scalar_select %p25, %s26, %s27
      %p31 = pneg %p25
      %p32 = scmp.eq.s32.totalorder %s16, 1
      %p33 = por %p31, %p32
      %p34 = scmp.ne.s32.totalorder %s26, %s29
      %p35 = scmp.eq.s32.totalorder %s16, 0
      %p36 = por %p34, %p35
      %p37 = scmp.ne.s32.totalorder %s26, %s29
      %p38 = scmp.eq.s32.totalorder %s21, 1
      %p39 = por %p37, %p38
      %p40 = scmp.ne.s32.totalorder %s29, %s30
      %p41 = scmp.eq.s32.totalorder %s21, 0
      %p42 = por %p40, %p41
      %p43 = scmp.ne.s32.totalorder %s29, %s30
      %p44 = scmp.eq.s32.totalorder %s22, 1
      %p45 = por %p43, %p44
      %p47 = scmp.ne.s32.totalorder %s30, %s46
      %p48 = scmp.eq.s32.totalorder %s22, 0
      %p49 = por %p47, %p48
      %s51 = sadd.s32 %s50, 1
      %p54 = scmp.eq.s32.totalorder %s16, 1
      %p55 = scmp.ne.s32.totalorder %s50, %s52
      %p56 = scmp.eq.s32.totalorder %s16, 0
      %p57 = por %p55, %p56
      %p58 = scmp.ne.s32.totalorder %s50, %s52
      %p59 = scmp.eq.s32.totalorder %s21, 1
      %p60 = por %p58, %p59
      %p61 = scmp.ne.s32.totalorder %s52, %s53
      %p62 = scmp.eq.s32.totalorder %s21, 0
      %p63 = por %p61, %p62
      %p64 = scmp.ne.s32.totalorder %s52, %s53
      %p65 = scmp.eq.s32.totalorder %s22, 1
      %p66 = por %p64, %p65
      %p68 = scmp.ne.s32.totalorder %s53, %s67
      %p69 = scmp.eq.s32.totalorder %s22, 0
      %p70 = por %p68, %p69
      %s72 = sadd.s32 %s71, 1
      %p75 = scmp.eq.s32.totalorder %s16, 1
      %p76 = scmp.ne.s32.totalorder %s71, %s73
      %p77 = scmp.eq.s32.totalorder %s16, 0
      %p78 = por %p76, %p77
      %p79 = scmp.ne.s32.totalorder %s71, %s73
      %p80 = scmp.eq.s32.totalorder %s21, 1
      %p81 = por %p79, %p80
      %p82 = scmp.ne.s32.totalorder %s73, %s74
      %p83 = scmp.eq.s32.totalorder %s21, 0
      %p84 = por %p82, %p83
      %p85 = scmp.ne.s32.totalorder %s73, %s74
      %p86 = scmp.eq.s32.totalorder %s22, 1
      %p87 = por %p85, %p86
      %p89 = scmp.ne.s32.totalorder %s74, %s88
      %p90 = scmp.eq.s32.totalorder %s22, 0
      %p91 = por %p89, %p90
      %s93 = sadd.s32 %s92, 1
      %p96 = scmp.eq.s32.totalorder %s16, 1
      %p97 = scmp.ne.s32.totalorder %s92, %s94
      %p98 = scmp.eq.s32.totalorder %s16, 0
      %p99 = por %p97, %p98
      %p100 = scmp.ne.s32.totalorder %s92, %s94
      %p101 = scmp.eq.s32.totalorder %s21, 1
      %p102 = por %p100, %p101
      %p103 = scmp.ne.s32.totalorder %s94, %s95
      %p104 = scmp.eq.s32.totalorder %s21, 0
      %p105 = por %p103, %p104
      %p106 = scmp.ne.s32.totalorder %s94, %s95
      %p107 = scmp.eq.s32.totalorder %s22, 1
      %p108 = por %p106, %p107
      %p110 = scmp.ne.s32.totalorder %s95, %s109
      %p111 = scmp.eq.s32.totalorder %s22, 0
      %p112 = por %p110, %p111
      %s114 = sadd.s32 %s113, 1
      %p117 = scmp.eq.s32.totalorder %s16, 1
      %p118 = scmp.ne.s32.totalorder %s113, %s115
      %p119 = scmp.eq.s32.totalorder %s16, 0
      %p120 = por %p118, %p119
      %p121 = scmp.ne.s32.totalorder %s113, %s115
      %p122 = scmp.eq.s32.totalorder %s21, 1
      %p123 = por %p121, %p122
      %p124 = scmp.ne.s32.totalorder %s115, %s116
      %p125 = scmp.eq.s32.totalorder %s21, 0
      %p126 = por %p124, %p125
      %p127 = scmp.ne.s32.totalorder %s115, %s116
      %p128 = scmp.eq.s32.totalorder %s22, 1
      %p129 = por %p127, %p128
      %p131 = scmp.ne.s32.totalorder %s116, %s130
      %p132 = scmp.eq.s32.totalorder %s22, 0
      %p133 = por %p131, %p132
      %s135 = sadd.s32 %s134, 1
      %p138 = scmp.eq.s32.totalorder %s16, 1
      %p139 = scmp.ne.s32.totalorder %s134, %s136
      %p140 = scmp.eq.s32.totalorder %s16, 0
      %p141 = por %p139, %p140
      %p142 = scmp.ne.s32.totalorder %s134, %s136
      %p143 = scmp.eq.s32.totalorder %s21, 1
      %p144 = por %p142, %p143
      %p145 = scmp.ne.s32.totalorder %s136, %s137
      %p146 = scmp.eq.s32.totalorder %s21, 0
      %p147 = por %p145, %p146
      %p148 = scmp.ne.s32.totalorder %s136, %s137
      %p149 = scmp.eq.s32.totalorder %s22, 1
      %p150 = por %p148, %p149
      %p152 = scmp.ne.s32.totalorder %s137, %s151
      %p153 = scmp.eq.s32.totalorder %s22, 0
      %p154 = por %p152, %p153
      %s156 = sadd.s32 %s155, 1
      %p159 = scmp.eq.s32.totalorder %s16, 1
      %p160 = scmp.ne.s32.totalorder %s155, %s157
      %p161 = scmp.eq.s32.totalorder %s16, 0
      %p162 = por %p160, %p161
      %p163 = scmp.ne.s32.totalorder %s155, %s157
      %p164 = scmp.eq.s32.totalorder %s21, 1
      %p165 = por %p163, %p164
      %p166 = scmp.ne.s32.totalorder %s157, %s158
      %p167 = scmp.eq.s32.totalorder %s21, 0
      %p168 = por %p166, %p167
      %p169 = scmp.ne.s32.totalorder %s157, %s158
      %p170 = scmp.eq.s32.totalorder %s22, 1
      %p171 = por %p169, %p170
      %p173 = scmp.ne.s32.totalorder %s158, %s172
      %p174 = scmp.eq.s32.totalorder %s22, 0
      %p175 = por %p173, %p174
      %s176 = ssub.s32 %s16, %s23
      %p177 = scmp.eq.s32.totalorder %s176, 0
      %s179 = sadd.s32 %s178, 1
      %s180 = scalar_select %p177, %s178, %s179
      %p183 = pneg %p177
      %p184 = scmp.eq.s32.totalorder %s16, 1
      %p185 = por %p183, %p184
      %p186 = scmp.ne.s32.totalorder %s178, %s181
      %p187 = scmp.eq.s32.totalorder %s16, 0
      %p188 = por %p186, %p187
      %p189 = scmp.ne.s32.totalorder %s178, %s181
      %p190 = scmp.eq.s32.totalorder %s21, 1
      %p191 = por %p189, %p190
      %p192 = scmp.ne.s32.totalorder %s181, %s182
      %p193 = scmp.eq.s32.totalorder %s21, 0
      %p194 = por %p192, %p193
      %p195 = scmp.ne.s32.totalorder %s181, %s182
      %p196 = scmp.eq.s32.totalorder %s22, 1
      %p197 = por %p195, %p196
      %p199 = scmp.ne.s32.totalorder %s182, %s198
      %p200 = scmp.eq.s32.totalorder %s22, 0
      %p201 = por %p199, %p200
      %p202 = scmp.le.s32.totalorder 1, %s16
      %p203 = scmp.lt.s32.totalorder %s16, 3
      %p204 = pnand %p202, %p203
      %p205 = pneg %p204
      // Predicated region
      $region9: #{tpu_custom_call.1} parent=5 // pred_check
        _
      $region10: #{tpu_custom_call.1} parent=5 // pred_check_branch
        %207 = sbr.rel (%p204) target = $region12
      $region11: #{tpu_custom_call.1} parent=5 // pred_region
        %s208 = ssub.s32 %s16, 1
        // Predicated region
        $region13: #{tpu_custom_call.1} parent=11 // pred_check
          %p209 = pneg %p63
        $region14: #{tpu_custom_call.1} parent=11 // pred_check_branch
          %211 = sbr.rel (%p209) target = $region16
        $region15: #{tpu_custom_call.1} parent=11 // pred_region
          _
        $region16: #{tpu_custom_call.1} parent=11 // pred_fallthru
          _
        // Predicated region
        $region17: #{tpu_custom_call.1} parent=11 // pred_check
          %p212 = pneg %p84
        $region18: #{tpu_custom_call.1} parent=11 // pred_check_branch
          %214 = sbr.rel (%p212) target = $region20
        $region19: #{tpu_custom_call.1} parent=11 // pred_region
          _
        $region20: #{tpu_custom_call.1} parent=11 // pred_fallthru
          _
        // Predicated region
        $region21: #{tpu_custom_call.1} parent=11 // pred_check
          %p215 = pneg %p105
        $region22: #{tpu_custom_call.1} parent=11 // pred_check_branch
          %217 = sbr.rel (%p215) target = $region24
        $region23: #{tpu_custom_call.1} parent=11 // pred_region
          _
        $region24: #{tpu_custom_call.1} parent=11 // pred_fallthru
          _
        // Predicated region
        $region25: #{tpu_custom_call.1} parent=11 // pred_check
          %p218 = pneg %p126
        $region26: #{tpu_custom_call.1} parent=11 // pred_check_branch
          %220 = sbr.rel (%p218) target = $region28
        $region27: #{tpu_custom_call.1} parent=11 // pred_region
          _
        $region28: #{tpu_custom_call.1} parent=11 // pred_fallthru
          _
        // Predicated region
        $region29: #{tpu_custom_call.1} parent=11 // pred_check
          %p221 = pneg %p147
        $region30: #{tpu_custom_call.1} parent=11 // pred_check_branch
          %223 = sbr.rel (%p221) target = $region32
        $region31: #{tpu_custom_call.1} parent=11 // pred_region
          _
        $region32: #{tpu_custom_call.1} parent=11 // pred_fallthru
          _
        // Predicated region
        $region33: #{tpu_custom_call.1} parent=11 // pred_check
          %p224 = pneg %p168
        $region34: #{tpu_custom_call.1} parent=11 // pred_check_branch
          %226 = sbr.rel (%p224) target = $region36
        $region35: #{tpu_custom_call.1} parent=11 // pred_region
          _
        $region36: #{tpu_custom_call.1} parent=11 // pred_fallthru
          _
      $region12: #{tpu_custom_call.1} parent=5 // pred_fallthru
        _
      %p227 = scmp.lt.s32.totalorder %s16, 2
      // Predicated region
      $region37: #{tpu_custom_call.1} parent=5 // pred_check
        %p228 = pneg %p227
      $region38: #{tpu_custom_call.1} parent=5 // pred_check_branch
        %230 = sbr.rel (%p228) target = $region40
      $region39: #{tpu_custom_call.1} parent=5 // pred_region
        // Predicated region
        $region41: #{tpu_custom_call.1} parent=39 // pred_check
          %p231 = pneg %p36
        $region42: #{tpu_custom_call.1} parent=39 // pred_check_branch
          %233 = sbr.rel (%p231) target = $region44
        $region43: #{tpu_custom_call.1} parent=39 // pred_region
          %p234 = scmp.lt.s32.totalorder %s16, 1
          %s235 = scalar_select %p234, %s16, 1
          %s236 = smul.addr %s235, 2
          %s237 = smul.addr %s236, 4
          %s238 = scalar_lea.vmem %s0, %s237
        $region44: #{tpu_custom_call.1} parent=39 // pred_fallthru
          _
      $region40: #{tpu_custom_call.1} parent=5 // pred_fallthru
        _
      %p239 = scmp.le.s32.totalorder 1, %s16
      %p240 = scmp.lt.s32.totalorder %s16, 3
      %p241 = pnand %p239, %p240
      %p242 = pneg %p241
      // Predicated region
      $region45: #{tpu_custom_call.1} parent=5 // pred_check
        _
      $region46: #{tpu_custom_call.1} parent=5 // pred_check_branch
        %244 = sbr.rel (%p241) target = $region48
      $region47: #{tpu_custom_call.1} parent=5 // pred_region
        %s245 = ssub.s32 %s16, 1
        %p246 = scmp.lt.s32.totalorder %s21, 1
        %s247 = scalar_select %p246, %s21, 1
        %s248 = smul.addr %s247, 2
        %s249 = smul.addr %s248, 4
        %s250 = scalar_lea.vmem %s0, %s249
        %p251 = pneg %p42
        %p252 = pneg %p39
        %p253 = pneg %p63
        %p254 = pneg %p60
        %p255 = pneg %p84
        %p256 = pneg %p81
        %p257 = pneg %p105
        %p258 = pneg %p102
        %p259 = pneg %p126
        %p260 = pneg %p123
        %p261 = pneg %p147
        %p262 = pneg %p144
        %p263 = pneg %p168
        %p264 = pneg %p165
        %p265 = pneg %p194
        %p266 = pneg %p191
        %s267 = sand.u32 %s181, 1
        %s268 = scalar_lea.sflag [#allocation3], %s267
        %s269 = sand.u32 %s181, 1
        %s270 = smul.addr %s269, 16
        %s271 = scalar_lea.vmem [#allocation2], %s270
        %p272 = scmp.lt.s32.totalorder %s21, 1
        %s273 = scalar_select %p272, %s21, 1
        %s274 = smul.addr %s273, 2
        %s275 = smul.addr %s274, 4
        %s276 = scalar_lea.vmem %s0, %s275
        %v277 = vlaneseq
        %v278 = vand.u32 %v277, 127
        %v279 = vadd.s32 %v278, 128
        %v280 = vand.u32 %v278, 15
        %v281 = vand.u32 %v279, 15
        %vm282 = vcmp.ge.s32.totalorder %v278, 16
        %vm283 = vcmp.ge.s32.totalorder %v279, 16
        %v284 = vsel %vm282, 1.0, 0.0
        %v285 = vsel %vm283, 1.0, 0.0
        %vm286 = vcmp.lt.s32.totalorder %v278, 240
        %vm287 = vcmp.lt.s32.totalorder %v279, 240
        %v288 = vsel %vm286, 1.0, 0.0
        %v289 = vsel %vm287, 1.0, 0.0
        %vm290 = vcmp.ge.s32.totalorder %v280, 1
        %vm291 = vcmp.ge.s32.totalorder %v281, 1
        %v292 = vsel %vm290, 1.0, 0.0
        %v293 = vsel %vm291, 1.0, 0.0
        %vm294 = vcmp.le.s32.totalorder %v280, 14
        %vm295 = vcmp.le.s32.totalorder %v281, 14
        %v296 = vsel %vm294, 1.0, 0.0
        %v297 = vsel %vm295, 1.0, 0.0
        %v298 = vmul.f32 %v284, %v292
        %v299 = vmul.f32 %v285, %v293
        %v300 = vmul.f32 %v284, %v296
        %v301 = vmul.f32 %v285, %v297
        %v302 = vmul.f32 %v288, %v292
        %v303 = vmul.f32 %v289, %v293
        %v304 = vmul.f32 %v288, %v296
        %v305 = vmul.f32 %v289, %v297
        %v306 = vld [vmem:[%s276] sm:$0xff]
        %v308 = vcombine.high %v306, %v306
        %310 = vrot.lane.b32.xlu0 %v306, 17
        %v311 = vpop.permute.xlu0 %310
        %312 = vrot.lane.b32.xlu0 %v308, 17
        %v313 = vpop.permute.xlu0 %312
        %vm314 = vcmp.lt.s32.totalorder %v278, 17
        %v315 = vsel %vm314, %v311, %v313
        %v316 = vsel %vm314, %v313, %v311
        %v317 = vmul.f32 %v316, %v298
        %v318 = vmul.f32 %v315, %v299
        %v319 = vld [vmem:[%s1] sm:$0xff]
        %v320 = vld [vmem:[%s1 + $0x8] sm:$0xff]
        %v321 = vld [vmem:[%s1 + $0x10] sm:$0xff]
        %v322 = vld [vmem:[%s1 + $0x18] sm:$0xff]
        %323 = vrot.lane.b32.xlu0 %v306, 16
        %v324 = vpop.permute.xlu0 %323
        %325 = vrot.lane.b32.xlu0 %v308, 16
        %v326 = vpop.permute.xlu0 %325
        %vm327 = vcmp.lt.s32.totalorder %v278, 16
        %v328 = vsel %vm327, %v324, %v326
        %v329 = vsel %vm327, %v326, %v324
        %v330 = vmul.f32 %v329, %v284
        %v331 = vmul.f32 %v328, %v285
        %s332 = scalar_lea.vmem %s1, 32
        %v333 = vld [vmem:[%s332] sm:$0xff]
        %v334 = vld [vmem:[%s332 + $0x8] sm:$0xff]
        %v335 = vld [vmem:[%s332 + $0x10] sm:$0xff]
        %v336 = vld [vmem:[%s332 + $0x18] sm:$0xff]
        %vm337 = vcmask 31744
        %v339 = vsel %vm337, %v333, 0
        %v342 = vsel %vm337, %v334, 0
        %v345 = vsel %vm337, %v335, 0
        %v348 = vsel %vm337, %v336, 0
        %vm350 = vcmask 1043456
        %v352 = vsel %vm350, %v330, 0
        %v355 = vsel %vm350, %v331, 0
        %357 = vmatprep.subr.mxu0 0.0
        %358 = vmatpush1.msra.mxu0 0.0
        %359 = vmatprep.subr.mxu0 0.0
        %360 = vmatpush1.msra.mxu0 0.0
        %361 = vmatprep.subr.mxu0 0.0
        %362 = vmatpush1.msra.mxu0 0.0
        %363 = vmatprep.subr.mxu0 0.0
        %364 = vmatpush1.msra.mxu0 0.0
        %365 = vmatprep.subr.mxu0 0.0
        %366 = vmatpush1.msra.mxu0 0.0
        %367 = vmatprep.subr.mxu0 0.0
        %368 = vmatpush1.msra.mxu0 0.0
        %369 = vmatprep.subr.mxu0 0.0
        %370 = vmatpush1.msra.mxu0 0.0
        %371 = vmatprep.subr.mxu0 0.0
        %372 = vmatpush1.msra.mxu0 0.0
        %373 = vmatprep.subr.mxu0 0.0
        %374 = vmatpush1.msra.mxu0 0.0
        %375 = vmatprep.subr.mxu0 0.0
        %376 = vmatpush1.msra.mxu0 0.0
        %377 = vmatprep.subr.mxu0 0.0
        %378 = vmatpush1.msra.mxu0 0.0
        %379 = vmatprep.subr.mxu0 0.0
        %380 = vmatpush1.msra.mxu0 0.0
        %381 = vmatprep.subr.mxu0 0.0
        %382 = vmatpush1.msra.mxu0 0.0
        %383 = vmatprep.subr.mxu0 0.0
        %384 = vmatpush1.msra.mxu0 0.0
        %385 = vmatprep.subr.mxu0 0.0
        %386 = vmatpush1.msra.mxu0 0.0
        %387 = vmatprep.subr.mxu0 %v355
        %388 = vmatpush1.msra.mxu0 %v352
        %389 = vmatprep.subr.mxu0 0.0
        %390 = vmatpush2.msra.mxu0 0.0
        %391 = vmatprep.subr.mxu0 0.0
        %392 = vmatpush2.msra.mxu0 0.0
        %393 = vmatprep.subr.mxu0 0.0
        %394 = vmatpush2.msra.mxu0 0.0
        %395 = vmatprep.subr.mxu0 0.0
        %396 = vmatpush2.msra.mxu0 0.0
        %397 = vmatprep.subr.mxu0 0.0
        %398 = vmatpush2.msra.mxu0 0.0
        %399 = vmatprep.subr.mxu0 0.0
        %400 = vmatpush2.msra.mxu0 0.0
        %401 = vmatprep.subr.mxu0 0.0
        %402 = vmatpush2.msra.mxu0 0.0
        %403 = vmatprep.subr.mxu0 0.0
        %404 = vmatpush2.msra.mxu0 0.0
        %405 = vmatprep.subr.mxu0 0.0
        %406 = vmatpush2.msra.mxu0 0.0
        %407 = vmatprep.subr.mxu0 0.0
        %408 = vmatpush2.msra.mxu0 0.0
        %409 = vmatprep.subr.mxu0 0.0
        %410 = vmatpush2.msra.mxu0 0.0
        %411 = vmatprep.subr.mxu0 0.0
        %412 = vmatpush2.msra.mxu0 0.0
        %413 = vmatprep.subr.mxu0 0.0
        %414 = vmatpush2.msra.mxu0 0.0
        %415 = vmatprep.subr.mxu0 0.0
        %416 = vmatpush2.msra.mxu0 0.0
        %417 = vmatprep.subr.mxu0 0.0
        %418 = vmatpush2.msra.mxu0 0.0
        %419 = vmatprep.subr.mxu0 0.0
        %420 = vmatpush2.msra.mxu0 0.0
        %421 = vmatprep.mubr.f32.mxu0 0.0
        %422 = vmatmul.mubr.f32.gmra.mxu0 %v339
        %v423 = vpop.f32.mrf.mxu0
        %v424 = vadd.f32 0.0, %v423
        %v425 = vpop.f32.mrf.mxu0
        %v426 = vadd.f32 0.0, %v425
        %427 = vmatprep.mubr.f32.mxu0 0.0
        %428 = vmatmul.mubr.f32.gmra.mxu0 %v342
        %v429 = vpop.f32.mrf.mxu0
        %v430 = vadd.f32 0.0, %v429
        %v431 = vpop.f32.mrf.mxu0
        %v432 = vadd.f32 0.0, %v431
        %433 = vmatprep.mubr.f32.mxu0 0.0
        %434 = vmatmul.mubr.f32.gmra.mxu0 %v345
        %v435 = vpop.f32.mrf.mxu0
        %v436 = vadd.f32 0.0, %v435
        %v437 = vpop.f32.mrf.mxu0
        %v438 = vadd.f32 0.0, %v437
        %439 = vmatprep.mubr.f32.mxu0 0.0
        %440 = vmatmul.mubr.f32.gmra.mxu0 %v348
        %v441 = vpop.f32.mrf.mxu0
        %v442 = vadd.f32 0.0, %v441
        %v443 = vpop.f32.mrf.mxu0
        %v444 = vadd.f32 0.0, %v443
        %445 = vdwg.mxu0
        %v447 = vsel %vm337, %v319, 0
        %v450 = vsel %vm337, %v320, 0
        %v453 = vsel %vm337, %v321, 0
        %v456 = vsel %vm337, %v322, 0
        %v459 = vsel %vm350, %v317, 0
        %v462 = vsel %vm350, %v318, 0
        %464 = vmatprep.subr.mxu0 0.0
        %465 = vmatpush1.msra.mxu0 0.0
        %466 = vmatprep.subr.mxu0 0.0
        %467 = vmatpush1.msra.mxu0 0.0
        %468 = vmatprep.subr.mxu0 0.0
        %469 = vmatpush1.msra.mxu0 0.0
        %470 = vmatprep.subr.mxu0 0.0
        %471 = vmatpush1.msra.mxu0 0.0
        %472 = vmatprep.subr.mxu0 0.0
        %473 = vmatpush1.msra.mxu0 0.0
        %474 = vmatprep.subr.mxu0 0.0
        %475 = vmatpush1.msra.mxu0 0.0
        %476 = vmatprep.subr.mxu0 0.0
        %477 = vmatpush1.msra.mxu0 0.0
        %478 = vmatprep.subr.mxu0 0.0
        %479 = vmatpush1.msra.mxu0 0.0
        %480 = vmatprep.subr.mxu0 0.0
        %481 = vmatpush1.msra.mxu0 0.0
        %482 = vmatprep.subr.mxu0 0.0
        %483 = vmatpush1.msra.mxu0 0.0
        %484 = vmatprep.subr.mxu0 0.0
        %485 = vmatpush1.msra.mxu0 0.0
        %486 = vmatprep.subr.mxu0 0.0
        %487 = vmatpush1.msra.mxu0 0.0
        %488 = vmatprep.subr.mxu0 0.0
        %489 = vmatpush1.msra.mxu0 0.0
        %490 = vmatprep.subr.mxu0 0.0
        %491 = vmatpush1.msra.mxu0 0.0
        %492 = vmatprep.subr.mxu0 0.0
        %493 = vmatpush1.msra.mxu0 0.0
        %494 = vmatprep.subr.mxu0 %v462
        %495 = vmatpush1.msra.mxu0 %v459
        %496 = vmatprep.subr.mxu0 0.0
        %497 = vmatpush2.msra.mxu0 0.0
        %498 = vmatprep.subr.mxu0 0.0
        %499 = vmatpush2.msra.mxu0 0.0
        %500 = vmatprep.subr.mxu0 0.0
        %501 = vmatpush2.msra.mxu0 0.0
        %502 = vmatprep.subr.mxu0 0.0
        %503 = vmatpush2.msra.mxu0 0.0
        %504 = vmatprep.subr.mxu0 0.0
        %505 = vmatpush2.msra.mxu0 0.0
        %506 = vmatprep.subr.mxu0 0.0
        %507 = vmatpush2.msra.mxu0 0.0
        %508 = vmatprep.subr.mxu0 0.0
        %509 = vmatpush2.msra.mxu0 0.0
        %510 = vmatprep.subr.mxu0 0.0
        %511 = vmatpush2.msra.mxu0 0.0
        %512 = vmatprep.subr.mxu0 0.0
        %513 = vmatpush2.msra.mxu0 0.0
        %514 = vmatprep.subr.mxu0 0.0
        %515 = vmatpush2.msra.mxu0 0.0
        %516 = vmatprep.subr.mxu0 0.0
        %517 = vmatpush2.msra.mxu0 0.0
        %518 = vmatprep.subr.mxu0 0.0
        %519 = vmatpush2.msra.mxu0 0.0
        %520 = vmatprep.subr.mxu0 0.0
        %521 = vmatpush2.msra.mxu0 0.0
        %522 = vmatprep.subr.mxu0 0.0
        %523 = vmatpush2.msra.mxu0 0.0
        %524 = vmatprep.subr.mxu0 0.0
        %525 = vmatpush2.msra.mxu0 0.0
        %526 = vmatprep.subr.mxu0 0.0
        %527 = vmatpush2.msra.mxu0 0.0
        %528 = vmatprep.mubr.f32.mxu0 0.0
        %529 = vmatmul.mubr.f32.gmra.mxu0 %v447
        %v530 = vpop.f32.mrf.mxu0
        %v531 = vadd.f32 %v424, %v530
        %v532 = vpop.f32.mrf.mxu0
        %v533 = vadd.f32 %v426, %v532
        %534 = vmatprep.mubr.f32.mxu0 0.0
        %535 = vmatmul.mubr.f32.gmra.mxu0 %v450
        %v536 = vpop.f32.mrf.mxu0
        %v537 = vadd.f32 %v430, %v536
        %v538 = vpop.f32.mrf.mxu0
        %v539 = vadd.f32 %v432, %v538
        %540 = vmatprep.mubr.f32.mxu0 0.0
        %541 = vmatmul.mubr.f32.gmra.mxu0 %v453
        %v542 = vpop.f32.mrf.mxu0
        %v543 = vadd.f32 %v436, %v542
        %v544 = vpop.f32.mrf.mxu0
        %v545 = vadd.f32 %v438, %v544
        %546 = vmatprep.mubr.f32.mxu0 0.0
        %547 = vmatmul.mubr.f32.gmra.mxu0 %v456
        %v548 = vpop.f32.mrf.mxu0
        %v549 = vadd.f32 %v442, %v548
        %v550 = vpop.f32.mrf.mxu0
        %v551 = vadd.f32 %v444, %v550
        %552 = vdwg.mxu0
        %553 = vrot.lane.b32.xlu0 %v306, 15
        %v554 = vpop.permute.xlu0 %553
        %555 = vrot.lane.b32.xlu0 %v308, 15
        %v556 = vpop.permute.xlu0 %555
        %vm557 = vcmp.lt.s32.totalorder %v278, 15
        %v558 = vsel %vm557, %v554, %v556
        %v559 = vsel %vm557, %v556, %v554
        %v560 = vmul.f32 %v559, %v300
        %v561 = vmul.f32 %v558, %v301
        %s562 = scalar_lea.vmem %s1, 64
        %v563 = vld [vmem:[%s562] sm:$0xff]
        %v564 = vld [vmem:[%s562 + $0x8] sm:$0xff]
        %v565 = vld [vmem:[%s562 + $0x10] sm:$0xff]
        %v566 = vld [vmem:[%s562 + $0x18] sm:$0xff]
        %v568 = vsel %vm337, %v563, 0
        %v571 = vsel %vm337, %v564, 0
        %v574 = vsel %vm337, %v565, 0
        %v577 = vsel %vm337, %v566, 0
        %v580 = vsel %vm350, %v560, 0
        %v583 = vsel %vm350, %v561, 0
        %585 = vmatprep.subr.mxu0 0.0
        %586 = vmatpush1.msra.mxu0 0.0
        %587 = vmatprep.subr.mxu0 0.0
        %588 = vmatpush1.msra.mxu0 0.0
        %589 = vmatprep.subr.mxu0 0.0
        %590 = vmatpush1.msra.mxu0 0.0
        %591 = vmatprep.subr.mxu0 0.0
        %592 = vmatpush1.msra.mxu0 0.0
        %593 = vmatprep.subr.mxu0 0.0
        %594 = vmatpush1.msra.mxu0 0.0
        %595 = vmatprep.subr.mxu0 0.0
        %596 = vmatpush1.msra.mxu0 0.0
        %597 = vmatprep.subr.mxu0 0.0
        %598 = vmatpush1.msra.mxu0 0.0
        %599 = vmatprep.subr.mxu0 0.0
        %600 = vmatpush1.msra.mxu0 0.0
        %601 = vmatprep.subr.mxu0 0.0
        %602 = vmatpush1.msra.mxu0 0.0
        %603 = vmatprep.subr.mxu0 0.0
        %604 = vmatpush1.msra.mxu0 0.0
        %605 = vmatprep.subr.mxu0 0.0
        %606 = vmatpush1.msra.mxu0 0.0
        %607 = vmatprep.subr.mxu0 0.0
        %608 = vmatpush1.msra.mxu0 0.0
        %609 = vmatprep.subr.mxu0 0.0
        %610 = vmatpush1.msra.mxu0 0.0
        %611 = vmatprep.subr.mxu0 0.0
        %612 = vmatpush1.msra.mxu0 0.0
        %613 = vmatprep.subr.mxu0 0.0
        %614 = vmatpush1.msra.mxu0 0.0
        %615 = vmatprep.subr.mxu0 %v583
        %616 = vmatpush1.msra.mxu0 %v580
        %617 = vmatprep.subr.mxu0 0.0
        %618 = vmatpush2.msra.mxu0 0.0
        %619 = vmatprep.subr.mxu0 0.0
        %620 = vmatpush2.msra.mxu0 0.0
        %621 = vmatprep.subr.mxu0 0.0
        %622 = vmatpush2.msra.mxu0 0.0
        %623 = vmatprep.subr.mxu0 0.0
        %624 = vmatpush2.msra.mxu0 0.0
        %625 = vmatprep.subr.mxu0 0.0
        %626 = vmatpush2.msra.mxu0 0.0
        %627 = vmatprep.subr.mxu0 0.0
        %628 = vmatpush2.msra.mxu0 0.0
        %629 = vmatprep.subr.mxu0 0.0
        %630 = vmatpush2.msra.mxu0 0.0
        %631 = vmatprep.subr.mxu0 0.0
        %632 = vmatpush2.msra.mxu0 0.0
        %633 = vmatprep.subr.mxu0 0.0
        %634 = vmatpush2.msra.mxu0 0.0
        %635 = vmatprep.subr.mxu0 0.0
        %636 = vmatpush2.msra.mxu0 0.0
        %637 = vmatprep.subr.mxu0 0.0
        %638 = vmatpush2.msra.mxu0 0.0
        %639 = vmatprep.subr.mxu0 0.0
        %640 = vmatpush2.msra.mxu0 0.0
        %641 = vmatprep.subr.mxu0 0.0
        %642 = vmatpush2.msra.mxu0 0.0
        %643 = vmatprep.subr.mxu0 0.0
        %644 = vmatpush2.msra.mxu0 0.0
        %645 = vmatprep.subr.mxu0 0.0
        %646 = vmatpush2.msra.mxu0 0.0
        %647 = vmatprep.subr.mxu0 0.0
        %648 = vmatpush2.msra.mxu0 0.0
        %649 = vmatprep.mubr.f32.mxu0 0.0
        %650 = vmatmul.mubr.f32.gmra.mxu0 %v568
        %v651 = vpop.f32.mrf.mxu0
        %v652 = vadd.f32 0.0, %v651
        %v653 = vpop.f32.mrf.mxu0
        %v654 = vadd.f32 0.0, %v653
        %655 = vmatprep.mubr.f32.mxu0 0.0
        %656 = vmatmul.mubr.f32.gmra.mxu0 %v571
        %v657 = vpop.f32.mrf.mxu0
        %v658 = vadd.f32 0.0, %v657
        %v659 = vpop.f32.mrf.mxu0
        %v660 = vadd.f32 0.0, %v659
        %661 = vmatprep.mubr.f32.mxu0 0.0
        %662 = vmatmul.mubr.f32.gmra.mxu0 %v574
        %v663 = vpop.f32.mrf.mxu0
        %v664 = vadd.f32 0.0, %v663
        %v665 = vpop.f32.mrf.mxu0
        %v666 = vadd.f32 0.0, %v665
        %667 = vmatprep.mubr.f32.mxu0 0.0
        %668 = vmatmul.mubr.f32.gmra.mxu0 %v577
        %v669 = vpop.f32.mrf.mxu0
        %v670 = vadd.f32 0.0, %v669
        %v671 = vpop.f32.mrf.mxu0
        %v672 = vadd.f32 0.0, %v671
        %673 = vdwg.mxu0
        %v674 = vadd.f32 %v531, %v652
        %v675 = vadd.f32 %v533, %v654
        %v676 = vadd.f32 %v537, %v658
        %v677 = vadd.f32 %v539, %v660
        %v678 = vadd.f32 %v543, %v664
        %v679 = vadd.f32 %v545, %v666
        %v680 = vadd.f32 %v549, %v670
        %v681 = vadd.f32 %v551, %v672
        %682 = vrot.lane.b32.xlu0 %v306, 1
        %v683 = vpop.permute.xlu0 %682
        %684 = vrot.lane.b32.xlu0 %v308, 1
        %v685 = vpop.permute.xlu0 %684
        %vm686 = vcmp.lt.s32.totalorder %v278, 1
        %v687 = vsel %vm686, %v683, %v685
        %v688 = vsel %vm686, %v685, %v683
        %v689 = vmul.f32 %v688, %v292
        %v690 = vmul.f32 %v687, %v293
        %s691 = scalar_lea.vmem %s1, 96
        %v692 = vld [vmem:[%s691] sm:$0xff]
        %v693 = vld [vmem:[%s691 + $0x8] sm:$0xff]
        %v694 = vld [vmem:[%s691 + $0x10] sm:$0xff]
        %v695 = vld [vmem:[%s691 + $0x18] sm:$0xff]
        %v697 = vsel %vm337, %v692, 0
        %v700 = vsel %vm337, %v693, 0
        %v703 = vsel %vm337, %v694, 0
        %v706 = vsel %vm337, %v695, 0
        %v709 = vsel %vm350, %v689, 0
        %v712 = vsel %vm350, %v690, 0
        %714 = vmatprep.subr.mxu0 0.0
        %715 = vmatpush1.msra.mxu0 0.0
        %716 = vmatprep.subr.mxu0 0.0
        %717 = vmatpush1.msra.mxu0 0.0
        %718 = vmatprep.subr.mxu0 0.0
        %719 = vmatpush1.msra.mxu0 0.0
        %720 = vmatprep.subr.mxu0 0.0
        %721 = vmatpush1.msra.mxu0 0.0
        %722 = vmatprep.subr.mxu0 0.0
        %723 = vmatpush1.msra.mxu0 0.0
        %724 = vmatprep.subr.mxu0 0.0
        %725 = vmatpush1.msra.mxu0 0.0
        %726 = vmatprep.subr.mxu0 0.0
        %727 = vmatpush1.msra.mxu0 0.0
        %728 = vmatprep.subr.mxu0 0.0
        %729 = vmatpush1.msra.mxu0 0.0
        %730 = vmatprep.subr.mxu0 0.0
        %731 = vmatpush1.msra.mxu0 0.0
        %732 = vmatprep.subr.mxu0 0.0
        %733 = vmatpush1.msra.mxu0 0.0
        %734 = vmatprep.subr.mxu0 0.0
        %735 = vmatpush1.msra.mxu0 0.0
        %736 = vmatprep.subr.mxu0 0.0
        %737 = vmatpush1.msra.mxu0 0.0
        %738 = vmatprep.subr.mxu0 0.0
        %739 = vmatpush1.msra.mxu0 0.0
        %740 = vmatprep.subr.mxu0 0.0
        %741 = vmatpush1.msra.mxu0 0.0
        %742 = vmatprep.subr.mxu0 0.0
        %743 = vmatpush1.msra.mxu0 0.0
        %744 = vmatprep.subr.mxu0 %v712
        %745 = vmatpush1.msra.mxu0 %v709
        %746 = vmatprep.subr.mxu0 0.0
        %747 = vmatpush2.msra.mxu0 0.0
        %748 = vmatprep.subr.mxu0 0.0
        %749 = vmatpush2.msra.mxu0 0.0
        %750 = vmatprep.subr.mxu0 0.0
        %751 = vmatpush2.msra.mxu0 0.0
        %752 = vmatprep.subr.mxu0 0.0
        %753 = vmatpush2.msra.mxu0 0.0
        %754 = vmatprep.subr.mxu0 0.0
        %755 = vmatpush2.msra.mxu0 0.0
        %756 = vmatprep.subr.mxu0 0.0
        %757 = vmatpush2.msra.mxu0 0.0
        %758 = vmatprep.subr.mxu0 0.0
        %759 = vmatpush2.msra.mxu0 0.0
        %760 = vmatprep.subr.mxu0 0.0
        %761 = vmatpush2.msra.mxu0 0.0
        %762 = vmatprep.subr.mxu0 0.0
        %763 = vmatpush2.msra.mxu0 0.0
        %764 = vmatprep.subr.mxu0 0.0
        %765 = vmatpush2.msra.mxu0 0.0
        %766 = vmatprep.subr.mxu0 0.0
        %767 = vmatpush2.msra.mxu0 0.0
        %768 = vmatprep.subr.mxu0 0.0
        %769 = vmatpush2.msra.mxu0 0.0
        %770 = vmatprep.subr.mxu0 0.0
        %771 = vmatpush2.msra.mxu0 0.0
        %772 = vmatprep.subr.mxu0 0.0
        %773 = vmatpush2.msra.mxu0 0.0
        %774 = vmatprep.subr.mxu0 0.0
        %775 = vmatpush2.msra.mxu0 0.0
        %776 = vmatprep.subr.mxu0 0.0
        %777 = vmatpush2.msra.mxu0 0.0
        %778 = vmatprep.mubr.f32.mxu0 0.0
        %779 = vmatmul.mubr.f32.gmra.mxu0 %v697
        %v780 = vpop.f32.mrf.mxu0
        %v781 = vadd.f32 0.0, %v780
        %v782 = vpop.f32.mrf.mxu0
        %v783 = vadd.f32 0.0, %v782
        %784 = vmatprep.mubr.f32.mxu0 0.0
        %785 = vmatmul.mubr.f32.gmra.mxu0 %v700
        %v786 = vpop.f32.mrf.mxu0
        %v787 = vadd.f32 0.0, %v786
        %v788 = vpop.f32.mrf.mxu0
        %v789 = vadd.f32 0.0, %v788
        %790 = vmatprep.mubr.f32.mxu0 0.0
        %791 = vmatmul.mubr.f32.gmra.mxu0 %v703
        %v792 = vpop.f32.mrf.mxu0
        %v793 = vadd.f32 0.0, %v792
        %v794 = vpop.f32.mrf.mxu0
        %v795 = vadd.f32 0.0, %v794
        %796 = vmatprep.mubr.f32.mxu0 0.0
        %797 = vmatmul.mubr.f32.gmra.mxu0 %v706
        %v798 = vpop.f32.mrf.mxu0
        %v799 = vadd.f32 0.0, %v798
        %v800 = vpop.f32.mrf.mxu0
        %v801 = vadd.f32 0.0, %v800
        %802 = vdwg.mxu0
        %v803 = vadd.f32 %v674, %v781
        %v804 = vadd.f32 %v675, %v783
        %v805 = vadd.f32 %v676, %v787
        %v806 = vadd.f32 %v677, %v789
        %v807 = vadd.f32 %v678, %v793
        %v808 = vadd.f32 %v679, %v795
        %v809 = vadd.f32 %v680, %v799
        %v810 = vadd.f32 %v681, %v801
        %s811 = scalar_lea.vmem %s1, 128
        %v812 = vld [vmem:[%s811] sm:$0xff]
        %v813 = vld [vmem:[%s811 + $0x8] sm:$0xff]
        %v814 = vld [vmem:[%s811 + $0x10] sm:$0xff]
        %v815 = vld [vmem:[%s811 + $0x18] sm:$0xff]
        %v817 = vsel %vm337, %v812, 0
        %v820 = vsel %vm337, %v813, 0
        %v823 = vsel %vm337, %v814, 0
        %v826 = vsel %vm337, %v815, 0
        %v828 = vsel %vm350, %v306, 0
        %v830 = vsel %vm350, %v308, 0
        %832 = vmatprep.subr.mxu0 0.0
        %833 = vmatpush1.msra.mxu0 0.0
        %834 = vmatprep.subr.mxu0 0.0
        %835 = vmatpush1.msra.mxu0 0.0
        %836 = vmatprep.subr.mxu0 0.0
        %837 = vmatpush1.msra.mxu0 0.0
        %838 = vmatprep.subr.mxu0 0.0
        %839 = vmatpush1.msra.mxu0 0.0
        %840 = vmatprep.subr.mxu0 0.0
        %841 = vmatpush1.msra.mxu0 0.0
        %842 = vmatprep.subr.mxu0 0.0
        %843 = vmatpush1.msra.mxu0 0.0
        %844 = vmatprep.subr.mxu0 0.0
        %845 = vmatpush1.msra.mxu0 0.0
        %846 = vmatprep.subr.mxu0 0.0
        %847 = vmatpush1.msra.mxu0 0.0
        %848 = vmatprep.subr.mxu0 0.0
        %849 = vmatpush1.msra.mxu0 0.0
        %850 = vmatprep.subr.mxu0 0.0
        %851 = vmatpush1.msra.mxu0 0.0
        %852 = vmatprep.subr.mxu0 0.0
        %853 = vmatpush1.msra.mxu0 0.0
        %854 = vmatprep.subr.mxu0 0.0
        %855 = vmatpush1.msra.mxu0 0.0
        %856 = vmatprep.subr.mxu0 0.0
        %857 = vmatpush1.msra.mxu0 0.0
        %858 = vmatprep.subr.mxu0 0.0
        %859 = vmatpush1.msra.mxu0 0.0
        %860 = vmatprep.subr.mxu0 0.0
        %861 = vmatpush1.msra.mxu0 0.0
        %862 = vmatprep.subr.mxu0 %v830
        %863 = vmatpush1.msra.mxu0 %v828
        %864 = vmatprep.subr.mxu0 0.0
        %865 = vmatpush2.msra.mxu0 0.0
        %866 = vmatprep.subr.mxu0 0.0
        %867 = vmatpush2.msra.mxu0 0.0
        %868 = vmatprep.subr.mxu0 0.0
        %869 = vmatpush2.msra.mxu0 0.0
        %870 = vmatprep.subr.mxu0 0.0
        %871 = vmatpush2.msra.mxu0 0.0
        %872 = vmatprep.subr.mxu0 0.0
        %873 = vmatpush2.msra.mxu0 0.0
        %874 = vmatprep.subr.mxu0 0.0
        %875 = vmatpush2.msra.mxu0 0.0
        %876 = vmatprep.subr.mxu0 0.0
        %877 = vmatpush2.msra.mxu0 0.0
        %878 = vmatprep.subr.mxu0 0.0
        %879 = vmatpush2.msra.mxu0 0.0
        %880 = vmatprep.subr.mxu0 0.0
        %881 = vmatpush2.msra.mxu0 0.0
        %882 = vmatprep.subr.mxu0 0.0
        %883 = vmatpush2.msra.mxu0 0.0
        %884 = vmatprep.subr.mxu0 0.0
        %885 = vmatpush2.msra.mxu0 0.0
        %886 = vmatprep.subr.mxu0 0.0
        %887 = vmatpush2.msra.mxu0 0.0
        %888 = vmatprep.subr.mxu0 0.0
        %889 = vmatpush2.msra.mxu0 0.0
        %890 = vmatprep.subr.mxu0 0.0
        %891 = vmatpush2.msra.mxu0 0.0
        %892 = vmatprep.subr.mxu0 0.0
        %893 = vmatpush2.msra.mxu0 0.0
        %894 = vmatprep.subr.mxu0 0.0
        %895 = vmatpush2.msra.mxu0 0.0
        %896 = vmatprep.mubr.f32.mxu0 0.0
        %897 = vmatmul.mubr.f32.gmra.mxu0 %v817
        %v898 = vpop.f32.mrf.mxu0
        %v899 = vadd.f32 0.0, %v898
        %v900 = vpop.f32.mrf.mxu0
        %v901 = vadd.f32 0.0, %v900
        %902 = vmatprep.mubr.f32.mxu0 0.0
        %903 = vmatmul.mubr.f32.gmra.mxu0 %v820
        %v904 = vpop.f32.mrf.mxu0
        %v905 = vadd.f32 0.0, %v904
        %v906 = vpop.f32.mrf.mxu0
        %v907 = vadd.f32 0.0, %v906
        %908 = vmatprep.mubr.f32.mxu0 0.0
        %909 = vmatmul.mubr.f32.gmra.mxu0 %v823
        %v910 = vpop.f32.mrf.mxu0
        %v911 = vadd.f32 0.0, %v910
        %v912 = vpop.f32.mrf.mxu0
        %v913 = vadd.f32 0.0, %v912
        %914 = vmatprep.mubr.f32.mxu0 0.0
        %915 = vmatmul.mubr.f32.gmra.mxu0 %v826
        %v916 = vpop.f32.mrf.mxu0
        %v917 = vadd.f32 0.0, %v916
        %v918 = vpop.f32.mrf.mxu0
        %v919 = vadd.f32 0.0, %v918
        %920 = vdwg.mxu0
        %v921 = vadd.f32 %v803, %v899
        %v922 = vadd.f32 %v804, %v901
        %v923 = vadd.f32 %v805, %v905
        %v924 = vadd.f32 %v806, %v907
        %v925 = vadd.f32 %v807, %v911
        %v926 = vadd.f32 %v808, %v913
        %v927 = vadd.f32 %v809, %v917
        %v928 = vadd.f32 %v810, %v919
        %929 = vrot.lane.b32.xlu0 %v306, 127
        %v930 = vpop.permute.xlu0 %929
        %931 = vrot.lane.b32.xlu0 %v308, 127
        %v932 = vpop.permute.xlu0 %931
        %vm933 = vcmp.lt.s32.totalorder %v278, 127
        %v934 = vsel %vm933, %v930, %v932
        %v935 = vsel %vm933, %v932, %v930
        %v936 = vmul.f32 %v934, %v296
        %v937 = vmul.f32 %v935, %v297
        %s938 = scalar_lea.vmem %s1, 160
        %v939 = vld [vmem:[%s938] sm:$0xff]
        %v940 = vld [vmem:[%s938 + $0x8] sm:$0xff]
        %v941 = vld [vmem:[%s938 + $0x10] sm:$0xff]
        %v942 = vld [vmem:[%s938 + $0x18] sm:$0xff]
        %v944 = vsel %vm337, %v939, 0
        %v947 = vsel %vm337, %v940, 0
        %v950 = vsel %vm337, %v941, 0
        %v953 = vsel %vm337, %v942, 0
        %v956 = vsel %vm350, %v936, 0
        %v959 = vsel %vm350, %v937, 0
        %961 = vmatprep.subr.mxu0 0.0
        %962 = vmatpush1.msra.mxu0 0.0
        %963 = vmatprep.subr.mxu0 0.0
        %964 = vmatpush1.msra.mxu0 0.0
        %965 = vmatprep.subr.mxu0 0.0
        %966 = vmatpush1.msra.mxu0 0.0
        %967 = vmatprep.subr.mxu0 0.0
        %968 = vmatpush1.msra.mxu0 0.0
        %969 = vmatprep.subr.mxu0 0.0
        %970 = vmatpush1.msra.mxu0 0.0
        %971 = vmatprep.subr.mxu0 0.0
        %972 = vmatpush1.msra.mxu0 0.0
        %973 = vmatprep.subr.mxu0 0.0
        %974 = vmatpush1.msra.mxu0 0.0
        %975 = vmatprep.subr.mxu0 0.0
        %976 = vmatpush1.msra.mxu0 0.0
        %977 = vmatprep.subr.mxu0 0.0
        %978 = vmatpush1.msra.mxu0 0.0
        %979 = vmatprep.subr.mxu0 0.0
        %980 = vmatpush1.msra.mxu0 0.0
        %981 = vmatprep.subr.mxu0 0.0
        %982 = vmatpush1.msra.mxu0 0.0
        %983 = vmatprep.subr.mxu0 0.0
        %984 = vmatpush1.msra.mxu0 0.0
        %985 = vmatprep.subr.mxu0 0.0
        %986 = vmatpush1.msra.mxu0 0.0
        %987 = vmatprep.subr.mxu0 0.0
        %988 = vmatpush1.msra.mxu0 0.0
        %989 = vmatprep.subr.mxu0 0.0
        %990 = vmatpush1.msra.mxu0 0.0
        %991 = vmatprep.subr.mxu0 %v959
        %992 = vmatpush1.msra.mxu0 %v956
        %993 = vmatprep.subr.mxu0 0.0
        %994 = vmatpush2.msra.mxu0 0.0
        %995 = vmatprep.subr.mxu0 0.0
        %996 = vmatpush2.msra.mxu0 0.0
        %997 = vmatprep.subr.mxu0 0.0
        %998 = vmatpush2.msra.mxu0 0.0
        %999 = vmatprep.subr.mxu0 0.0
        %1000 = vmatpush2.msra.mxu0 0.0
        %1001 = vmatprep.subr.mxu0 0.0
        %1002 = vmatpush2.msra.mxu0 0.0
        %1003 = vmatprep.subr.mxu0 0.0
        %1004 = vmatpush2.msra.mxu0 0.0
        %1005 = vmatprep.subr.mxu0 0.0
        %1006 = vmatpush2.msra.mxu0 0.0
        %1007 = vmatprep.subr.mxu0 0.0
        %1008 = vmatpush2.msra.mxu0 0.0
        %1009 = vmatprep.subr.mxu0 0.0
        %1010 = vmatpush2.msra.mxu0 0.0
        %1011 = vmatprep.subr.mxu0 0.0
        %1012 = vmatpush2.msra.mxu0 0.0
        %1013 = vmatprep.subr.mxu0 0.0
        %1014 = vmatpush2.msra.mxu0 0.0
        %1015 = vmatprep.subr.mxu0 0.0
        %1016 = vmatpush2.msra.mxu0 0.0
        %1017 = vmatprep.subr.mxu0 0.0
        %1018 = vmatpush2.msra.mxu0 0.0
        %1019 = vmatprep.subr.mxu0 0.0
        %1020 = vmatpush2.msra.mxu0 0.0
        %1021 = vmatprep.subr.mxu0 0.0
        %1022 = vmatpush2.msra.mxu0 0.0
        %1023 = vmatprep.subr.mxu0 0.0
        %1024 = vmatpush2.msra.mxu0 0.0
        %1025 = vmatprep.mubr.f32.mxu0 0.0
        %1026 = vmatmul.mubr.f32.gmra.mxu0 %v944
        %v1027 = vpop.f32.mrf.mxu0
        %v1028 = vadd.f32 0.0, %v1027
        %v1029 = vpop.f32.mrf.mxu0
        %v1030 = vadd.f32 0.0, %v1029
        %1031 = vmatprep.mubr.f32.mxu0 0.0
        %1032 = vmatmul.mubr.f32.gmra.mxu0 %v947
        %v1033 = vpop.f32.mrf.mxu0
        %v1034 = vadd.f32 0.0, %v1033
        %v1035 = vpop.f32.mrf.mxu0
        %v1036 = vadd.f32 0.0, %v1035
        %1037 = vmatprep.mubr.f32.mxu0 0.0
        %1038 = vmatmul.mubr.f32.gmra.mxu0 %v950
        %v1039 = vpop.f32.mrf.mxu0
        %v1040 = vadd.f32 0.0, %v1039
        %v1041 = vpop.f32.mrf.mxu0
        %v1042 = vadd.f32 0.0, %v1041
        %1043 = vmatprep.mubr.f32.mxu0 0.0
        %1044 = vmatmul.mubr.f32.gmra.mxu0 %v953
        %v1045 = vpop.f32.mrf.mxu0
        %v1046 = vadd.f32 0.0, %v1045
        %v1047 = vpop.f32.mrf.mxu0
        %v1048 = vadd.f32 0.0, %v1047
        %1049 = vdwg.mxu0
        %v1050 = vadd.f32 %v921, %v1028
        %v1051 = vadd.f32 %v922, %v1030
        %v1052 = vadd.f32 %v923, %v1034
        %v1053 = vadd.f32 %v924, %v1036
        %v1054 = vadd.f32 %v925, %v1040
        %v1055 = vadd.f32 %v926, %v1042
        %v1056 = vadd.f32 %v927, %v1046
        %v1057 = vadd.f32 %v928, %v1048
        %1058 = vrot.lane.b32.xlu0 %v306, 113
        %v1059 = vpop.permute.xlu0 %1058
        %1060 = vrot.lane.b32.xlu0 %v308, 113
        %v1061 = vpop.permute.xlu0 %1060
        %vm1062 = vcmp.lt.s32.totalorder %v278, 113
        %v1063 = vsel %vm1062, %v1059, %v1061
        %v1064 = vsel %vm1062, %v1061, %v1059
        %v1065 = vmul.f32 %v1063, %v302
        %v1066 = vmul.f32 %v1064, %v303
        %s1067 = scalar_lea.vmem %s1, 192
        %v1068 = vld [vmem:[%s1067] sm:$0xff]
        %v1069 = vld [vmem:[%s1067 + $0x8] sm:$0xff]
        %v1070 = vld [vmem:[%s1067 + $0x10] sm:$0xff]
        %v1071 = vld [vmem:[%s1067 + $0x18] sm:$0xff]
        %v1073 = vsel %vm337, %v1068, 0
        %v1076 = vsel %vm337, %v1069, 0
        %v1079 = vsel %vm337, %v1070, 0
        %v1082 = vsel %vm337, %v1071, 0
        %v1085 = vsel %vm350, %v1065, 0
        %v1088 = vsel %vm350, %v1066, 0
        %1090 = vmatprep.subr.mxu0 0.0
        %1091 = vmatpush1.msra.mxu0 0.0
        %1092 = vmatprep.subr.mxu0 0.0
        %1093 = vmatpush1.msra.mxu0 0.0
        %1094 = vmatprep.subr.mxu0 0.0
        %1095 = vmatpush1.msra.mxu0 0.0
        %1096 = vmatprep.subr.mxu0 0.0
        %1097 = vmatpush1.msra.mxu0 0.0
        %1098 = vmatprep.subr.mxu0 0.0
        %1099 = vmatpush1.msra.mxu0 0.0
        %1100 = vmatprep.subr.mxu0 0.0
        %1101 = vmatpush1.msra.mxu0 0.0
        %1102 = vmatprep.subr.mxu0 0.0
        %1103 = vmatpush1.msra.mxu0 0.0
        %1104 = vmatprep.subr.mxu0 0.0
        %1105 = vmatpush1.msra.mxu0 0.0
        %1106 = vmatprep.subr.mxu0 0.0
        %1107 = vmatpush1.msra.mxu0 0.0
        %1108 = vmatprep.subr.mxu0 0.0
        %1109 = vmatpush1.msra.mxu0 0.0
        %1110 = vmatprep.subr.mxu0 0.0
        %1111 = vmatpush1.msra.mxu0 0.0
        %1112 = vmatprep.subr.mxu0 0.0
        %1113 = vmatpush1.msra.mxu0 0.0
        %1114 = vmatprep.subr.mxu0 0.0
        %1115 = vmatpush1.msra.mxu0 0.0
        %1116 = vmatprep.subr.mxu0 0.0
        %1117 = vmatpush1.msra.mxu0 0.0
        %1118 = vmatprep.subr.mxu0 0.0
        %1119 = vmatpush1.msra.mxu0 0.0
        %1120 = vmatprep.subr.mxu0 %v1088
        %1121 = vmatpush1.msra.mxu0 %v1085
        %1122 = vmatprep.subr.mxu0 0.0
        %1123 = vmatpush2.msra.mxu0 0.0
        %1124 = vmatprep.subr.mxu0 0.0
        %1125 = vmatpush2.msra.mxu0 0.0
        %1126 = vmatprep.subr.mxu0 0.0
        %1127 = vmatpush2.msra.mxu0 0.0
        %1128 = vmatprep.subr.mxu0 0.0
        %1129 = vmatpush2.msra.mxu0 0.0
        %1130 = vmatprep.subr.mxu0 0.0
        %1131 = vmatpush2.msra.mxu0 0.0
        %1132 = vmatprep.subr.mxu0 0.0
        %1133 = vmatpush2.msra.mxu0 0.0
        %1134 = vmatprep.subr.mxu0 0.0
        %1135 = vmatpush2.msra.mxu0 0.0
        %1136 = vmatprep.subr.mxu0 0.0
        %1137 = vmatpush2.msra.mxu0 0.0
        %1138 = vmatprep.subr.mxu0 0.0
        %1139 = vmatpush2.msra.mxu0 0.0
        %1140 = vmatprep.subr.mxu0 0.0
        %1141 = vmatpush2.msra.mxu0 0.0
        %1142 = vmatprep.subr.mxu0 0.0
        %1143 = vmatpush2.msra.mxu0 0.0
        %1144 = vmatprep.subr.mxu0 0.0
        %1145 = vmatpush2.msra.mxu0 0.0
        %1146 = vmatprep.subr.mxu0 0.0
        %1147 = vmatpush2.msra.mxu0 0.0
        %1148 = vmatprep.subr.mxu0 0.0
        %1149 = vmatpush2.msra.mxu0 0.0
        %1150 = vmatprep.subr.mxu0 0.0
        %1151 = vmatpush2.msra.mxu0 0.0
        %1152 = vmatprep.subr.mxu0 0.0
        %1153 = vmatpush2.msra.mxu0 0.0
        %1154 = vmatprep.mubr.f32.mxu0 0.0
        %1155 = vmatmul.mubr.f32.gmra.mxu0 %v1073
        %v1156 = vpop.f32.mrf.mxu0
        %v1157 = vadd.f32 0.0, %v1156
        %v1158 = vpop.f32.mrf.mxu0
        %v1159 = vadd.f32 0.0, %v1158
        %1160 = vmatprep.mubr.f32.mxu0 0.0
        %1161 = vmatmul.mubr.f32.gmra.mxu0 %v1076
        %v1162 = vpop.f32.mrf.mxu0
        %v1163 = vadd.f32 0.0, %v1162
        %v1164 = vpop.f32.mrf.mxu0
        %v1165 = vadd.f32 0.0, %v1164
        %1166 = vmatprep.mubr.f32.mxu0 0.0
        %1167 = vmatmul.mubr.f32.gmra.mxu0 %v1079
        %v1168 = vpop.f32.mrf.mxu0
        %v1169 = vadd.f32 0.0, %v1168
        %v1170 = vpop.f32.mrf.mxu0
        %v1171 = vadd.f32 0.0, %v1170
        %1172 = vmatprep.mubr.f32.mxu0 0.0
        %1173 = vmatmul.mubr.f32.gmra.mxu0 %v1082
        %v1174 = vpop.f32.mrf.mxu0
        %v1175 = vadd.f32 0.0, %v1174
        %v1176 = vpop.f32.mrf.mxu0
        %v1177 = vadd.f32 0.0, %v1176
        %1178 = vdwg.mxu0
        %v1179 = vadd.f32 %v1050, %v1157
        %v1180 = vadd.f32 %v1051, %v1159
        %v1181 = vadd.f32 %v1052, %v1163
        %v1182 = vadd.f32 %v1053, %v1165
        %v1183 = vadd.f32 %v1054, %v1169
        %v1184 = vadd.f32 %v1055, %v1171
        %v1185 = vadd.f32 %v1056, %v1175
        %v1186 = vadd.f32 %v1057, %v1177
        %1187 = vrot.lane.b32.xlu0 %v306, 112
        %v1188 = vpop.permute.xlu0 %1187
        %1189 = vrot.lane.b32.xlu0 %v308, 112
        %v1190 = vpop.permute.xlu0 %1189
        %vm1191 = vcmp.lt.s32.totalorder %v278, 112
        %v1192 = vsel %vm1191, %v1188, %v1190
        %v1193 = vsel %vm1191, %v1190, %v1188
        %v1194 = vmul.f32 %v1192, %v288
        %v1195 = vmul.f32 %v1193, %v289
        %s1196 = scalar_lea.vmem %s1, 224
        %v1197 = vld [vmem:[%s1196] sm:$0xff]
        %v1198 = vld [vmem:[%s1196 + $0x8] sm:$0xff]
        %v1199 = vld [vmem:[%s1196 + $0x10] sm:$0xff]
        %v1200 = vld [vmem:[%s1196 + $0x18] sm:$0xff]
        %v1202 = vsel %vm337, %v1197, 0
        %v1205 = vsel %vm337, %v1198, 0
        %v1208 = vsel %vm337, %v1199, 0
        %v1211 = vsel %vm337, %v1200, 0
        %v1214 = vsel %vm350, %v1194, 0
        %v1217 = vsel %vm350, %v1195, 0
        %1219 = vmatprep.subr.mxu0 0.0
        %1220 = vmatpush1.msra.mxu0 0.0
        %1221 = vmatprep.subr.mxu0 0.0
        %1222 = vmatpush1.msra.mxu0 0.0
        %1223 = vmatprep.subr.mxu0 0.0
        %1224 = vmatpush1.msra.mxu0 0.0
        %1225 = vmatprep.subr.mxu0 0.0
        %1226 = vmatpush1.msra.mxu0 0.0
        %1227 = vmatprep.subr.mxu0 0.0
        %1228 = vmatpush1.msra.mxu0 0.0
        %1229 = vmatprep.subr.mxu0 0.0
        %1230 = vmatpush1.msra.mxu0 0.0
        %1231 = vmatprep.subr.mxu0 0.0
        %1232 = vmatpush1.msra.mxu0 0.0
        %1233 = vmatprep.subr.mxu0 0.0
        %1234 = vmatpush1.msra.mxu0 0.0
        %1235 = vmatprep.subr.mxu0 0.0
        %1236 = vmatpush1.msra.mxu0 0.0
        %1237 = vmatprep.subr.mxu0 0.0
        %1238 = vmatpush1.msra.mxu0 0.0
        %1239 = vmatprep.subr.mxu0 0.0
        %1240 = vmatpush1.msra.mxu0 0.0
        %1241 = vmatprep.subr.mxu0 0.0
        %1242 = vmatpush1.msra.mxu0 0.0
        %1243 = vmatprep.subr.mxu0 0.0
        %1244 = vmatpush1.msra.mxu0 0.0
        %1245 = vmatprep.subr.mxu0 0.0
        %1246 = vmatpush1.msra.mxu0 0.0
        %1247 = vmatprep.subr.mxu0 0.0
        %1248 = vmatpush1.msra.mxu0 0.0
        %1249 = vmatprep.subr.mxu0 %v1217
        %1250 = vmatpush1.msra.mxu0 %v1214
        %1251 = vmatprep.subr.mxu0 0.0
        %1252 = vmatpush2.msra.mxu0 0.0
        %1253 = vmatprep.subr.mxu0 0.0
        %1254 = vmatpush2.msra.mxu0 0.0
        %1255 = vmatprep.subr.mxu0 0.0
        %1256 = vmatpush2.msra.mxu0 0.0
        %1257 = vmatprep.subr.mxu0 0.0
        %1258 = vmatpush2.msra.mxu0 0.0
        %1259 = vmatprep.subr.mxu0 0.0
        %1260 = vmatpush2.msra.mxu0 0.0
        %1261 = vmatprep.subr.mxu0 0.0
        %1262 = vmatpush2.msra.mxu0 0.0
        %1263 = vmatprep.subr.mxu0 0.0
        %1264 = vmatpush2.msra.mxu0 0.0
        %1265 = vmatprep.subr.mxu0 0.0
        %1266 = vmatpush2.msra.mxu0 0.0
        %1267 = vmatprep.subr.mxu0 0.0
        %1268 = vmatpush2.msra.mxu0 0.0
        %1269 = vmatprep.subr.mxu0 0.0
        %1270 = vmatpush2.msra.mxu0 0.0
        %1271 = vmatprep.subr.mxu0 0.0
        %1272 = vmatpush2.msra.mxu0 0.0
        %1273 = vmatprep.subr.mxu0 0.0
        %1274 = vmatpush2.msra.mxu0 0.0
        %1275 = vmatprep.subr.mxu0 0.0
        %1276 = vmatpush2.msra.mxu0 0.0
        %1277 = vmatprep.subr.mxu0 0.0
        %1278 = vmatpush2.msra.mxu0 0.0
        %1279 = vmatprep.subr.mxu0 0.0
        %1280 = vmatpush2.msra.mxu0 0.0
        %1281 = vmatprep.subr.mxu0 0.0
        %1282 = vmatpush2.msra.mxu0 0.0
        %1283 = vmatprep.mubr.f32.mxu0 0.0
        %1284 = vmatmul.mubr.f32.gmra.mxu0 %v1202
        %v1285 = vpop.f32.mrf.mxu0
        %v1286 = vadd.f32 0.0, %v1285
        %v1287 = vpop.f32.mrf.mxu0
        %v1288 = vadd.f32 0.0, %v1287
        %1289 = vmatprep.mubr.f32.mxu0 0.0
        %1290 = vmatmul.mubr.f32.gmra.mxu0 %v1205
        %v1291 = vpop.f32.mrf.mxu0
        %v1292 = vadd.f32 0.0, %v1291
        %v1293 = vpop.f32.mrf.mxu0
        %v1294 = vadd.f32 0.0, %v1293
        %1295 = vmatprep.mubr.f32.mxu0 0.0
        %1296 = vmatmul.mubr.f32.gmra.mxu0 %v1208
        %v1297 = vpop.f32.mrf.mxu0
        %v1298 = vadd.f32 0.0, %v1297
        %v1299 = vpop.f32.mrf.mxu0
        %v1300 = vadd.f32 0.0, %v1299
        %1301 = vmatprep.mubr.f32.mxu0 0.0
        %1302 = vmatmul.mubr.f32.gmra.mxu0 %v1211
        %v1303 = vpop.f32.mrf.mxu0
        %v1304 = vadd.f32 0.0, %v1303
        %v1305 = vpop.f32.mrf.mxu0
        %v1306 = vadd.f32 0.0, %v1305
        %1307 = vdwg.mxu0
        %v1308 = vadd.f32 %v1179, %v1286
        %v1309 = vadd.f32 %v1180, %v1288
        %v1310 = vadd.f32 %v1181, %v1292
        %v1311 = vadd.f32 %v1182, %v1294
        %v1312 = vadd.f32 %v1183, %v1298
        %v1313 = vadd.f32 %v1184, %v1300
        %v1314 = vadd.f32 %v1185, %v1304
        %v1315 = vadd.f32 %v1186, %v1306
        %1316 = vrot.lane.b32.xlu0 %v306, 111
        %v1317 = vpop.permute.xlu0 %1316
        %1318 = vrot.lane.b32.xlu0 %v308, 111
        %v1319 = vpop.permute.xlu0 %1318
        %vm1320 = vcmp.lt.s32.totalorder %v278, 111
        %v1321 = vsel %vm1320, %v1317, %v1319
        %v1322 = vsel %vm1320, %v1319, %v1317
        %v1323 = vmul.f32 %v1321, %v304
        %v1324 = vmul.f32 %v1322, %v305
        %s1325 = scalar_lea.vmem %s1, 256
        %v1326 = vld [vmem:[%s1325] sm:$0xff]
        %v1327 = vld [vmem:[%s1325 + $0x8] sm:$0xff]
        %v1328 = vld [vmem:[%s1325 + $0x10] sm:$0xff]
        %v1329 = vld [vmem:[%s1325 + $0x18] sm:$0xff]
        %v1331 = vsel %vm337, %v1326, 0
        %v1334 = vsel %vm337, %v1327, 0
        %v1337 = vsel %vm337, %v1328, 0
        %v1340 = vsel %vm337, %v1329, 0
        %v1343 = vsel %vm350, %v1323, 0
        %v1346 = vsel %vm350, %v1324, 0
        %1348 = vmatprep.subr.mxu0 0.0
        %1349 = vmatpush1.msra.mxu0 0.0
        %1350 = vmatprep.subr.mxu0 0.0
        %1351 = vmatpush1.msra.mxu0 0.0
        %1352 = vmatprep.subr.mxu0 0.0
        %1353 = vmatpush1.msra.mxu0 0.0
        %1354 = vmatprep.subr.mxu0 0.0
        %1355 = vmatpush1.msra.mxu0 0.0
        %1356 = vmatprep.subr.mxu0 0.0
        %1357 = vmatpush1.msra.mxu0 0.0
        %1358 = vmatprep.subr.mxu0 0.0
        %1359 = vmatpush1.msra.mxu0 0.0
        %1360 = vmatprep.subr.mxu0 0.0
        %1361 = vmatpush1.msra.mxu0 0.0
        %1362 = vmatprep.subr.mxu0 0.0
        %1363 = vmatpush1.msra.mxu0 0.0
        %1364 = vmatprep.subr.mxu0 0.0
        %1365 = vmatpush1.msra.mxu0 0.0
        %1366 = vmatprep.subr.mxu0 0.0
        %1367 = vmatpush1.msra.mxu0 0.0
        %1368 = vmatprep.subr.mxu0 0.0
        %1369 = vmatpush1.msra.mxu0 0.0
        %1370 = vmatprep.subr.mxu0 0.0
        %1371 = vmatpush1.msra.mxu0 0.0
        %1372 = vmatprep.subr.mxu0 0.0
        %1373 = vmatpush1.msra.mxu0 0.0
        %1374 = vmatprep.subr.mxu0 0.0
        %1375 = vmatpush1.msra.mxu0 0.0
        %1376 = vmatprep.subr.mxu0 0.0
        %1377 = vmatpush1.msra.mxu0 0.0
        %1378 = vmatprep.subr.mxu0 %v1346
        %1379 = vmatpush1.msra.mxu0 %v1343
        %1380 = vmatprep.subr.mxu0 0.0
        %1381 = vmatpush2.msra.mxu0 0.0
        %1382 = vmatprep.subr.mxu0 0.0
        %1383 = vmatpush2.msra.mxu0 0.0
        %1384 = vmatprep.subr.mxu0 0.0
        %1385 = vmatpush2.msra.mxu0 0.0
        %1386 = vmatprep.subr.mxu0 0.0
        %1387 = vmatpush2.msra.mxu0 0.0
        %1388 = vmatprep.subr.mxu0 0.0
        %1389 = vmatpush2.msra.mxu0 0.0
        %1390 = vmatprep.subr.mxu0 0.0
        %1391 = vmatpush2.msra.mxu0 0.0
        %1392 = vmatprep.subr.mxu0 0.0
        %1393 = vmatpush2.msra.mxu0 0.0
        %1394 = vmatprep.subr.mxu0 0.0
        %1395 = vmatpush2.msra.mxu0 0.0
        %1396 = vmatprep.subr.mxu0 0.0
        %1397 = vmatpush2.msra.mxu0 0.0
        %1398 = vmatprep.subr.mxu0 0.0
        %1399 = vmatpush2.msra.mxu0 0.0
        %1400 = vmatprep.subr.mxu0 0.0
        %1401 = vmatpush2.msra.mxu0 0.0
        %1402 = vmatprep.subr.mxu0 0.0
        %1403 = vmatpush2.msra.mxu0 0.0
        %1404 = vmatprep.subr.mxu0 0.0
        %1405 = vmatpush2.msra.mxu0 0.0
        %1406 = vmatprep.subr.mxu0 0.0
        %1407 = vmatpush2.msra.mxu0 0.0
        %1408 = vmatprep.subr.mxu0 0.0
        %1409 = vmatpush2.msra.mxu0 0.0
        %1410 = vmatprep.subr.mxu0 0.0
        %1411 = vmatpush2.msra.mxu0 0.0
        %1412 = vmatprep.mubr.f32.mxu0 0.0
        %1413 = vmatmul.mubr.f32.gmra.mxu0 %v1331
        %v1414 = vpop.f32.mrf.mxu0
        %v1415 = vadd.f32 0.0, %v1414
        %v1416 = vpop.f32.mrf.mxu0
        %v1417 = vadd.f32 0.0, %v1416
        %1418 = vmatprep.mubr.f32.mxu0 0.0
        %1419 = vmatmul.mubr.f32.gmra.mxu0 %v1334
        %v1420 = vpop.f32.mrf.mxu0
        %v1421 = vadd.f32 0.0, %v1420
        %v1422 = vpop.f32.mrf.mxu0
        %v1423 = vadd.f32 0.0, %v1422
        %1424 = vmatprep.mubr.f32.mxu0 0.0
        %1425 = vmatmul.mubr.f32.gmra.mxu0 %v1337
        %v1426 = vpop.f32.mrf.mxu0
        %v1427 = vadd.f32 0.0, %v1426
        %v1428 = vpop.f32.mrf.mxu0
        %v1429 = vadd.f32 0.0, %v1428
        %1430 = vmatprep.mubr.f32.mxu0 0.0
        %1431 = vmatmul.mubr.f32.gmra.mxu0 %v1340
        %v1432 = vpop.f32.mrf.mxu0
        %v1433 = vadd.f32 0.0, %v1432
        %v1434 = vpop.f32.mrf.mxu0
        %v1435 = vadd.f32 0.0, %v1434
        %1436 = vdwg.mxu0
        %v1437 = vadd.f32 %v1308, %v1415
        %v1438 = vadd.f32 %v1309, %v1417
        %v1439 = vadd.f32 %v1310, %v1421
        %v1440 = vadd.f32 %v1311, %v1423
        %v1441 = vadd.f32 %v1312, %v1427
        %v1442 = vadd.f32 %v1313, %v1429
        %v1443 = vadd.f32 %v1314, %v1433
        %v1444 = vadd.f32 %v1315, %v1435
        %v1445 = vld [vmem:[%s2] sm:$0xff]
        %v1446 = vld [vmem:[%s2 + $0x8] sm:$0xff]
        %v1447 = vld [vmem:[%s2 + $0x10] sm:$0xff]
        %v1448 = vld [vmem:[%s2 + $0x18] sm:$0xff]
        %1450 = vset.pattern.permute.xlu0 0
        %1451 = vperm.xlu0 %1450, %v1445
        %v1452 = vpop.permute.xlu0 %1451
        %1455 = vset.pattern.permute.xlu0 0
        %1456 = vperm.xlu0 %1455, %v1446
        %v1457 = vpop.permute.xlu0 %1456
        %1460 = vset.pattern.permute.xlu0 0
        %1461 = vperm.xlu0 %1460, %v1447
        %v1462 = vpop.permute.xlu0 %1461
        %1465 = vset.pattern.permute.xlu0 0
        %1466 = vperm.xlu0 %1465, %v1448
        %v1467 = vpop.permute.xlu0 %1466
        %v1469 = vadd.f32 %v1437, %v1452
        %v1470 = vadd.f32 %v1438, %v1452
        %v1471 = vadd.f32 %v1439, %v1457
        %v1472 = vadd.f32 %v1440, %v1457
        %v1473 = vadd.f32 %v1441, %v1462
        %v1474 = vadd.f32 %v1442, %v1462
        %v1475 = vadd.f32 %v1443, %v1467
        %v1476 = vadd.f32 %v1444, %v1467
        %v1477 = vmax.f32 %v1469, 0.0
        %v1478 = vmax.f32 %v1470, 0.0
        %v1479 = vmax.f32 %v1471, 0.0
        %v1480 = vmax.f32 %v1472, 0.0
        %v1481 = vmax.f32 %v1473, 0.0
        %v1482 = vmax.f32 %v1474, 0.0
        %v1483 = vmax.f32 %v1475, 0.0
        %v1484 = vmax.f32 %v1476, 0.0
        %1485 = vrot.lane.b32.xlu0 %v1477, 17
        %v1486 = vpop.permute.xlu0 %1485
        %1487 = vrot.lane.b32.xlu0 %v1479, 17
        %v1488 = vpop.permute.xlu0 %1487
        %1489 = vrot.lane.b32.xlu0 %v1481, 17
        %v1490 = vpop.permute.xlu0 %1489
        %1491 = vrot.lane.b32.xlu0 %v1483, 17
        %v1492 = vpop.permute.xlu0 %1491
        %1493 = vrot.lane.b32.xlu0 %v1478, 17
        %v1494 = vpop.permute.xlu0 %1493
        %1495 = vrot.lane.b32.xlu0 %v1480, 17
        %v1496 = vpop.permute.xlu0 %1495
        %1497 = vrot.lane.b32.xlu0 %v1482, 17
        %v1498 = vpop.permute.xlu0 %1497
        %1499 = vrot.lane.b32.xlu0 %v1484, 17
        %v1500 = vpop.permute.xlu0 %1499
        %v1501 = vsel %vm314, %v1486, %v1494
        %v1502 = vsel %vm314, %v1488, %v1496
        %v1503 = vsel %vm314, %v1490, %v1498
        %v1504 = vsel %vm314, %v1492, %v1500
        %v1505 = vsel %vm314, %v1494, %v1486
        %v1506 = vsel %vm314, %v1496, %v1488
        %v1507 = vsel %vm314, %v1498, %v1490
        %v1508 = vsel %vm314, %v1500, %v1492
        %v1509 = vmul.f32 %v1505, %v298
        %v1510 = vmul.f32 %v1501, %v299
        %v1511 = vmul.f32 %v1506, %v298
        %v1512 = vmul.f32 %v1502, %v299
        %v1513 = vmul.f32 %v1507, %v298
        %v1514 = vmul.f32 %v1503, %v299
        %v1515 = vmul.f32 %v1508, %v298
        %v1516 = vmul.f32 %v1504, %v299
        %v1517 = vld [vmem:[%s3] sm:$0xff]
        %v1518 = vld [vmem:[%s3 + $0x8] sm:$0xff]
        %v1519 = vld [vmem:[%s3 + $0x10] sm:$0xff]
        %v1520 = vld [vmem:[%s3 + $0x18] sm:$0xff]
        %1521 = vrot.lane.b32.xlu0 %v1477, 16
        %v1522 = vpop.permute.xlu0 %1521
        %1523 = vrot.lane.b32.xlu0 %v1479, 16
        %v1524 = vpop.permute.xlu0 %1523
        %1525 = vrot.lane.b32.xlu0 %v1481, 16
        %v1526 = vpop.permute.xlu0 %1525
        %1527 = vrot.lane.b32.xlu0 %v1483, 16
        %v1528 = vpop.permute.xlu0 %1527
        %1529 = vrot.lane.b32.xlu0 %v1478, 16
        %v1530 = vpop.permute.xlu0 %1529
        %1531 = vrot.lane.b32.xlu0 %v1480, 16
        %v1532 = vpop.permute.xlu0 %1531
        %1533 = vrot.lane.b32.xlu0 %v1482, 16
        %v1534 = vpop.permute.xlu0 %1533
        %1535 = vrot.lane.b32.xlu0 %v1484, 16
        %v1536 = vpop.permute.xlu0 %1535
        %v1537 = vsel %vm327, %v1522, %v1530
        %v1538 = vsel %vm327, %v1524, %v1532
        %v1539 = vsel %vm327, %v1526, %v1534
        %v1540 = vsel %vm327, %v1528, %v1536
        %v1541 = vsel %vm327, %v1530, %v1522
        %v1542 = vsel %vm327, %v1532, %v1524
        %v1543 = vsel %vm327, %v1534, %v1526
        %v1544 = vsel %vm327, %v1536, %v1528
        %v1545 = vmul.f32 %v1541, %v284
        %v1546 = vmul.f32 %v1537, %v285
        %v1547 = vmul.f32 %v1542, %v284
        %v1548 = vmul.f32 %v1538, %v285
        %v1549 = vmul.f32 %v1543, %v284
        %v1550 = vmul.f32 %v1539, %v285
        %v1551 = vmul.f32 %v1544, %v284
        %v1552 = vmul.f32 %v1540, %v285
        %s1553 = scalar_lea.vmem %s3, 32
        %v1554 = vld [vmem:[%s1553] sm:$0xff]
        %v1555 = vld [vmem:[%s1553 + $0x8] sm:$0xff]
        %v1556 = vld [vmem:[%s1553 + $0x10] sm:$0xff]
        %v1557 = vld [vmem:[%s1553 + $0x18] sm:$0xff]
        %vm1558 = vcmask 261120
        %v1560 = vsel %vm1558, %v1554, 0
        %v1563 = vsel %vm1558, %v1555, 0
        %v1566 = vsel %vm1558, %v1556, 0
        %v1569 = vsel %vm1558, %v1557, 0
        %1571 = vmatprep.subr.mxu0 0.0
        %1572 = vmatpush1.msra.mxu0 0.0
        %1573 = vmatprep.subr.mxu0 0.0
        %1574 = vmatpush1.msra.mxu0 0.0
        %1575 = vmatprep.subr.mxu0 0.0
        %1576 = vmatpush1.msra.mxu0 0.0
        %1577 = vmatprep.subr.mxu0 0.0
        %1578 = vmatpush1.msra.mxu0 0.0
        %1579 = vmatprep.subr.mxu0 0.0
        %1580 = vmatpush1.msra.mxu0 0.0
        %1581 = vmatprep.subr.mxu0 0.0
        %1582 = vmatpush1.msra.mxu0 0.0
        %1583 = vmatprep.subr.mxu0 0.0
        %1584 = vmatpush1.msra.mxu0 0.0
        %1585 = vmatprep.subr.mxu0 0.0
        %1586 = vmatpush1.msra.mxu0 0.0
        %1587 = vmatprep.subr.mxu0 0.0
        %1588 = vmatpush1.msra.mxu0 0.0
        %1589 = vmatprep.subr.mxu0 0.0
        %1590 = vmatpush1.msra.mxu0 0.0
        %1591 = vmatprep.subr.mxu0 0.0
        %1592 = vmatpush1.msra.mxu0 0.0
        %1593 = vmatprep.subr.mxu0 0.0
        %1594 = vmatpush1.msra.mxu0 0.0
        %1595 = vmatprep.subr.mxu0 %v1552
        %1596 = vmatpush1.msra.mxu0 %v1551
        %1597 = vmatprep.subr.mxu0 %v1550
        %1598 = vmatpush1.msra.mxu0 %v1549
        %1599 = vmatprep.subr.mxu0 %v1548
        %1600 = vmatpush1.msra.mxu0 %v1547
        %1601 = vmatprep.subr.mxu0 %v1546
        %1602 = vmatpush1.msra.mxu0 %v1545
        %1603 = vmatprep.subr.mxu0 0.0
        %1604 = vmatpush2.msra.mxu0 0.0
        %1605 = vmatprep.subr.mxu0 0.0
        %1606 = vmatpush2.msra.mxu0 0.0
        %1607 = vmatprep.subr.mxu0 0.0
        %1608 = vmatpush2.msra.mxu0 0.0
        %1609 = vmatprep.subr.mxu0 0.0
        %1610 = vmatpush2.msra.mxu0 0.0
        %1611 = vmatprep.subr.mxu0 0.0
        %1612 = vmatpush2.msra.mxu0 0.0
        %1613 = vmatprep.subr.mxu0 0.0
        %1614 = vmatpush2.msra.mxu0 0.0
        %1615 = vmatprep.subr.mxu0 0.0
        %1616 = vmatpush2.msra.mxu0 0.0
        %1617 = vmatprep.subr.mxu0 0.0
        %1618 = vmatpush2.msra.mxu0 0.0
        %1619 = vmatprep.subr.mxu0 0.0
        %1620 = vmatpush2.msra.mxu0 0.0
        %1621 = vmatprep.subr.mxu0 0.0
        %1622 = vmatpush2.msra.mxu0 0.0
        %1623 = vmatprep.subr.mxu0 0.0
        %1624 = vmatpush2.msra.mxu0 0.0
        %1625 = vmatprep.subr.mxu0 0.0
        %1626 = vmatpush2.msra.mxu0 0.0
        %1627 = vmatprep.subr.mxu0 0.0
        %1628 = vmatpush2.msra.mxu0 0.0
        %1629 = vmatprep.subr.mxu0 0.0
        %1630 = vmatpush2.msra.mxu0 0.0
        %1631 = vmatprep.subr.mxu0 0.0
        %1632 = vmatpush2.msra.mxu0 0.0
        %1633 = vmatprep.subr.mxu0 0.0
        %1634 = vmatpush2.msra.mxu0 0.0
        %1635 = vmatprep.mubr.f32.mxu0 0.0
        %1636 = vmatmul.mubr.f32.gmra.mxu0 %v1560
        %v1637 = vpop.f32.mrf.mxu0
        %v1638 = vadd.f32 0.0, %v1637
        %v1639 = vpop.f32.mrf.mxu0
        %v1640 = vadd.f32 0.0, %v1639
        %1641 = vmatprep.mubr.f32.mxu0 0.0
        %1642 = vmatmul.mubr.f32.gmra.mxu0 %v1563
        %v1643 = vpop.f32.mrf.mxu0
        %v1644 = vadd.f32 0.0, %v1643
        %v1645 = vpop.f32.mrf.mxu0
        %v1646 = vadd.f32 0.0, %v1645
        %1647 = vmatprep.mubr.f32.mxu0 0.0
        %1648 = vmatmul.mubr.f32.gmra.mxu0 %v1566
        %v1649 = vpop.f32.mrf.mxu0
        %v1650 = vadd.f32 0.0, %v1649
        %v1651 = vpop.f32.mrf.mxu0
        %v1652 = vadd.f32 0.0, %v1651
        %1653 = vmatprep.mubr.f32.mxu0 0.0
        %1654 = vmatmul.mubr.f32.gmra.mxu0 %v1569
        %v1655 = vpop.f32.mrf.mxu0
        %v1656 = vadd.f32 0.0, %v1655
        %v1657 = vpop.f32.mrf.mxu0
        %v1658 = vadd.f32 0.0, %v1657
        %1659 = vdwg.mxu0
        %v1661 = vsel %vm1558, %v1517, 0
        %v1664 = vsel %vm1558, %v1518, 0
        %v1667 = vsel %vm1558, %v1519, 0
        %v1670 = vsel %vm1558, %v1520, 0
        %1672 = vmatprep.subr.mxu0 0.0
        %1673 = vmatpush1.msra.mxu0 0.0
        %1674 = vmatprep.subr.mxu0 0.0
        %1675 = vmatpush1.msra.mxu0 0.0
        %1676 = vmatprep.subr.mxu0 0.0
        %1677 = vmatpush1.msra.mxu0 0.0
        %1678 = vmatprep.subr.mxu0 0.0
        %1679 = vmatpush1.msra.mxu0 0.0
        %1680 = vmatprep.subr.mxu0 0.0
        %1681 = vmatpush1.msra.mxu0 0.0
        %1682 = vmatprep.subr.mxu0 0.0
        %1683 = vmatpush1.msra.mxu0 0.0
        %1684 = vmatprep.subr.mxu0 0.0
        %1685 = vmatpush1.msra.mxu0 0.0
        %1686 = vmatprep.subr.mxu0 0.0
        %1687 = vmatpush1.msra.mxu0 0.0
        %1688 = vmatprep.subr.mxu0 0.0
        %1689 = vmatpush1.msra.mxu0 0.0
        %1690 = vmatprep.subr.mxu0 0.0
        %1691 = vmatpush1.msra.mxu0 0.0
        %1692 = vmatprep.subr.mxu0 0.0
        %1693 = vmatpush1.msra.mxu0 0.0
        %1694 = vmatprep.subr.mxu0 0.0
        %1695 = vmatpush1.msra.mxu0 0.0
        %1696 = vmatprep.subr.mxu0 %v1516
        %1697 = vmatpush1.msra.mxu0 %v1515
        %1698 = vmatprep.subr.mxu0 %v1514
        %1699 = vmatpush1.msra.mxu0 %v1513
        %1700 = vmatprep.subr.mxu0 %v1512
        %1701 = vmatpush1.msra.mxu0 %v1511
        %1702 = vmatprep.subr.mxu0 %v1510
        %1703 = vmatpush1.msra.mxu0 %v1509
        %1704 = vmatprep.subr.mxu0 0.0
        %1705 = vmatpush2.msra.mxu0 0.0
        %1706 = vmatprep.subr.mxu0 0.0
        %1707 = vmatpush2.msra.mxu0 0.0
        %1708 = vmatprep.subr.mxu0 0.0
        %1709 = vmatpush2.msra.mxu0 0.0
        %1710 = vmatprep.subr.mxu0 0.0
        %1711 = vmatpush2.msra.mxu0 0.0
        %1712 = vmatprep.subr.mxu0 0.0
        %1713 = vmatpush2.msra.mxu0 0.0
        %1714 = vmatprep.subr.mxu0 0.0
        %1715 = vmatpush2.msra.mxu0 0.0
        %1716 = vmatprep.subr.mxu0 0.0
        %1717 = vmatpush2.msra.mxu0 0.0
        %1718 = vmatprep.subr.mxu0 0.0
        %1719 = vmatpush2.msra.mxu0 0.0
        %1720 = vmatprep.subr.mxu0 0.0
        %1721 = vmatpush2.msra.mxu0 0.0
        %1722 = vmatprep.subr.mxu0 0.0
        %1723 = vmatpush2.msra.mxu0 0.0
        %1724 = vmatprep.subr.mxu0 0.0
        %1725 = vmatpush2.msra.mxu0 0.0
        %1726 = vmatprep.subr.mxu0 0.0
        %1727 = vmatpush2.msra.mxu0 0.0
        %1728 = vmatprep.subr.mxu0 0.0
        %1729 = vmatpush2.msra.mxu0 0.0
        %1730 = vmatprep.subr.mxu0 0.0
        %1731 = vmatpush2.msra.mxu0 0.0
        %1732 = vmatprep.subr.mxu0 0.0
        %1733 = vmatpush2.msra.mxu0 0.0
        %1734 = vmatprep.subr.mxu0 0.0
        %1735 = vmatpush2.msra.mxu0 0.0
        %1736 = vmatprep.mubr.f32.mxu0 0.0
        %1737 = vmatmul.mubr.f32.gmra.mxu0 %v1661
        %v1738 = vpop.f32.mrf.mxu0
        %v1739 = vadd.f32 %v1638, %v1738
        %v1740 = vpop.f32.mrf.mxu0
        %v1741 = vadd.f32 %v1640, %v1740
        %1742 = vmatprep.mubr.f32.mxu0 0.0
        %1743 = vmatmul.mubr.f32.gmra.mxu0 %v1664
        %v1744 = vpop.f32.mrf.mxu0
        %v1745 = vadd.f32 %v1644, %v1744
        %v1746 = vpop.f32.mrf.mxu0
        %v1747 = vadd.f32 %v1646, %v1746
        %1748 = vmatprep.mubr.f32.mxu0 0.0
        %1749 = vmatmul.mubr.f32.gmra.mxu0 %v1667
        %v1750 = vpop.f32.mrf.mxu0
        %v1751 = vadd.f32 %v1650, %v1750
        %v1752 = vpop.f32.mrf.mxu0
        %v1753 = vadd.f32 %v1652, %v1752
        %1754 = vmatprep.mubr.f32.mxu0 0.0
        %1755 = vmatmul.mubr.f32.gmra.mxu0 %v1670
        %v1756 = vpop.f32.mrf.mxu0
        %v1757 = vadd.f32 %v1656, %v1756
        %v1758 = vpop.f32.mrf.mxu0
        %v1759 = vadd.f32 %v1658, %v1758
        %1760 = vdwg.mxu0
        %1761 = vrot.lane.b32.xlu0 %v1477, 15
        %v1762 = vpop.permute.xlu0 %1761
        %1763 = vrot.lane.b32.xlu0 %v1479, 15
        %v1764 = vpop.permute.xlu0 %1763
        %1765 = vrot.lane.b32.xlu0 %v1481, 15
        %v1766 = vpop.permute.xlu0 %1765
        %1767 = vrot.lane.b32.xlu0 %v1483, 15
        %v1768 = vpop.permute.xlu0 %1767
        %1769 = vrot.lane.b32.xlu0 %v1478, 15
        %v1770 = vpop.permute.xlu0 %1769
        %1771 = vrot.lane.b32.xlu0 %v1480, 15
        %v1772 = vpop.permute.xlu0 %1771
        %1773 = vrot.lane.b32.xlu0 %v1482, 15
        %v1774 = vpop.permute.xlu0 %1773
        %1775 = vrot.lane.b32.xlu0 %v1484, 15
        %v1776 = vpop.permute.xlu0 %1775
        %v1777 = vsel %vm557, %v1762, %v1770
        %v1778 = vsel %vm557, %v1764, %v1772
        %v1779 = vsel %vm557, %v1766, %v1774
        %v1780 = vsel %vm557, %v1768, %v1776
        %v1781 = vsel %vm557, %v1770, %v1762
        %v1782 = vsel %vm557, %v1772, %v1764
        %v1783 = vsel %vm557, %v1774, %v1766
        %v1784 = vsel %vm557, %v1776, %v1768
        %v1785 = vmul.f32 %v1781, %v300
        %v1786 = vmul.f32 %v1777, %v301
        %v1787 = vmul.f32 %v1782, %v300
        %v1788 = vmul.f32 %v1778, %v301
        %v1789 = vmul.f32 %v1783, %v300
        %v1790 = vmul.f32 %v1779, %v301
        %v1791 = vmul.f32 %v1784, %v300
        %v1792 = vmul.f32 %v1780, %v301
        %s1793 = scalar_lea.vmem %s3, 64
        %v1794 = vld [vmem:[%s1793] sm:$0xff]
        %v1795 = vld [vmem:[%s1793 + $0x8] sm:$0xff]
        %v1796 = vld [vmem:[%s1793 + $0x10] sm:$0xff]
        %v1797 = vld [vmem:[%s1793 + $0x18] sm:$0xff]
        %v1799 = vsel %vm1558, %v1794, 0
        %v1802 = vsel %vm1558, %v1795, 0
        %v1805 = vsel %vm1558, %v1796, 0
        %v1808 = vsel %vm1558, %v1797, 0
        %1810 = vmatprep.subr.mxu0 0.0
        %1811 = vmatpush1.msra.mxu0 0.0
        %1812 = vmatprep.subr.mxu0 0.0
        %1813 = vmatpush1.msra.mxu0 0.0
        %1814 = vmatprep.subr.mxu0 0.0
        %1815 = vmatpush1.msra.mxu0 0.0
        %1816 = vmatprep.subr.mxu0 0.0
        %1817 = vmatpush1.msra.mxu0 0.0
        %1818 = vmatprep.subr.mxu0 0.0
        %1819 = vmatpush1.msra.mxu0 0.0
        %1820 = vmatprep.subr.mxu0 0.0
        %1821 = vmatpush1.msra.mxu0 0.0
        %1822 = vmatprep.subr.mxu0 0.0
        %1823 = vmatpush1.msra.mxu0 0.0
        %1824 = vmatprep.subr.mxu0 0.0
        %1825 = vmatpush1.msra.mxu0 0.0
        %1826 = vmatprep.subr.mxu0 0.0
        %1827 = vmatpush1.msra.mxu0 0.0
        %1828 = vmatprep.subr.mxu0 0.0
        %1829 = vmatpush1.msra.mxu0 0.0
        %1830 = vmatprep.subr.mxu0 0.0
        %1831 = vmatpush1.msra.mxu0 0.0
        %1832 = vmatprep.subr.mxu0 0.0
        %1833 = vmatpush1.msra.mxu0 0.0
        %1834 = vmatprep.subr.mxu0 %v1792
        %1835 = vmatpush1.msra.mxu0 %v1791
        %1836 = vmatprep.subr.mxu0 %v1790
        %1837 = vmatpush1.msra.mxu0 %v1789
        %1838 = vmatprep.subr.mxu0 %v1788
        %1839 = vmatpush1.msra.mxu0 %v1787
        %1840 = vmatprep.subr.mxu0 %v1786
        %1841 = vmatpush1.msra.mxu0 %v1785
        %1842 = vmatprep.subr.mxu0 0.0
        %1843 = vmatpush2.msra.mxu0 0.0
        %1844 = vmatprep.subr.mxu0 0.0
        %1845 = vmatpush2.msra.mxu0 0.0
        %1846 = vmatprep.subr.mxu0 0.0
        %1847 = vmatpush2.msra.mxu0 0.0
        %1848 = vmatprep.subr.mxu0 0.0
        %1849 = vmatpush2.msra.mxu0 0.0
        %1850 = vmatprep.subr.mxu0 0.0
        %1851 = vmatpush2.msra.mxu0 0.0
        %1852 = vmatprep.subr.mxu0 0.0
        %1853 = vmatpush2.msra.mxu0 0.0
        %1854 = vmatprep.subr.mxu0 0.0
        %1855 = vmatpush2.msra.mxu0 0.0
        %1856 = vmatprep.subr.mxu0 0.0
        %1857 = vmatpush2.msra.mxu0 0.0
        %1858 = vmatprep.subr.mxu0 0.0
        %1859 = vmatpush2.msra.mxu0 0.0
        %1860 = vmatprep.subr.mxu0 0.0
        %1861 = vmatpush2.msra.mxu0 0.0
        %1862 = vmatprep.subr.mxu0 0.0
        %1863 = vmatpush2.msra.mxu0 0.0
        %1864 = vmatprep.subr.mxu0 0.0
        %1865 = vmatpush2.msra.mxu0 0.0
        %1866 = vmatprep.subr.mxu0 0.0
        %1867 = vmatpush2.msra.mxu0 0.0
        %1868 = vmatprep.subr.mxu0 0.0
        %1869 = vmatpush2.msra.mxu0 0.0
        %1870 = vmatprep.subr.mxu0 0.0
        %1871 = vmatpush2.msra.mxu0 0.0
        %1872 = vmatprep.subr.mxu0 0.0
        %1873 = vmatpush2.msra.mxu0 0.0
        %1874 = vmatprep.mubr.f32.mxu0 0.0
        %1875 = vmatmul.mubr.f32.gmra.mxu0 %v1799
        %v1876 = vpop.f32.mrf.mxu0
        %v1877 = vadd.f32 0.0, %v1876
        %v1878 = vpop.f32.mrf.mxu0
        %v1879 = vadd.f32 0.0, %v1878
        %1880 = vmatprep.mubr.f32.mxu0 0.0
        %1881 = vmatmul.mubr.f32.gmra.mxu0 %v1802
        %v1882 = vpop.f32.mrf.mxu0
        %v1883 = vadd.f32 0.0, %v1882
        %v1884 = vpop.f32.mrf.mxu0
        %v1885 = vadd.f32 0.0, %v1884
        %1886 = vmatprep.mubr.f32.mxu0 0.0
        %1887 = vmatmul.mubr.f32.gmra.mxu0 %v1805
        %v1888 = vpop.f32.mrf.mxu0
        %v1889 = vadd.f32 0.0, %v1888
        %v1890 = vpop.f32.mrf.mxu0
        %v1891 = vadd.f32 0.0, %v1890
        %1892 = vmatprep.mubr.f32.mxu0 0.0
        %1893 = vmatmul.mubr.f32.gmra.mxu0 %v1808
        %v1894 = vpop.f32.mrf.mxu0
        %v1895 = vadd.f32 0.0, %v1894
        %v1896 = vpop.f32.mrf.mxu0
        %v1897 = vadd.f32 0.0, %v1896
        %1898 = vdwg.mxu0
        %v1899 = vadd.f32 %v1739, %v1877
        %v1900 = vadd.f32 %v1741, %v1879
        %v1901 = vadd.f32 %v1745, %v1883
        %v1902 = vadd.f32 %v1747, %v1885
        %v1903 = vadd.f32 %v1751, %v1889
        %v1904 = vadd.f32 %v1753, %v1891
        %v1905 = vadd.f32 %v1757, %v1895
        %v1906 = vadd.f32 %v1759, %v1897
        %1907 = vrot.lane.b32.xlu0 %v1477, 1
        %v1908 = vpop.permute.xlu0 %1907
        %1909 = vrot.lane.b32.xlu0 %v1479, 1
        %v1910 = vpop.permute.xlu0 %1909
        %1911 = vrot.lane.b32.xlu0 %v1481, 1
        %v1912 = vpop.permute.xlu0 %1911
        %1913 = vrot.lane.b32.xlu0 %v1483, 1
        %v1914 = vpop.permute.xlu0 %1913
        %1915 = vrot.lane.b32.xlu0 %v1478, 1
        %v1916 = vpop.permute.xlu0 %1915
        %1917 = vrot.lane.b32.xlu0 %v1480, 1
        %v1918 = vpop.permute.xlu0 %1917
        %1919 = vrot.lane.b32.xlu0 %v1482, 1
        %v1920 = vpop.permute.xlu0 %1919
        %1921 = vrot.lane.b32.xlu0 %v1484, 1
        %v1922 = vpop.permute.xlu0 %1921
        %v1923 = vsel %vm686, %v1908, %v1916
        %v1924 = vsel %vm686, %v1910, %v1918
        %v1925 = vsel %vm686, %v1912, %v1920
        %v1926 = vsel %vm686, %v1914, %v1922
        %v1927 = vsel %vm686, %v1916, %v1908
        %v1928 = vsel %vm686, %v1918, %v1910
        %v1929 = vsel %vm686, %v1920, %v1912
        %v1930 = vsel %vm686, %v1922, %v1914
        %v1931 = vmul.f32 %v1927, %v292
        %v1932 = vmul.f32 %v1923, %v293
        %v1933 = vmul.f32 %v1928, %v292
        %v1934 = vmul.f32 %v1924, %v293
        %v1935 = vmul.f32 %v1929, %v292
        %v1936 = vmul.f32 %v1925, %v293
        %v1937 = vmul.f32 %v1930, %v292
        %v1938 = vmul.f32 %v1926, %v293
        %s1939 = scalar_lea.vmem %s3, 96
        %v1940 = vld [vmem:[%s1939] sm:$0xff]
        %v1941 = vld [vmem:[%s1939 + $0x8] sm:$0xff]
        %v1942 = vld [vmem:[%s1939 + $0x10] sm:$0xff]
        %v1943 = vld [vmem:[%s1939 + $0x18] sm:$0xff]
        %v1945 = vsel %vm1558, %v1940, 0
        %v1948 = vsel %vm1558, %v1941, 0
        %v1951 = vsel %vm1558, %v1942, 0
        %v1954 = vsel %vm1558, %v1943, 0
        %1956 = vmatprep.subr.mxu0 0.0
        %1957 = vmatpush1.msra.mxu0 0.0
        %1958 = vmatprep.subr.mxu0 0.0
        %1959 = vmatpush1.msra.mxu0 0.0
        %1960 = vmatprep.subr.mxu0 0.0
        %1961 = vmatpush1.msra.mxu0 0.0
        %1962 = vmatprep.subr.mxu0 0.0
        %1963 = vmatpush1.msra.mxu0 0.0
        %1964 = vmatprep.subr.mxu0 0.0
        %1965 = vmatpush1.msra.mxu0 0.0
        %1966 = vmatprep.subr.mxu0 0.0
        %1967 = vmatpush1.msra.mxu0 0.0
        %1968 = vmatprep.subr.mxu0 0.0
        %1969 = vmatpush1.msra.mxu0 0.0
        %1970 = vmatprep.subr.mxu0 0.0
        %1971 = vmatpush1.msra.mxu0 0.0
        %1972 = vmatprep.subr.mxu0 0.0
        %1973 = vmatpush1.msra.mxu0 0.0
        %1974 = vmatprep.subr.mxu0 0.0
        %1975 = vmatpush1.msra.mxu0 0.0
        %1976 = vmatprep.subr.mxu0 0.0
        %1977 = vmatpush1.msra.mxu0 0.0
        %1978 = vmatprep.subr.mxu0 0.0
        %1979 = vmatpush1.msra.mxu0 0.0
        %1980 = vmatprep.subr.mxu0 %v1938
        %1981 = vmatpush1.msra.mxu0 %v1937
        %1982 = vmatprep.subr.mxu0 %v1936
        %1983 = vmatpush1.msra.mxu0 %v1935
        %1984 = vmatprep.subr.mxu0 %v1934
        %1985 = vmatpush1.msra.mxu0 %v1933
        %1986 = vmatprep.subr.mxu0 %v1932
        %1987 = vmatpush1.msra.mxu0 %v1931
        %1988 = vmatprep.subr.mxu0 0.0
        %1989 = vmatpush2.msra.mxu0 0.0
        %1990 = vmatprep.subr.mxu0 0.0
        %1991 = vmatpush2.msra.mxu0 0.0
        %1992 = vmatprep.subr.mxu0 0.0
        %1993 = vmatpush2.msra.mxu0 0.0
        %1994 = vmatprep.subr.mxu0 0.0
        %1995 = vmatpush2.msra.mxu0 0.0
        %1996 = vmatprep.subr.mxu0 0.0
        %1997 = vmatpush2.msra.mxu0 0.0
        %1998 = vmatprep.subr.mxu0 0.0
        %1999 = vmatpush2.msra.mxu0 0.0
        %2000 = vmatprep.subr.mxu0 0.0
        %2001 = vmatpush2.msra.mxu0 0.0
        %2002 = vmatprep.subr.mxu0 0.0
        %2003 = vmatpush2.msra.mxu0 0.0
        %2004 = vmatprep.subr.mxu0 0.0
        %2005 = vmatpush2.msra.mxu0 0.0
        %2006 = vmatprep.subr.mxu0 0.0
        %2007 = vmatpush2.msra.mxu0 0.0
        %2008 = vmatprep.subr.mxu0 0.0
        %2009 = vmatpush2.msra.mxu0 0.0
        %2010 = vmatprep.subr.mxu0 0.0
        %2011 = vmatpush2.msra.mxu0 0.0
        %2012 = vmatprep.subr.mxu0 0.0
        %2013 = vmatpush2.msra.mxu0 0.0
        %2014 = vmatprep.subr.mxu0 0.0
        %2015 = vmatpush2.msra.mxu0 0.0
        %2016 = vmatprep.subr.mxu0 0.0
        %2017 = vmatpush2.msra.mxu0 0.0
        %2018 = vmatprep.subr.mxu0 0.0
        %2019 = vmatpush2.msra.mxu0 0.0
        %2020 = vmatprep.mubr.f32.mxu0 0.0
        %2021 = vmatmul.mubr.f32.gmra.mxu0 %v1945
        %v2022 = vpop.f32.mrf.mxu0
        %v2023 = vadd.f32 0.0, %v2022
        %v2024 = vpop.f32.mrf.mxu0
        %v2025 = vadd.f32 0.0, %v2024
        %2026 = vmatprep.mubr.f32.mxu0 0.0
        %2027 = vmatmul.mubr.f32.gmra.mxu0 %v1948
        %v2028 = vpop.f32.mrf.mxu0
        %v2029 = vadd.f32 0.0, %v2028
        %v2030 = vpop.f32.mrf.mxu0
        %v2031 = vadd.f32 0.0, %v2030
        %2032 = vmatprep.mubr.f32.mxu0 0.0
        %2033 = vmatmul.mubr.f32.gmra.mxu0 %v1951
        %v2034 = vpop.f32.mrf.mxu0
        %v2035 = vadd.f32 0.0, %v2034
        %v2036 = vpop.f32.mrf.mxu0
        %v2037 = vadd.f32 0.0, %v2036
        %2038 = vmatprep.mubr.f32.mxu0 0.0
        %2039 = vmatmul.mubr.f32.gmra.mxu0 %v1954
        %v2040 = vpop.f32.mrf.mxu0
        %v2041 = vadd.f32 0.0, %v2040
        %v2042 = vpop.f32.mrf.mxu0
        %v2043 = vadd.f32 0.0, %v2042
        %2044 = vdwg.mxu0
        %v2045 = vadd.f32 %v1899, %v2023
        %v2046 = vadd.f32 %v1900, %v2025
        %v2047 = vadd.f32 %v1901, %v2029
        %v2048 = vadd.f32 %v1902, %v2031
        %v2049 = vadd.f32 %v1903, %v2035
        %v2050 = vadd.f32 %v1904, %v2037
        %v2051 = vadd.f32 %v1905, %v2041
        %v2052 = vadd.f32 %v1906, %v2043
        %s2053 = scalar_lea.vmem %s3, 128
        %v2054 = vld [vmem:[%s2053] sm:$0xff]
        %v2055 = vld [vmem:[%s2053 + $0x8] sm:$0xff]
        %v2056 = vld [vmem:[%s2053 + $0x10] sm:$0xff]
        %v2057 = vld [vmem:[%s2053 + $0x18] sm:$0xff]
        %v2059 = vsel %vm1558, %v2054, 0
        %v2062 = vsel %vm1558, %v2055, 0
        %v2065 = vsel %vm1558, %v2056, 0
        %v2068 = vsel %vm1558, %v2057, 0
        %2070 = vmatprep.subr.mxu0 0.0
        %2071 = vmatpush1.msra.mxu0 0.0
        %2072 = vmatprep.subr.mxu0 0.0
        %2073 = vmatpush1.msra.mxu0 0.0
        %2074 = vmatprep.subr.mxu0 0.0
        %2075 = vmatpush1.msra.mxu0 0.0
        %2076 = vmatprep.subr.mxu0 0.0
        %2077 = vmatpush1.msra.mxu0 0.0
        %2078 = vmatprep.subr.mxu0 0.0
        %2079 = vmatpush1.msra.mxu0 0.0
        %2080 = vmatprep.subr.mxu0 0.0
        %2081 = vmatpush1.msra.mxu0 0.0
        %2082 = vmatprep.subr.mxu0 0.0
        %2083 = vmatpush1.msra.mxu0 0.0
        %2084 = vmatprep.subr.mxu0 0.0
        %2085 = vmatpush1.msra.mxu0 0.0
        %2086 = vmatprep.subr.mxu0 0.0
        %2087 = vmatpush1.msra.mxu0 0.0
        %2088 = vmatprep.subr.mxu0 0.0
        %2089 = vmatpush1.msra.mxu0 0.0
        %2090 = vmatprep.subr.mxu0 0.0
        %2091 = vmatpush1.msra.mxu0 0.0
        %2092 = vmatprep.subr.mxu0 0.0
        %2093 = vmatpush1.msra.mxu0 0.0
        %2094 = vmatprep.subr.mxu0 %v1484
        %2095 = vmatpush1.msra.mxu0 %v1483
        %2096 = vmatprep.subr.mxu0 %v1482
        %2097 = vmatpush1.msra.mxu0 %v1481
        %2098 = vmatprep.subr.mxu0 %v1480
        %2099 = vmatpush1.msra.mxu0 %v1479
        %2100 = vmatprep.subr.mxu0 %v1478
        %2101 = vmatpush1.msra.mxu0 %v1477
        %2102 = vmatprep.subr.mxu0 0.0
        %2103 = vmatpush2.msra.mxu0 0.0
        %2104 = vmatprep.subr.mxu0 0.0
        %2105 = vmatpush2.msra.mxu0 0.0
        %2106 = vmatprep.subr.mxu0 0.0
        %2107 = vmatpush2.msra.mxu0 0.0
        %2108 = vmatprep.subr.mxu0 0.0
        %2109 = vmatpush2.msra.mxu0 0.0
        %2110 = vmatprep.subr.mxu0 0.0
        %2111 = vmatpush2.msra.mxu0 0.0
        %2112 = vmatprep.subr.mxu0 0.0
        %2113 = vmatpush2.msra.mxu0 0.0
        %2114 = vmatprep.subr.mxu0 0.0
        %2115 = vmatpush2.msra.mxu0 0.0
        %2116 = vmatprep.subr.mxu0 0.0
        %2117 = vmatpush2.msra.mxu0 0.0
        %2118 = vmatprep.subr.mxu0 0.0
        %2119 = vmatpush2.msra.mxu0 0.0
        %2120 = vmatprep.subr.mxu0 0.0
        %2121 = vmatpush2.msra.mxu0 0.0
        %2122 = vmatprep.subr.mxu0 0.0
        %2123 = vmatpush2.msra.mxu0 0.0
        %2124 = vmatprep.subr.mxu0 0.0
        %2125 = vmatpush2.msra.mxu0 0.0
        %2126 = vmatprep.subr.mxu0 0.0
        %2127 = vmatpush2.msra.mxu0 0.0
        %2128 = vmatprep.subr.mxu0 0.0
        %2129 = vmatpush2.msra.mxu0 0.0
        %2130 = vmatprep.subr.mxu0 0.0
        %2131 = vmatpush2.msra.mxu0 0.0
        %2132 = vmatprep.subr.mxu0 0.0
        %2133 = vmatpush2.msra.mxu0 0.0
        %2134 = vmatprep.mubr.f32.mxu0 0.0
        %2135 = vmatmul.mubr.f32.gmra.mxu0 %v2059
        %v2136 = vpop.f32.mrf.mxu0
        %v2137 = vadd.f32 0.0, %v2136
        %v2138 = vpop.f32.mrf.mxu0
        %v2139 = vadd.f32 0.0, %v2138
        %2140 = vmatprep.mubr.f32.mxu0 0.0
        %2141 = vmatmul.mubr.f32.gmra.mxu0 %v2062
        %v2142 = vpop.f32.mrf.mxu0
        %v2143 = vadd.f32 0.0, %v2142
        %v2144 = vpop.f32.mrf.mxu0
        %v2145 = vadd.f32 0.0, %v2144
        %2146 = vmatprep.mubr.f32.mxu0 0.0
        %2147 = vmatmul.mubr.f32.gmra.mxu0 %v2065
        %v2148 = vpop.f32.mrf.mxu0
        %v2149 = vadd.f32 0.0, %v2148
        %v2150 = vpop.f32.mrf.mxu0
        %v2151 = vadd.f32 0.0, %v2150
        %2152 = vmatprep.mubr.f32.mxu0 0.0
        %2153 = vmatmul.mubr.f32.gmra.mxu0 %v2068
        %v2154 = vpop.f32.mrf.mxu0
        %v2155 = vadd.f32 0.0, %v2154
        %v2156 = vpop.f32.mrf.mxu0
        %v2157 = vadd.f32 0.0, %v2156
        %2158 = vdwg.mxu0
        %v2159 = vadd.f32 %v2045, %v2137
        %v2160 = vadd.f32 %v2046, %v2139
        %v2161 = vadd.f32 %v2047, %v2143
        %v2162 = vadd.f32 %v2048, %v2145
        %v2163 = vadd.f32 %v2049, %v2149
        %v2164 = vadd.f32 %v2050, %v2151
        %v2165 = vadd.f32 %v2051, %v2155
        %v2166 = vadd.f32 %v2052, %v2157
        %2167 = vrot.lane.b32.xlu0 %v1477, 127
        %v2168 = vpop.permute.xlu0 %2167
        %2169 = vrot.lane.b32.xlu0 %v1479, 127
        %v2170 = vpop.permute.xlu0 %2169
        %2171 = vrot.lane.b32.xlu0 %v1481, 127
        %v2172 = vpop.permute.xlu0 %2171
        %2173 = vrot.lane.b32.xlu0 %v1483, 127
        %v2174 = vpop.permute.xlu0 %2173
        %2175 = vrot.lane.b32.xlu0 %v1478, 127
        %v2176 = vpop.permute.xlu0 %2175
        %2177 = vrot.lane.b32.xlu0 %v1480, 127
        %v2178 = vpop.permute.xlu0 %2177
        %2179 = vrot.lane.b32.xlu0 %v1482, 127
        %v2180 = vpop.permute.xlu0 %2179
        %2181 = vrot.lane.b32.xlu0 %v1484, 127
        %v2182 = vpop.permute.xlu0 %2181
        %v2183 = vsel %vm933, %v2168, %v2176
        %v2184 = vsel %vm933, %v2170, %v2178
        %v2185 = vsel %vm933, %v2172, %v2180
        %v2186 = vsel %vm933, %v2174, %v2182
        %v2187 = vsel %vm933, %v2176, %v2168
        %v2188 = vsel %vm933, %v2178, %v2170
        %v2189 = vsel %vm933, %v2180, %v2172
        %v2190 = vsel %vm933, %v2182, %v2174
        %v2191 = vmul.f32 %v2183, %v296
        %v2192 = vmul.f32 %v2187, %v297
        %v2193 = vmul.f32 %v2184, %v296
        %v2194 = vmul.f32 %v2188, %v297
        %v2195 = vmul.f32 %v2185, %v296
        %v2196 = vmul.f32 %v2189, %v297
        %v2197 = vmul.f32 %v2186, %v296
        %v2198 = vmul.f32 %v2190, %v297
        %s2199 = scalar_lea.vmem %s3, 160
        %v2200 = vld [vmem:[%s2199] sm:$0xff]
        %v2201 = vld [vmem:[%s2199 + $0x8] sm:$0xff]
        %v2202 = vld [vmem:[%s2199 + $0x10] sm:$0xff]
        %v2203 = vld [vmem:[%s2199 + $0x18] sm:$0xff]
        %v2205 = vsel %vm1558, %v2200, 0
        %v2208 = vsel %vm1558, %v2201, 0
        %v2211 = vsel %vm1558, %v2202, 0
        %v2214 = vsel %vm1558, %v2203, 0
        %2216 = vmatprep.subr.mxu0 0.0
        %2217 = vmatpush1.msra.mxu0 0.0
        %2218 = vmatprep.subr.mxu0 0.0
        %2219 = vmatpush1.msra.mxu0 0.0
        %2220 = vmatprep.subr.mxu0 0.0
        %2221 = vmatpush1.msra.mxu0 0.0
        %2222 = vmatprep.subr.mxu0 0.0
        %2223 = vmatpush1.msra.mxu0 0.0
        %2224 = vmatprep.subr.mxu0 0.0
        %2225 = vmatpush1.msra.mxu0 0.0
        %2226 = vmatprep.subr.mxu0 0.0
        %2227 = vmatpush1.msra.mxu0 0.0
        %2228 = vmatprep.subr.mxu0 0.0
        %2229 = vmatpush1.msra.mxu0 0.0
        %2230 = vmatprep.subr.mxu0 0.0
        %2231 = vmatpush1.msra.mxu0 0.0
        %2232 = vmatprep.subr.mxu0 0.0
        %2233 = vmatpush1.msra.mxu0 0.0
        %2234 = vmatprep.subr.mxu0 0.0
        %2235 = vmatpush1.msra.mxu0 0.0
        %2236 = vmatprep.subr.mxu0 0.0
        %2237 = vmatpush1.msra.mxu0 0.0
        %2238 = vmatprep.subr.mxu0 0.0
        %2239 = vmatpush1.msra.mxu0 0.0
        %2240 = vmatprep.subr.mxu0 %v2198
        %2241 = vmatpush1.msra.mxu0 %v2197
        %2242 = vmatprep.subr.mxu0 %v2196
        %2243 = vmatpush1.msra.mxu0 %v2195
        %2244 = vmatprep.subr.mxu0 %v2194
        %2245 = vmatpush1.msra.mxu0 %v2193
        %2246 = vmatprep.subr.mxu0 %v2192
        %2247 = vmatpush1.msra.mxu0 %v2191
        %2248 = vmatprep.subr.mxu0 0.0
        %2249 = vmatpush2.msra.mxu0 0.0
        %2250 = vmatprep.subr.mxu0 0.0
        %2251 = vmatpush2.msra.mxu0 0.0
        %2252 = vmatprep.subr.mxu0 0.0
        %2253 = vmatpush2.msra.mxu0 0.0
        %2254 = vmatprep.subr.mxu0 0.0
        %2255 = vmatpush2.msra.mxu0 0.0
        %2256 = vmatprep.subr.mxu0 0.0
        %2257 = vmatpush2.msra.mxu0 0.0
        %2258 = vmatprep.subr.mxu0 0.0
        %2259 = vmatpush2.msra.mxu0 0.0
        %2260 = vmatprep.subr.mxu0 0.0
        %2261 = vmatpush2.msra.mxu0 0.0
        %2262 = vmatprep.subr.mxu0 0.0
        %2263 = vmatpush2.msra.mxu0 0.0
        %2264 = vmatprep.subr.mxu0 0.0
        %2265 = vmatpush2.msra.mxu0 0.0
        %2266 = vmatprep.subr.mxu0 0.0
        %2267 = vmatpush2.msra.mxu0 0.0
        %2268 = vmatprep.subr.mxu0 0.0
        %2269 = vmatpush2.msra.mxu0 0.0
        %2270 = vmatprep.subr.mxu0 0.0
        %2271 = vmatpush2.msra.mxu0 0.0
        %2272 = vmatprep.subr.mxu0 0.0
        %2273 = vmatpush2.msra.mxu0 0.0
        %2274 = vmatprep.subr.mxu0 0.0
        %2275 = vmatpush2.msra.mxu0 0.0
        %2276 = vmatprep.subr.mxu0 0.0
        %2277 = vmatpush2.msra.mxu0 0.0
        %2278 = vmatprep.subr.mxu0 0.0
        %2279 = vmatpush2.msra.mxu0 0.0
        %2280 = vmatprep.mubr.f32.mxu0 0.0
        %2281 = vmatmul.mubr.f32.gmra.mxu0 %v2205
        %v2282 = vpop.f32.mrf.mxu0
        %v2283 = vadd.f32 0.0, %v2282
        %v2284 = vpop.f32.mrf.mxu0
        %v2285 = vadd.f32 0.0, %v2284
        %2286 = vmatprep.mubr.f32.mxu0 0.0
        %2287 = vmatmul.mubr.f32.gmra.mxu0 %v2208
        %v2288 = vpop.f32.mrf.mxu0
        %v2289 = vadd.f32 0.0, %v2288
        %v2290 = vpop.f32.mrf.mxu0
        %v2291 = vadd.f32 0.0, %v2290
        %2292 = vmatprep.mubr.f32.mxu0 0.0
        %2293 = vmatmul.mubr.f32.gmra.mxu0 %v2211
        %v2294 = vpop.f32.mrf.mxu0
        %v2295 = vadd.f32 0.0, %v2294
        %v2296 = vpop.f32.mrf.mxu0
        %v2297 = vadd.f32 0.0, %v2296
        %2298 = vmatprep.mubr.f32.mxu0 0.0
        %2299 = vmatmul.mubr.f32.gmra.mxu0 %v2214
        %v2300 = vpop.f32.mrf.mxu0
        %v2301 = vadd.f32 0.0, %v2300
        %v2302 = vpop.f32.mrf.mxu0
        %v2303 = vadd.f32 0.0, %v2302
        %2304 = vdwg.mxu0
        %v2305 = vadd.f32 %v2159, %v2283
        %v2306 = vadd.f32 %v2160, %v2285
        %v2307 = vadd.f32 %v2161, %v2289
        %v2308 = vadd.f32 %v2162, %v2291
        %v2309 = vadd.f32 %v2163, %v2295
        %v2310 = vadd.f32 %v2164, %v2297
        %v2311 = vadd.f32 %v2165, %v2301
        %v2312 = vadd.f32 %v2166, %v2303
        %2313 = vrot.lane.b32.xlu0 %v1477, 113
        %v2314 = vpop.permute.xlu0 %2313
        %2315 = vrot.lane.b32.xlu0 %v1479, 113
        %v2316 = vpop.permute.xlu0 %2315
        %2317 = vrot.lane.b32.xlu0 %v1481, 113
        %v2318 = vpop.permute.xlu0 %2317
        %2319 = vrot.lane.b32.xlu0 %v1483, 113
        %v2320 = vpop.permute.xlu0 %2319
        %2321 = vrot.lane.b32.xlu0 %v1478, 113
        %v2322 = vpop.permute.xlu0 %2321
        %2323 = vrot.lane.b32.xlu0 %v1480, 113
        %v2324 = vpop.permute.xlu0 %2323
        %2325 = vrot.lane.b32.xlu0 %v1482, 113
        %v2326 = vpop.permute.xlu0 %2325
        %2327 = vrot.lane.b32.xlu0 %v1484, 113
        %v2328 = vpop.permute.xlu0 %2327
        %v2329 = vsel %vm1062, %v2314, %v2322
        %v2330 = vsel %vm1062, %v2316, %v2324
        %v2331 = vsel %vm1062, %v2318, %v2326
        %v2332 = vsel %vm1062, %v2320, %v2328
        %v2333 = vsel %vm1062, %v2322, %v2314
        %v2334 = vsel %vm1062, %v2324, %v2316
        %v2335 = vsel %vm1062, %v2326, %v2318
        %v2336 = vsel %vm1062, %v2328, %v2320
        %v2337 = vmul.f32 %v2329, %v302
        %v2338 = vmul.f32 %v2333, %v303
        %v2339 = vmul.f32 %v2330, %v302
        %v2340 = vmul.f32 %v2334, %v303
        %v2341 = vmul.f32 %v2331, %v302
        %v2342 = vmul.f32 %v2335, %v303
        %v2343 = vmul.f32 %v2332, %v302
        %v2344 = vmul.f32 %v2336, %v303
        %s2345 = scalar_lea.vmem %s3, 192
        %v2346 = vld [vmem:[%s2345] sm:$0xff]
        %v2347 = vld [vmem:[%s2345 + $0x8] sm:$0xff]
        %v2348 = vld [vmem:[%s2345 + $0x10] sm:$0xff]
        %v2349 = vld [vmem:[%s2345 + $0x18] sm:$0xff]
        %v2351 = vsel %vm1558, %v2346, 0
        %v2354 = vsel %vm1558, %v2347, 0
        %v2357 = vsel %vm1558, %v2348, 0
        %v2360 = vsel %vm1558, %v2349, 0
        %2362 = vmatprep.subr.mxu0 0.0
        %2363 = vmatpush1.msra.mxu0 0.0
        %2364 = vmatprep.subr.mxu0 0.0
        %2365 = vmatpush1.msra.mxu0 0.0
        %2366 = vmatprep.subr.mxu0 0.0
        %2367 = vmatpush1.msra.mxu0 0.0
        %2368 = vmatprep.subr.mxu0 0.0
        %2369 = vmatpush1.msra.mxu0 0.0
        %2370 = vmatprep.subr.mxu0 0.0
        %2371 = vmatpush1.msra.mxu0 0.0
        %2372 = vmatprep.subr.mxu0 0.0
        %2373 = vmatpush1.msra.mxu0 0.0
        %2374 = vmatprep.subr.mxu0 0.0
        %2375 = vmatpush1.msra.mxu0 0.0
        %2376 = vmatprep.subr.mxu0 0.0
        %2377 = vmatpush1.msra.mxu0 0.0
        %2378 = vmatprep.subr.mxu0 0.0
        %2379 = vmatpush1.msra.mxu0 0.0
        %2380 = vmatprep.subr.mxu0 0.0
        %2381 = vmatpush1.msra.mxu0 0.0
        %2382 = vmatprep.subr.mxu0 0.0
        %2383 = vmatpush1.msra.mxu0 0.0
        %2384 = vmatprep.subr.mxu0 0.0
        %2385 = vmatpush1.msra.mxu0 0.0
        %2386 = vmatprep.subr.mxu0 %v2344
        %2387 = vmatpush1.msra.mxu0 %v2343
        %2388 = vmatprep.subr.mxu0 %v2342
        %2389 = vmatpush1.msra.mxu0 %v2341
        %2390 = vmatprep.subr.mxu0 %v2340
        %2391 = vmatpush1.msra.mxu0 %v2339
        %2392 = vmatprep.subr.mxu0 %v2338
        %2393 = vmatpush1.msra.mxu0 %v2337
        %2394 = vmatprep.subr.mxu0 0.0
        %2395 = vmatpush2.msra.mxu0 0.0
        %2396 = vmatprep.subr.mxu0 0.0
        %2397 = vmatpush2.msra.mxu0 0.0
        %2398 = vmatprep.subr.mxu0 0.0
        %2399 = vmatpush2.msra.mxu0 0.0
        %2400 = vmatprep.subr.mxu0 0.0
        %2401 = vmatpush2.msra.mxu0 0.0
        %2402 = vmatprep.subr.mxu0 0.0
        %2403 = vmatpush2.msra.mxu0 0.0
        %2404 = vmatprep.subr.mxu0 0.0
        %2405 = vmatpush2.msra.mxu0 0.0
        %2406 = vmatprep.subr.mxu0 0.0
        %2407 = vmatpush2.msra.mxu0 0.0
        %2408 = vmatprep.subr.mxu0 0.0
        %2409 = vmatpush2.msra.mxu0 0.0
        %2410 = vmatprep.subr.mxu0 0.0
        %2411 = vmatpush2.msra.mxu0 0.0
        %2412 = vmatprep.subr.mxu0 0.0
        %2413 = vmatpush2.msra.mxu0 0.0
        %2414 = vmatprep.subr.mxu0 0.0
        %2415 = vmatpush2.msra.mxu0 0.0
        %2416 = vmatprep.subr.mxu0 0.0
        %2417 = vmatpush2.msra.mxu0 0.0
        %2418 = vmatprep.subr.mxu0 0.0
        %2419 = vmatpush2.msra.mxu0 0.0
        %2420 = vmatprep.subr.mxu0 0.0
        %2421 = vmatpush2.msra.mxu0 0.0
        %2422 = vmatprep.subr.mxu0 0.0
        %2423 = vmatpush2.msra.mxu0 0.0
        %2424 = vmatprep.subr.mxu0 0.0
        %2425 = vmatpush2.msra.mxu0 0.0
        %2426 = vmatprep.mubr.f32.mxu0 0.0
        %2427 = vmatmul.mubr.f32.gmra.mxu0 %v2351
        %v2428 = vpop.f32.mrf.mxu0
        %v2429 = vadd.f32 0.0, %v2428
        %v2430 = vpop.f32.mrf.mxu0
        %v2431 = vadd.f32 0.0, %v2430
        %2432 = vmatprep.mubr.f32.mxu0 0.0
        %2433 = vmatmul.mubr.f32.gmra.mxu0 %v2354
        %v2434 = vpop.f32.mrf.mxu0
        %v2435 = vadd.f32 0.0, %v2434
        %v2436 = vpop.f32.mrf.mxu0
        %v2437 = vadd.f32 0.0, %v2436
        %2438 = vmatprep.mubr.f32.mxu0 0.0
        %2439 = vmatmul.mubr.f32.gmra.mxu0 %v2357
        %v2440 = vpop.f32.mrf.mxu0
        %v2441 = vadd.f32 0.0, %v2440
        %v2442 = vpop.f32.mrf.mxu0
        %v2443 = vadd.f32 0.0, %v2442
        %2444 = vmatprep.mubr.f32.mxu0 0.0
        %2445 = vmatmul.mubr.f32.gmra.mxu0 %v2360
        %v2446 = vpop.f32.mrf.mxu0
        %v2447 = vadd.f32 0.0, %v2446
        %v2448 = vpop.f32.mrf.mxu0
        %v2449 = vadd.f32 0.0, %v2448
        %2450 = vdwg.mxu0
        %v2451 = vadd.f32 %v2305, %v2429
        %v2452 = vadd.f32 %v2306, %v2431
        %v2453 = vadd.f32 %v2307, %v2435
        %v2454 = vadd.f32 %v2308, %v2437
        %v2455 = vadd.f32 %v2309, %v2441
        %v2456 = vadd.f32 %v2310, %v2443
        %v2457 = vadd.f32 %v2311, %v2447
        %v2458 = vadd.f32 %v2312, %v2449
        %2459 = vrot.lane.b32.xlu0 %v1477, 112
        %v2460 = vpop.permute.xlu0 %2459
        %2461 = vrot.lane.b32.xlu0 %v1479, 112
        %v2462 = vpop.permute.xlu0 %2461
        %2463 = vrot.lane.b32.xlu0 %v1481, 112
        %v2464 = vpop.permute.xlu0 %2463
        %2465 = vrot.lane.b32.xlu0 %v1483, 112
        %v2466 = vpop.permute.xlu0 %2465
        %2467 = vrot.lane.b32.xlu0 %v1478, 112
        %v2468 = vpop.permute.xlu0 %2467
        %2469 = vrot.lane.b32.xlu0 %v1480, 112
        %v2470 = vpop.permute.xlu0 %2469
        %2471 = vrot.lane.b32.xlu0 %v1482, 112
        %v2472 = vpop.permute.xlu0 %2471
        %2473 = vrot.lane.b32.xlu0 %v1484, 112
        %v2474 = vpop.permute.xlu0 %2473
        %v2475 = vsel %vm1191, %v2460, %v2468
        %v2476 = vsel %vm1191, %v2462, %v2470
        %v2477 = vsel %vm1191, %v2464, %v2472
        %v2478 = vsel %vm1191, %v2466, %v2474
        %v2479 = vsel %vm1191, %v2468, %v2460
        %v2480 = vsel %vm1191, %v2470, %v2462
        %v2481 = vsel %vm1191, %v2472, %v2464
        %v2482 = vsel %vm1191, %v2474, %v2466
        %v2483 = vmul.f32 %v2475, %v288
        %v2484 = vmul.f32 %v2479, %v289
        %v2485 = vmul.f32 %v2476, %v288
        %v2486 = vmul.f32 %v2480, %v289
        %v2487 = vmul.f32 %v2477, %v288
        %v2488 = vmul.f32 %v2481, %v289
        %v2489 = vmul.f32 %v2478, %v288
        %v2490 = vmul.f32 %v2482, %v289
        %s2491 = scalar_lea.vmem %s3, 224
        %v2492 = vld [vmem:[%s2491] sm:$0xff]
        %v2493 = vld [vmem:[%s2491 + $0x8] sm:$0xff]
        %v2494 = vld [vmem:[%s2491 + $0x10] sm:$0xff]
        %v2495 = vld [vmem:[%s2491 + $0x18] sm:$0xff]
        %v2497 = vsel %vm1558, %v2492, 0
        %v2500 = vsel %vm1558, %v2493, 0
        %v2503 = vsel %vm1558, %v2494, 0
        %v2506 = vsel %vm1558, %v2495, 0
        %2508 = vmatprep.subr.mxu0 0.0
        %2509 = vmatpush1.msra.mxu0 0.0
        %2510 = vmatprep.subr.mxu0 0.0
        %2511 = vmatpush1.msra.mxu0 0.0
        %2512 = vmatprep.subr.mxu0 0.0
        %2513 = vmatpush1.msra.mxu0 0.0
        %2514 = vmatprep.subr.mxu0 0.0
        %2515 = vmatpush1.msra.mxu0 0.0
        %2516 = vmatprep.subr.mxu0 0.0
        %2517 = vmatpush1.msra.mxu0 0.0
        %2518 = vmatprep.subr.mxu0 0.0
        %2519 = vmatpush1.msra.mxu0 0.0
        %2520 = vmatprep.subr.mxu0 0.0
        %2521 = vmatpush1.msra.mxu0 0.0
        %2522 = vmatprep.subr.mxu0 0.0
        %2523 = vmatpush1.msra.mxu0 0.0
        %2524 = vmatprep.subr.mxu0 0.0
        %2525 = vmatpush1.msra.mxu0 0.0
        %2526 = vmatprep.subr.mxu0 0.0
        %2527 = vmatpush1.msra.mxu0 0.0
        %2528 = vmatprep.subr.mxu0 0.0
        %2529 = vmatpush1.msra.mxu0 0.0
        %2530 = vmatprep.subr.mxu0 0.0
        %2531 = vmatpush1.msra.mxu0 0.0
        %2532 = vmatprep.subr.mxu0 %v2490
        %2533 = vmatpush1.msra.mxu0 %v2489
        %2534 = vmatprep.subr.mxu0 %v2488
        %2535 = vmatpush1.msra.mxu0 %v2487
        %2536 = vmatprep.subr.mxu0 %v2486
        %2537 = vmatpush1.msra.mxu0 %v2485
        %2538 = vmatprep.subr.mxu0 %v2484
        %2539 = vmatpush1.msra.mxu0 %v2483
        %2540 = vmatprep.subr.mxu0 0.0
        %2541 = vmatpush2.msra.mxu0 0.0
        %2542 = vmatprep.subr.mxu0 0.0
        %2543 = vmatpush2.msra.mxu0 0.0
        %2544 = vmatprep.subr.mxu0 0.0
        %2545 = vmatpush2.msra.mxu0 0.0
        %2546 = vmatprep.subr.mxu0 0.0
        %2547 = vmatpush2.msra.mxu0 0.0
        %2548 = vmatprep.subr.mxu0 0.0
        %2549 = vmatpush2.msra.mxu0 0.0
        %2550 = vmatprep.subr.mxu0 0.0
        %2551 = vmatpush2.msra.mxu0 0.0
        %2552 = vmatprep.subr.mxu0 0.0
        %2553 = vmatpush2.msra.mxu0 0.0
        %2554 = vmatprep.subr.mxu0 0.0
        %2555 = vmatpush2.msra.mxu0 0.0
        %2556 = vmatprep.subr.mxu0 0.0
        %2557 = vmatpush2.msra.mxu0 0.0
        %2558 = vmatprep.subr.mxu0 0.0
        %2559 = vmatpush2.msra.mxu0 0.0
        %2560 = vmatprep.subr.mxu0 0.0
        %2561 = vmatpush2.msra.mxu0 0.0
        %2562 = vmatprep.subr.mxu0 0.0
        %2563 = vmatpush2.msra.mxu0 0.0
        %2564 = vmatprep.subr.mxu0 0.0
        %2565 = vmatpush2.msra.mxu0 0.0
        %2566 = vmatprep.subr.mxu0 0.0
        %2567 = vmatpush2.msra.mxu0 0.0
        %2568 = vmatprep.subr.mxu0 0.0
        %2569 = vmatpush2.msra.mxu0 0.0
        %2570 = vmatprep.subr.mxu0 0.0
        %2571 = vmatpush2.msra.mxu0 0.0
        %2572 = vmatprep.mubr.f32.mxu0 0.0
        %2573 = vmatmul.mubr.f32.gmra.mxu0 %v2497
        %v2574 = vpop.f32.mrf.mxu0
        %v2575 = vadd.f32 0.0, %v2574
        %v2576 = vpop.f32.mrf.mxu0
        %v2577 = vadd.f32 0.0, %v2576
        %2578 = vmatprep.mubr.f32.mxu0 0.0
        %2579 = vmatmul.mubr.f32.gmra.mxu0 %v2500
        %v2580 = vpop.f32.mrf.mxu0
        %v2581 = vadd.f32 0.0, %v2580
        %v2582 = vpop.f32.mrf.mxu0
        %v2583 = vadd.f32 0.0, %v2582
        %2584 = vmatprep.mubr.f32.mxu0 0.0
        %2585 = vmatmul.mubr.f32.gmra.mxu0 %v2503
        %v2586 = vpop.f32.mrf.mxu0
        %v2587 = vadd.f32 0.0, %v2586
        %v2588 = vpop.f32.mrf.mxu0
        %v2589 = vadd.f32 0.0, %v2588
        %2590 = vmatprep.mubr.f32.mxu0 0.0
        %2591 = vmatmul.mubr.f32.gmra.mxu0 %v2506
        %v2592 = vpop.f32.mrf.mxu0
        %v2593 = vadd.f32 0.0, %v2592
        %v2594 = vpop.f32.mrf.mxu0
        %v2595 = vadd.f32 0.0, %v2594
        %2596 = vdwg.mxu0
        %v2597 = vadd.f32 %v2451, %v2575
        %v2598 = vadd.f32 %v2452, %v2577
        %v2599 = vadd.f32 %v2453, %v2581
        %v2600 = vadd.f32 %v2454, %v2583
        %v2601 = vadd.f32 %v2455, %v2587
        %v2602 = vadd.f32 %v2456, %v2589
        %v2603 = vadd.f32 %v2457, %v2593
        %v2604 = vadd.f32 %v2458, %v2595
        %2605 = vrot.lane.b32.xlu0 %v1477, 111
        %v2606 = vpop.permute.xlu0 %2605
        %2607 = vrot.lane.b32.xlu0 %v1479, 111
        %v2608 = vpop.permute.xlu0 %2607
        %2609 = vrot.lane.b32.xlu0 %v1481, 111
        %v2610 = vpop.permute.xlu0 %2609
        %2611 = vrot.lane.b32.xlu0 %v1483, 111
        %v2612 = vpop.permute.xlu0 %2611
        %2613 = vrot.lane.b32.xlu0 %v1478, 111
        %v2614 = vpop.permute.xlu0 %2613
        %2615 = vrot.lane.b32.xlu0 %v1480, 111
        %v2616 = vpop.permute.xlu0 %2615
        %2617 = vrot.lane.b32.xlu0 %v1482, 111
        %v2618 = vpop.permute.xlu0 %2617
        %2619 = vrot.lane.b32.xlu0 %v1484, 111
        %v2620 = vpop.permute.xlu0 %2619
        %v2621 = vsel %vm1320, %v2606, %v2614
        %v2622 = vsel %vm1320, %v2608, %v2616
        %v2623 = vsel %vm1320, %v2610, %v2618
        %v2624 = vsel %vm1320, %v2612, %v2620
        %v2625 = vsel %vm1320, %v2614, %v2606
        %v2626 = vsel %vm1320, %v2616, %v2608
        %v2627 = vsel %vm1320, %v2618, %v2610
        %v2628 = vsel %vm1320, %v2620, %v2612
        %v2629 = vmul.f32 %v2621, %v304
        %v2630 = vmul.f32 %v2625, %v305
        %v2631 = vmul.f32 %v2622, %v304
        %v2632 = vmul.f32 %v2626, %v305
        %v2633 = vmul.f32 %v2623, %v304
        %v2634 = vmul.f32 %v2627, %v305
        %v2635 = vmul.f32 %v2624, %v304
        %v2636 = vmul.f32 %v2628, %v305
        %s2637 = scalar_lea.vmem %s3, 256
        %v2638 = vld [vmem:[%s2637] sm:$0xff]
        %v2639 = vld [vmem:[%s2637 + $0x8] sm:$0xff]
        %v2640 = vld [vmem:[%s2637 + $0x10] sm:$0xff]
        %v2641 = vld [vmem:[%s2637 + $0x18] sm:$0xff]
        %v2643 = vsel %vm1558, %v2638, 0
        %v2646 = vsel %vm1558, %v2639, 0
        %v2649 = vsel %vm1558, %v2640, 0
        %v2652 = vsel %vm1558, %v2641, 0
        %2654 = vmatprep.subr.mxu0 0.0
        %2655 = vmatpush1.msra.mxu0 0.0
        %2656 = vmatprep.subr.mxu0 0.0
        %2657 = vmatpush1.msra.mxu0 0.0
        %2658 = vmatprep.subr.mxu0 0.0
        %2659 = vmatpush1.msra.mxu0 0.0
        %2660 = vmatprep.subr.mxu0 0.0
        %2661 = vmatpush1.msra.mxu0 0.0
        %2662 = vmatprep.subr.mxu0 0.0
        %2663 = vmatpush1.msra.mxu0 0.0
        %2664 = vmatprep.subr.mxu0 0.0
        %2665 = vmatpush1.msra.mxu0 0.0
        %2666 = vmatprep.subr.mxu0 0.0
        %2667 = vmatpush1.msra.mxu0 0.0
        %2668 = vmatprep.subr.mxu0 0.0
        %2669 = vmatpush1.msra.mxu0 0.0
        %2670 = vmatprep.subr.mxu0 0.0
        %2671 = vmatpush1.msra.mxu0 0.0
        %2672 = vmatprep.subr.mxu0 0.0
        %2673 = vmatpush1.msra.mxu0 0.0
        %2674 = vmatprep.subr.mxu0 0.0
        %2675 = vmatpush1.msra.mxu0 0.0
        %2676 = vmatprep.subr.mxu0 0.0
        %2677 = vmatpush1.msra.mxu0 0.0
        %2678 = vmatprep.subr.mxu0 %v2636
        %2679 = vmatpush1.msra.mxu0 %v2635
        %2680 = vmatprep.subr.mxu0 %v2634
        %2681 = vmatpush1.msra.mxu0 %v2633
        %2682 = vmatprep.subr.mxu0 %v2632
        %2683 = vmatpush1.msra.mxu0 %v2631
        %2684 = vmatprep.subr.mxu0 %v2630
        %2685 = vmatpush1.msra.mxu0 %v2629
        %2686 = vmatprep.subr.mxu0 0.0
        %2687 = vmatpush2.msra.mxu0 0.0
        %2688 = vmatprep.subr.mxu0 0.0
        %2689 = vmatpush2.msra.mxu0 0.0
        %2690 = vmatprep.subr.mxu0 0.0
        %2691 = vmatpush2.msra.mxu0 0.0
        %2692 = vmatprep.subr.mxu0 0.0
        %2693 = vmatpush2.msra.mxu0 0.0
        %2694 = vmatprep.subr.mxu0 0.0
        %2695 = vmatpush2.msra.mxu0 0.0
        %2696 = vmatprep.subr.mxu0 0.0
        %2697 = vmatpush2.msra.mxu0 0.0
        %2698 = vmatprep.subr.mxu0 0.0
        %2699 = vmatpush2.msra.mxu0 0.0
        %2700 = vmatprep.subr.mxu0 0.0
        %2701 = vmatpush2.msra.mxu0 0.0
        %2702 = vmatprep.subr.mxu0 0.0
        %2703 = vmatpush2.msra.mxu0 0.0
        %2704 = vmatprep.subr.mxu0 0.0
        %2705 = vmatpush2.msra.mxu0 0.0
        %2706 = vmatprep.subr.mxu0 0.0
        %2707 = vmatpush2.msra.mxu0 0.0
        %2708 = vmatprep.subr.mxu0 0.0
        %2709 = vmatpush2.msra.mxu0 0.0
        %2710 = vmatprep.subr.mxu0 0.0
        %2711 = vmatpush2.msra.mxu0 0.0
        %2712 = vmatprep.subr.mxu0 0.0
        %2713 = vmatpush2.msra.mxu0 0.0
        %2714 = vmatprep.subr.mxu0 0.0
        %2715 = vmatpush2.msra.mxu0 0.0
        %2716 = vmatprep.subr.mxu0 0.0
        %2717 = vmatpush2.msra.mxu0 0.0
        %2718 = vmatprep.mubr.f32.mxu0 0.0
        %2719 = vmatmul.mubr.f32.gmra.mxu0 %v2643
        %v2720 = vpop.f32.mrf.mxu0
        %v2721 = vadd.f32 0.0, %v2720
        %v2722 = vpop.f32.mrf.mxu0
        %v2723 = vadd.f32 0.0, %v2722
        %2724 = vmatprep.mubr.f32.mxu0 0.0
        %2725 = vmatmul.mubr.f32.gmra.mxu0 %v2646
        %v2726 = vpop.f32.mrf.mxu0
        %v2727 = vadd.f32 0.0, %v2726
        %v2728 = vpop.f32.mrf.mxu0
        %v2729 = vadd.f32 0.0, %v2728
        %2730 = vmatprep.mubr.f32.mxu0 0.0
        %2731 = vmatmul.mubr.f32.gmra.mxu0 %v2649
        %v2732 = vpop.f32.mrf.mxu0
        %v2733 = vadd.f32 0.0, %v2732
        %v2734 = vpop.f32.mrf.mxu0
        %v2735 = vadd.f32 0.0, %v2734
        %2736 = vmatprep.mubr.f32.mxu0 0.0
        %2737 = vmatmul.mubr.f32.gmra.mxu0 %v2652
        %v2738 = vpop.f32.mrf.mxu0
        %v2739 = vadd.f32 0.0, %v2738
        %v2740 = vpop.f32.mrf.mxu0
        %v2741 = vadd.f32 0.0, %v2740
        %2742 = vdwg.mxu0
        %v2743 = vadd.f32 %v2597, %v2721
        %v2744 = vadd.f32 %v2598, %v2723
        %v2745 = vadd.f32 %v2599, %v2727
        %v2746 = vadd.f32 %v2600, %v2729
        %v2747 = vadd.f32 %v2601, %v2733
        %v2748 = vadd.f32 %v2602, %v2735
        %v2749 = vadd.f32 %v2603, %v2739
        %v2750 = vadd.f32 %v2604, %v2741
        %v2751 = vld [vmem:[%s4] sm:$0xff]
        %v2752 = vld [vmem:[%s4 + $0x8] sm:$0xff]
        %v2753 = vld [vmem:[%s4 + $0x10] sm:$0xff]
        %v2754 = vld [vmem:[%s4 + $0x18] sm:$0xff]
        %2756 = vset.pattern.permute.xlu0 0
        %2757 = vperm.xlu0 %2756, %v2751
        %v2758 = vpop.permute.xlu0 %2757
        %2761 = vset.pattern.permute.xlu0 0
        %2762 = vperm.xlu0 %2761, %v2752
        %v2763 = vpop.permute.xlu0 %2762
        %2766 = vset.pattern.permute.xlu0 0
        %2767 = vperm.xlu0 %2766, %v2753
        %v2768 = vpop.permute.xlu0 %2767
        %2771 = vset.pattern.permute.xlu0 0
        %2772 = vperm.xlu0 %2771, %v2754
        %v2773 = vpop.permute.xlu0 %2772
        %v2775 = vadd.f32 %v2743, %v2758
        %v2776 = vadd.f32 %v2744, %v2758
        %v2777 = vadd.f32 %v2745, %v2763
        %v2778 = vadd.f32 %v2746, %v2763
        %v2779 = vadd.f32 %v2747, %v2768
        %v2780 = vadd.f32 %v2748, %v2768
        %v2781 = vadd.f32 %v2749, %v2773
        %v2782 = vadd.f32 %v2750, %v2773
        %v2783 = vmax.f32 %v2775, 0.0
        %v2784 = vmax.f32 %v2776, 0.0
        %v2785 = vmax.f32 %v2777, 0.0
        %v2786 = vmax.f32 %v2778, 0.0
        %v2787 = vmax.f32 %v2779, 0.0
        %v2788 = vmax.f32 %v2780, 0.0
        %v2789 = vmax.f32 %v2781, 0.0
        %v2790 = vmax.f32 %v2782, 0.0
        %v2791 = vld [vmem:[%s5] sm:$0xff]
        %v2792 = vld [vmem:[%s6] sm:$0xff]
        %2794 = vset.pattern.permute.xlu0 0
        %2795 = vperm.xlu0 %2794, %v2792
        %v2796 = vpop.permute.xlu0 %2795
        %v2799 = vsel %vm1558, %v2791, 0
        %2801 = vmatprep.subr.mxu0 0.0
        %2802 = vmatpush1.msra.mxu0 0.0
        %2803 = vmatprep.subr.mxu0 0.0
        %2804 = vmatpush1.msra.mxu0 0.0
        %2805 = vmatprep.subr.mxu0 0.0
        %2806 = vmatpush1.msra.mxu0 0.0
        %2807 = vmatprep.subr.mxu0 0.0
        %2808 = vmatpush1.msra.mxu0 0.0
        %2809 = vmatprep.subr.mxu0 0.0
        %2810 = vmatpush1.msra.mxu0 0.0
        %2811 = vmatprep.subr.mxu0 0.0
        %2812 = vmatpush1.msra.mxu0 0.0
        %2813 = vmatprep.subr.mxu0 0.0
        %2814 = vmatpush1.msra.mxu0 0.0
        %2815 = vmatprep.subr.mxu0 0.0
        %2816 = vmatpush1.msra.mxu0 0.0
        %2817 = vmatprep.subr.mxu0 0.0
        %2818 = vmatpush1.msra.mxu0 0.0
        %2819 = vmatprep.subr.mxu0 0.0
        %2820 = vmatpush1.msra.mxu0 0.0
        %2821 = vmatprep.subr.mxu0 0.0
        %2822 = vmatpush1.msra.mxu0 0.0
        %2823 = vmatprep.subr.mxu0 0.0
        %2824 = vmatpush1.msra.mxu0 0.0
        %2825 = vmatprep.subr.mxu0 %v2790
        %2826 = vmatpush1.msra.mxu0 %v2789
        %2827 = vmatprep.subr.mxu0 %v2788
        %2828 = vmatpush1.msra.mxu0 %v2787
        %2829 = vmatprep.subr.mxu0 %v2786
        %2830 = vmatpush1.msra.mxu0 %v2785
        %2831 = vmatprep.subr.mxu0 %v2784
        %2832 = vmatpush1.msra.mxu0 %v2783
        %2833 = vmatprep.subr.mxu0 0.0
        %2834 = vmatpush2.msra.mxu0 0.0
        %2835 = vmatprep.subr.mxu0 0.0
        %2836 = vmatpush2.msra.mxu0 0.0
        %2837 = vmatprep.subr.mxu0 0.0
        %2838 = vmatpush2.msra.mxu0 0.0
        %2839 = vmatprep.subr.mxu0 0.0
        %2840 = vmatpush2.msra.mxu0 0.0
        %2841 = vmatprep.subr.mxu0 0.0
        %2842 = vmatpush2.msra.mxu0 0.0
        %2843 = vmatprep.subr.mxu0 0.0
        %2844 = vmatpush2.msra.mxu0 0.0
        %2845 = vmatprep.subr.mxu0 0.0
        %2846 = vmatpush2.msra.mxu0 0.0
        %2847 = vmatprep.subr.mxu0 0.0
        %2848 = vmatpush2.msra.mxu0 0.0
        %2849 = vmatprep.subr.mxu0 0.0
        %2850 = vmatpush2.msra.mxu0 0.0
        %2851 = vmatprep.subr.mxu0 0.0
        %2852 = vmatpush2.msra.mxu0 0.0
        %2853 = vmatprep.subr.mxu0 0.0
        %2854 = vmatpush2.msra.mxu0 0.0
        %2855 = vmatprep.subr.mxu0 0.0
        %2856 = vmatpush2.msra.mxu0 0.0
        %2857 = vmatprep.subr.mxu0 0.0
        %2858 = vmatpush2.msra.mxu0 0.0
        %2859 = vmatprep.subr.mxu0 0.0
        %2860 = vmatpush2.msra.mxu0 0.0
        %2861 = vmatprep.subr.mxu0 0.0
        %2862 = vmatpush2.msra.mxu0 0.0
        %2863 = vmatprep.subr.mxu0 0.0
        %2864 = vmatpush2.msra.mxu0 0.0
        %2865 = vmatprep.mubr.f32.mxu0 0.0
        %2866 = vmatmul.mubr.f32.gmra.mxu0 %v2799
        %v2867 = vpop.f32.mrf.mxu0
        %v2868 = vadd.f32 %v2796, %v2867
        %v2869 = vpop.f32.mrf.mxu0
        %v2870 = vadd.f32 %v2796, %v2869
        %2871 = vdwg.mxu0
        %v2872 = vsub.f32 0.0, %v2868
        %v2873 = vsub.f32 0.0, %v2870
        %v2874 = vmul.f32 %v2872, 1.442695
        %v2875 = vpow.pop %v2874
        %v2876 = vmul.f32 %v2873, 1.442695
        %v2877 = vpow.pop %v2876
        %v2878 = vadd.f32 %v2875, 1.0
        %v2879 = vadd.f32 %v2877, 1.0
        %v2880 = vrcp.pop %v2878
        %v2881 = vrcp.pop %v2879
        %2882 = vst [vmem:[%s271] sm:$0xff] %v2880
        %2883 = vst [vmem:[%s271 + $0x8] sm:$0xff] %v2881
        %s2884 = sand.u32 %s181, 1
        %s2885 = scalar_lea.sflag [#allocation3], %s2884
        %s2886 = sand.u32 %s181, 1
        %s2887 = smul.addr %s2886, 16
        %s2888 = scalar_lea.vmem [#allocation2], %s2887
        // Predicated region
        $region49: #{tpu_custom_call.1} parent=47 // pred_check
          %p2889 = pneg %p191
        $region50: #{tpu_custom_call.1} parent=47 // pred_check_branch
          %2891 = sbr.rel (%p2889) target = $region52
        $region51: #{tpu_custom_call.1} parent=47 // pred_region
          %s2893 = ssub.s32 256, 256
          %2894 = vsyncadd %s2885, %s2893
          %s2895 = smul.addr %s21, 2
          %s2896 = smul.addr %s2895, 128
          %s2897 = scalar_lea.hbm %s7, %s2896
          %s2899 = sshll.u32 %s2888, 4
          %s2900 = int_to_ptr.vmem [resolvable:$true] %s2899
          %2902 = dma.vmem_to_hbm [thread:$0]  %s2900, 256, %s2897, %s2885
        $region52: #{tpu_custom_call.1} parent=47 // pred_fallthru
          _
      $region48: #{tpu_custom_call.1} parent=5 // pred_fallthru
        _
      %p2903 = scmp.le.s32.totalorder 2, %s16
      // Predicated region
      $region53: #{tpu_custom_call.1} parent=5 // pred_check
        %p2904 = pneg %p2903
      $region54: #{tpu_custom_call.1} parent=5 // pred_check_branch
        %2906 = sbr.rel (%p2904) target = $region56
      $region55: #{tpu_custom_call.1} parent=5 // pred_region
        %s2907 = ssub.s32 %s16, 2
        // Predicated region
        $region57: #{tpu_custom_call.1} parent=55 // pred_check
          %p2908 = pneg %p197
        $region58: #{tpu_custom_call.1} parent=55 // pred_check_branch
          %2910 = sbr.rel (%p2908) target = $region60
        $region59: #{tpu_custom_call.1} parent=55 // pred_region
          %s2911 = sand.u32 %s182, 1
          %s2912 = scalar_lea.sflag [#allocation3], %s2911
          %s2913 = sand.u32 %s182, 1
          %s2914 = smul.addr %s2913, 16
          %s2915 = scalar_lea.vmem [#allocation2], %s2914
          %2916 = dma.done %s2912, 256
        $region60: #{tpu_custom_call.1} parent=55 // pred_fallthru
          _
      $region56: #{tpu_custom_call.1} parent=5 // pred_fallthru
        _
    $region6: #{tpu_custom_call.1} parent=1 // loop_footer
      %s20 = sadd.s32 1, %s16
    $region7: #{tpu_custom_call.1} parent=1 // loop_footer_branch
      %15 = sbr.rel target = $region3
    $region8: #{tpu_custom_call.1} parent=1 // loop_exit
      _
    %2917 = vsyncpa [#allocation3], 1
    %s2918 = scalar_lea.sflag [#allocation3], 1
    %2919 = vsyncpa %s2918, 1

</llo_original>
